<compile_context>
chip_gen: v5e
topology: v5e:2x2
jax: 0.10.0
libtpu: 0.0.40
codegen_flags: <defaults>
</compile_context>

<pallas_src>
from functools import partial
from math import floor

import jax
import jax.numpy as jnp
from jax import lax
from jax.experimental import pallas as pl
from jax.experimental.pallas import tpu as pltpu


def _round_up(x, m):
    return (x + m - 1) // m * m


# ----------------------------------------------------------------------------
# Fused Pallas kernel (one grid step == B_tile batch elements)
# ----------------------------------------------------------------------------
def _gcn_kernel(x_ref, w1_ref, bm1_ref, w2_ref, b2_ref, o_ref,
                xpad_ref, col1_ref, y1_ref, col2_ref, *, cfg):
    (B, Cin, Cp_in, Cp_out, H, W, Wp,
     kH, kW, pad0, pad1, Limg, M1, Mout, Lx) = cfg
    f32 = jnp.float32
    gap = 2 * pad1                      # W-halo width between consecutive rows
    head = pad0 * Wp + pad1             # per-image leading/trailing halo width

    # ---- 1) halo-only zeroing (the interior is fully overwritten below) -----
    if Cp_in > Cin:                                    # zero-weight channel rows
        xpad_ref[Cin:Cp_in, :] = jnp.zeros((Cp_in - Cin, Lx), f32)
    if Lx > B * Limg:                                  # tap-overrun tail
        xpad_ref[:Cin, B * Limg:] = jnp.zeros((Cin, Lx - B * Limg), f32)
    for b in range(B):
        off = b * Limg
        if head > 0:
            xpad_ref[:Cin, off:off + head] = jnp.zeros((Cin, head), f32)
            xpad_ref[:Cin, off + Limg - head:off + Limg] = jnp.zeros((Cin, head), f32)

    # ---- 2) interior fill: ONE Wp-wide store per (image, row); the W-halo
    #         zeros ride along in the same store (no extra store-slot traffic) -
    zgap = jnp.zeros((Cin, gap), f32) if gap else None
    for b in range(B):
        base = b * Limg + pad0 * Wp + pad1
        for h in range(H):
            row = x_ref[b, :, h * W:h * W + W]                 # (Cin, W)
            if gap:
                row = jnp.concatenate([row, zgap], axis=1)     # (Cin, Wp)
            s = base + h * Wp
            xpad_ref[:Cin, s:s + Wp] = row

    # ---- 3) stage 1: conv_l1 and conv_r1 of ALL B images in ONE matmul ------
    for t in range(kH):          # (kH,1) taps: shift by one padded row
        col1_ref[t * Cp_in:(t + 1) * Cp_in, :] = xpad_ref[:, t * Wp:t * Wp + M1]
    for t in range(kW):          # (1,kW) taps: shift by one column
        col1_ref[(kH + t) * Cp_in:(kH + t + 1) * Cp_in, :] = xpad_ref[:, t:t + M1]
    # block-diagonal weight: rows [0,Cp_out)=conv_l1, rows [Cp_out,2Cp_out)=conv_r1.
    # bm1 = bias * validity mask (resident input): keeps the halo positions of
    # the stage-1 outputs exactly 0 (they are stage 2's implicit zero padding).
    y1_ref[...] = (jnp.dot(w1_ref[...], col1_ref[...],
                           preferred_element_type=jnp.float32) + bm1_ref[...])

    # ---- 4) stage 2 (per image): conv_l2 + conv_r2 in one matmul; the final
    #         x_l + x_r add falls out of the concatenated contraction; result
    #         goes straight to the output block in ONE lane-dense store --------
    for b in range(B):
        off = b * Limg
        for t in range(kW):      # (1,kW) taps on the left-branch rows of y1
            col2_ref[t * Cp_out:(t + 1) * Cp_out, :] = \
                y1_ref[:Cp_out, off + t:off + t + Mout]
        for t in range(kH):      # (kH,1) taps on the right-branch rows of y1
            col2_ref[(kW + t) * Cp_out:(kW + t + 1) * Cp_out, :] = \
                y1_ref[Cp_out:2 * Cp_out, off + t * Wp:off + t * Wp + Mout]
        o_ref[b, :, :] = (jnp.dot(w2_ref[...], col2_ref[...],
                                  preferred_element_type=jnp.float32)
                          + b2_ref[...])


# ----------------------------------------------------------------------------
# Wrapper: weight re-layout (tiny) + one fused pallas_call
# ----------------------------------------------------------------------------
def _prep_weight(w_oikk, Cp_out, Cp_g):
    """PyTorch Conv2d weight (Cout, Cg, kh, kw), one of kh/kw == 1
       -> (Cp_out, K*Cp_g), columns ordered [tap-major, channel-minor]."""
    Cout, Cg, kh, kw = w_oikk.shape
    K = kh * kw
    wt = w_oikk.reshape(Cout, Cg, K)
    wt = jnp.transpose(wt, (0, 2, 1))                         # (Cout, K, Cg)
    wt = jnp.pad(wt, ((0, Cp_out - Cout), (0, 0), (0, Cp_g - Cg)))
    return wt.reshape(Cp_out, K * Cp_g).astype(jnp.float32)


def global_conv_module(x_nchw, params, kernel_size, b_tile=None):
    """Forward pass of _GlobalConvModule.  x: (N, Cin, H, W), PyTorch params."""
    kH, kW = kernel_size
    pad0 = floor((kH - 1) / 2)
    pad1 = floor((kW - 1) / 2)

    N, Cin, H, W = x_nchw.shape
    Cout = params["b_l1"].shape[0]
    Cp_in = _round_up(Cin, 8)
    Cp_out = _round_up(Cout, 8)

    Hp, Wp = H + 2 * pad0, W + 2 * pad1
    Hout, Wout = Hp - kH + 1, Wp - kW + 1
    Limg = Hp * Wp
    Mout = Hout * Wp
    K1 = (kH + kW) * Cp_in
    K2 = (kH + kW) * Cp_out

    def plan(B):
        extra = max(0, (kW - 1) - (kH - 1) * Wp)
        M1 = B * Limg + extra
        Lx = M1 + max((kH - 1) * Wp, kW - 1)
        scratch = 4 * (Cp_in * Lx + K1 * M1 + 2 * Cp_out * M1 + K2 * Mout)
        resident = 4 * (2 * Cp_out * K1 + 2 * Cp_out * M1
                        + Cp_out * K2 + Cp_out * Mout)
        blocks = 4 * (B * Cin * H * W + B * Cp_out * Mout)
        return M1, Lx, scratch + 2 * blocks + 2 * resident

    # images per grid step: amortize per-step overhead / widen the matmul M,
    # but keep >=2 grid steps (megacore) and stay inside a conservative budget.
    if b_tile is None:
        budget = 20 * 2 ** 20
        divs = [d for d in range(1, N + 1) if N % d == 0]
        ok = [d for d in divs if plan(d)[2] <= budget] or [1]
        pref = [d for d in ok if N // d >= 2]
        B = max(pref) if pref else max(ok)
    else:
        assert N % b_tile == 0
        B = b_tile
    M1, Lx, need = plan(B)
    G = N // B

    # ---- weights: block-diagonal stage 1, concatenated stage 2 --------------
    wl1 = _prep_weight(params["w_l1"], Cp_out, Cp_in)        # (Cp_out, kH*Cp_in)
    wr1 = _prep_weight(params["w_r1"], Cp_out, Cp_in)        # (Cp_out, kW*Cp_in)
    w1 = jnp.zeros((2 * Cp_out, K1), jnp.float32)
    w1 = w1.at[:Cp_out, :kH * Cp_in].set(wl1)
    w1 = w1.at[Cp_out:, kH * Cp_in:].set(wr1)
    wl2 = _prep_weight(params["w_l2"], Cp_out, Cp_out)       # (Cp_out, kW*Cp_out)
    wr2 = _prep_weight(params["w_r2"], Cp_out, Cp_out)       # (Cp_out, kH*Cp_out)
    w2 = jnp.concatenate([wl2, wr2], axis=1)                 # (Cp_out, K2)

    # ---- resident bias * validity-mask planes (DMA'd once) ------------------
    bl1 = jnp.pad(params["b_l1"], (0, Cp_out - Cout)).astype(jnp.float32)
    br1 = jnp.pad(params["b_r1"], (0, Cp_out - Cout)).astype(jnp.float32)
    pos = jnp.arange(M1, dtype=jnp.int32)
    loc = pos % Limg
    colm = loc % Wp
    rowm = loc // Wp
    wmask = ((colm >= pad1) & (colm < pad1 + W)).astype(jnp.float32)   # real W cols
    hmask = ((rowm >= pad0) & (rowm < pad0 + H)).astype(jnp.float32)   # real H rows
    bm1 = jnp.concatenate([bl1[:, None] * wmask[None, :],
                           br1[:, None] * hmask[None, :]], axis=0)     # (2Cp_out, M1)
    b2 = jnp.pad(params["b_l2"] + params["b_r2"],
                 (0, Cp_out - Cout)).astype(jnp.float32)
    b2full = jnp.broadcast_to(b2[:, None], (Cp_out, Mout))

    x_flat = x_nchw.reshape(N, Cin, H * W).astype(jnp.float32)  # free, lane-dense

    cfg = (B, Cin, Cp_in, Cp_out, H, W, Wp,
           kH, kW, pad0, pad1, Limg, M1, Mout, Lx)
    kernel = partial(_gcn_kernel, cfg=cfg)

    vmem_limit = int(min(100 * 2 ** 20, max(32 * 2 ** 20, 2 * need)))

    out_flat = pl.pallas_call(
        kernel,
        out_shape=jax.ShapeDtypeStruct((N, Cp_out, Mout), jnp.float32),
        grid=(G,),
        in_specs=[
            pl.BlockSpec((B, Cin, H * W), lambda g: (g, 0, 0)),   # x (B images)
            pl.BlockSpec(w1.shape, lambda g: (0, 0)),             # stage-1 weights
            pl.BlockSpec(bm1.shape, lambda g: (0, 0)),            # stage-1 bias*mask
            pl.BlockSpec(w2.shape, lambda g: (0, 0)),             # stage-2 weights
            pl.BlockSpec(b2full.shape, lambda g: (0, 0)),         # stage-2 bias
        ],
        out_specs=pl.BlockSpec((B, Cp_out, Mout), lambda g: (g, 0, 0)),
        scratch_shapes=[
            pltpu.VMEM((Cp_in, Lx), jnp.float32),         # doubly padded input
            pltpu.VMEM((K1, M1), jnp.float32),            # stage-1 im2col
            pltpu.VMEM((2 * Cp_out, M1), jnp.float32),    # stage-1 output (both branches)
            pltpu.VMEM((K2, Mout), jnp.float32),          # stage-2 im2col
        ],
        compiler_params=pltpu.CompilerParams(
            dimension_semantics=("parallel",),
            vmem_limit_bytes=vmem_limit,
        ),
    )(x_flat, w1, bm1, w2, b2full)

    # free row-major split + one cheap slice drops W halo / channel padding
    out = out_flat.reshape(N, Cp_out, Hout, Wp)[:, :Cout, :, :Wout]
    return out


# ----------------------------------------------------------------------------
# Reference (pure XLA) for validation
# ----------------------------------------------------------------------------
def _conv_ref(x_nhwc, w_oihw, b, pad_h, pad_w):
    w_hwio = jnp.transpose(w_oihw, (2, 3, 1, 0))
    y = lax.conv_general_dilated(
        x_nhwc, w_hwio, window_strides=(1, 1),
        padding=((pad_h, pad_h), (pad_w, pad_w)),
        dimension_numbers=("NHWC", "HWIO", "NHWC"))
    return y + b[None, None, None, :]


def global_conv_ref(x_nchw, params, kernel_size):
    kH, kW = kernel_size
    pad0 = floor((kH - 1) / 2)
    pad1 = floor((kW - 1) / 2)
    x = jnp.transpose(x_nchw, (0, 2, 3, 1))
    x_l = _conv_ref(x, params["w_l1"], params["b_l1"], pad0, 0)
    x_l = _conv_ref(x_l, params["w_l2"], params["b_l2"], 0, pad1)
    x_r = _conv_ref(x, params["w_r1"], params["b_r1"], 0, pad1)
    x_r = _conv_ref(x_r, params["w_r2"], params["b_r2"], pad0, 0)
    return jnp.transpose(x_l + x_r, (0, 3, 1, 2))


# ----------------------------------------------------------------------------
# main
# ----------------------------------------------------------------------------
if __name__ == "__main__":
    key = jax.random.PRNGKey(0)
    in_dim, out_dim = 4, 8
    kernel_size = (7, 7)
    N, H, W = 4, 16, 16           # N=4 exercises B_tile=2 batching with grid=2

    ks = jax.random.split(key, 9)
    s = 0.1
    params = {
        # PyTorch Conv2d layouts: (Cout, Cin, kh, kw)
        "w_l1": s * jax.random.normal(ks[0], (out_dim, in_dim, kernel_size[0], 1), jnp.float32),
        "b_l1": s * jax.random.normal(ks[1], (out_dim,), jnp.float32),
        "w_l2": s * jax.random.normal(ks[2], (out_dim, out_dim, 1, kernel_size[1]), jnp.float32),
        "b_l2": s * jax.random.normal(ks[3], (out_dim,), jnp.float32),
        "w_r1": s * jax.random.normal(ks[4], (out_dim, in_dim, 1, kernel_size[1]), jnp.float32),
        "b_r1": s * jax.random.normal(ks[5], (out_dim,), jnp.float32),
        "w_r2": s * jax.random.normal(ks[6], (out_dim, out_dim, kernel_size[0], 1), jnp.float32),
        "b_r2": s * jax.random.normal(ks[7], (out_dim,), jnp.float32),
    }
    x = jax.random.normal(ks[8], (N, in_dim, H, W), jnp.float32)

    gcn = jax.jit(partial(global_conv_module, kernel_size=kernel_size))
    out = jax.block_until_ready(gcn(x, params))
    ref = jax.block_until_ready(global_conv_ref(x, params, kernel_size))

    assert out.shape == (N, out_dim, H, W), out.shape
    err = float(jnp.max(jnp.abs(out - ref)))
    assert err < 1e-3, f"mismatch vs XLA reference: max abs err = {err}"

    print("KERNEL_OK")
</pallas_src>

<mosaic_0001>
module attributes {stable_mosaic.version = 11 : i64} {
  func.func @_gcn_kernel(%arg0: i32, %arg1: memref<2x4x256xf32, #tpu.memory_space<vmem>>, %arg2: memref<16x112xf32, #tpu.memory_space<vmem>>, %arg3: memref<16x968xf32, #tpu.memory_space<vmem>>, %arg4: memref<8x112xf32, #tpu.memory_space<vmem>>, %arg5: memref<8x352xf32, #tpu.memory_space<vmem>>, %arg6: memref<2x8x352xf32, #tpu.memory_space<vmem>>, %arg7: memref<8x1100xf32, #tpu.memory_space<vmem>>, %arg8: memref<112x968xf32, #tpu.memory_space<vmem>>, %arg9: memref<16x968xf32, #tpu.memory_space<vmem>>, %arg10: memref<112x352xf32, #tpu.memory_space<vmem>>) attributes {dimension_semantics = [#tpu.dimension_semantics<parallel>], iteration_bounds = array<i64: 2>, scalar_prefetch = 0 : i64, scratch_operands = 4 : i64, tpu.core_type = #tpu.core_type<tc>, window_params = [{transform_indices = @transform_0, window_bounds = array<i64: 2, 4, 256>}, {pipeline_mode = #tpu.pipeline_mode<synchronous>, transform_indices = @transform_1, window_bounds = array<i64: 16, 112>}, {pipeline_mode = #tpu.pipeline_mode<synchronous>, transform_indices = @transform_2, window_bounds = array<i64: 16, 968>}, {pipeline_mode = #tpu.pipeline_mode<synchronous>, transform_indices = @transform_3, window_bounds = array<i64: 8, 112>}, {pipeline_mode = #tpu.pipeline_mode<synchronous>, transform_indices = @transform_4, window_bounds = array<i64: 8, 352>}, {transform_indices = @transform_5, window_bounds = array<i64: 2, 8, 352>}]} {
    %cst = arith.constant 0.000000e+00 : f32
    %0 = vector.broadcast %cst : f32 to vector<4x1100xf32>
    %c4 = arith.constant 4 : index
    %c0 = arith.constant 0 : index
    %1 = vector.load %arg7[%c4, %c0] : memref<8x1100xf32, #tpu.memory_space<vmem>>, vector<4x1100xf32>
    tpu.vector_store %arg7[%c4, %c0], %0 {strides = array<i32>} : memref<8x1100xf32, #tpu.memory_space<vmem>>, vector<4x1100xf32>,
    %cst_0 = arith.constant 0.000000e+00 : f32
    %2 = vector.broadcast %cst_0 : f32 to vector<4x132xf32>
    %c0_1 = arith.constant 0 : index
    %c968 = arith.constant 968 : index
    %3 = vector.load %arg7[%c0_1, %c968] : memref<8x1100xf32, #tpu.memory_space<vmem>>, vector<4x132xf32>
    tpu.vector_store %arg7[%c0_1, %c968], %2 {strides = array<i32>} : memref<8x1100xf32, #tpu.memory_space<vmem>>, vector<4x132xf32>,
    %cst_2 = arith.constant 0.000000e+00 : f32
    %4 = vector.broadcast %cst_2 : f32 to vector<4x69xf32>
    %c0_3 = arith.constant 0 : index
    %c0_4 = arith.constant 0 : index
    %5 = vector.load %arg7[%c0_3, %c0_4] : memref<8x1100xf32, #tpu.memory_space<vmem>>, vector<4x69xf32>
    tpu.vector_store %arg7[%c0_3, %c0_4], %4 {strides = array<i32>} : memref<8x1100xf32, #tpu.memory_space<vmem>>, vector<4x69xf32>,
    %cst_5 = arith.constant 0.000000e+00 : f32
    %6 = vector.broadcast %cst_5 : f32 to vector<4x69xf32>
    %c0_6 = arith.constant 0 : index
    %c415 = arith.constant 415 : index
    %7 = vector.load %arg7[%c0_6, %c415] : memref<8x1100xf32, #tpu.memory_space<vmem>>, vector<4x69xf32>
    tpu.vector_store %arg7[%c0_6, %c415], %6 {strides = array<i32>} : memref<8x1100xf32, #tpu.memory_space<vmem>>, vector<4x69xf32>,
    %cst_7 = arith.constant 0.000000e+00 : f32
    %8 = vector.broadcast %cst_7 : f32 to vector<4x69xf32>
    %c0_8 = arith.constant 0 : index
    %c484 = arith.constant 484 : index
    %9 = vector.load %arg7[%c0_8, %c484] : memref<8x1100xf32, #tpu.memory_space<vmem>>, vector<4x69xf32>
    tpu.vector_store %arg7[%c0_8, %c484], %8 {strides = array<i32>} : memref<8x1100xf32, #tpu.memory_space<vmem>>, vector<4x69xf32>,
    %cst_9 = arith.constant 0.000000e+00 : f32
    %10 = vector.broadcast %cst_9 : f32 to vector<4x69xf32>
    %c0_10 = arith.constant 0 : index
    %c899 = arith.constant 899 : index
    %11 = vector.load %arg7[%c0_10, %c899] : memref<8x1100xf32, #tpu.memory_space<vmem>>, vector<4x69xf32>
    tpu.vector_store %arg7[%c0_10, %c899], %10 {strides = array<i32>} : memref<8x1100xf32, #tpu.memory_space<vmem>>, vector<4x69xf32>,
    %cst_11 = arith.constant 0.000000e+00 : f32
    %12 = vector.broadcast %cst_11 : f32 to vector<4x6xf32>
    %c0_12 = arith.constant 0 : index
    %c0_13 = arith.constant 0 : index
    %c0_14 = arith.constant 0 : index
    %13 = vector.load %arg1[%c0_12, %c0_13, %c0_14] : memref<2x4x256xf32, #tpu.memory_space<vmem>>, vector<1x4x16xf32>
    %14 = vector.shape_cast %13 : vector<1x4x16xf32> to vector<4x16xf32>
    %15 = tpu.concatenate %14, %12 in 1 : vector<4x16xf32>, vector<4x6xf32> -> vector<4x22xf32>
    %c0_15 = arith.constant 0 : index
    %c69 = arith.constant 69 : index
    %16 = vector.load %arg7[%c0_15, %c69] : memref<8x1100xf32, #tpu.memory_space<vmem>>, vector<4x22xf32>
    tpu.vector_store %arg7[%c0_15, %c69], %15 {strides = array<i32>} : memref<8x1100xf32, #tpu.memory_space<vmem>>, vector<4x22xf32>,
    %c0_16 = arith.constant 0 : index
    %c0_17 = arith.constant 0 : index
    %c16 = arith.constant 16 : index
    %17 = vector.load %arg1[%c0_16, %c0_17, %c16] : memref<2x4x256xf32, #tpu.memory_space<vmem>>, vector<1x4x16xf32>
    %18 = vector.shape_cast %17 : vector<1x4x16xf32> to vector<4x16xf32>
    %19 = tpu.concatenate %18, %12 in 1 : vector<4x16xf32>, vector<4x6xf32> -> vector<4x22xf32>
    %c0_18 = arith.constant 0 : index
    %c91 = arith.constant 91 : index
    %20 = vector.load %arg7[%c0_18, %c91] : memref<8x1100xf32, #tpu.memory_space<vmem>>, vector<4x22xf32>
    tpu.vector_store %arg7[%c0_18, %c91], %19 {strides = array<i32>} : memref<8x1100xf32, #tpu.memory_space<vmem>>, vector<4x22xf32>,
    %c0_19 = arith.constant 0 : index
    %c0_20 = arith.constant 0 : index
    %c32 = arith.constant 32 : index
    %21 = vector.load %arg1[%c0_19, %c0_20, %c32] : memref<2x4x256xf32, #tpu.memory_space<vmem>>, vector<1x4x16xf32>
    %22 = vector.shape_cast %21 : vector<1x4x16xf32> to vector<4x16xf32>
    %23 = tpu.concatenate %22, %12 in 1 : vector<4x16xf32>, vector<4x6xf32> -> vector<4x22xf32>
    %c0_21 = arith.constant 0 : index
    %c113 = arith.constant 113 : index
    %24 = vector.load %arg7[%c0_21, %c113] : memref<8x1100xf32, #tpu.memory_space<vmem>>, vector<4x22xf32>
    tpu.vector_store %arg7[%c0_21, %c113], %23 {strides = array<i32>} : memref<8x1100xf32, #tpu.memory_space<vmem>>, vector<4x22xf32>,
    %c0_22 = arith.constant 0 : index
    %c0_23 = arith.constant 0 : index
    %c48 = arith.constant 48 : index
    %25 = vector.load %arg1[%c0_22, %c0_23, %c48] : memref<2x4x256xf32, #tpu.memory_space<vmem>>, vector<1x4x16xf32>
    %26 = vector.shape_cast %25 : vector<1x4x16xf32> to vector<4x16xf32>
    %27 = tpu.concatenate %26, %12 in 1 : vector<4x16xf32>, vector<4x6xf32> -> vector<4x22xf32>
    %c0_24 = arith.constant 0 : index
    %c135 = arith.constant 135 : index
    %28 = vector.load %arg7[%c0_24, %c135] : memref<8x1100xf32, #tpu.memory_space<vmem>>, vector<4x22xf32>
    tpu.vector_store %arg7[%c0_24, %c135], %27 {strides = array<i32>} : memref<8x1100xf32, #tpu.memory_space<vmem>>, vector<4x22xf32>,
    %c0_25 = arith.constant 0 : index
    %c0_26 = arith.constant 0 : index
    %c64 = arith.constant 64 : index
    %29 = vector.load %arg1[%c0_25, %c0_26, %c64] : memref<2x4x256xf32, #tpu.memory_space<vmem>>, vector<1x4x16xf32>
    %30 = vector.shape_cast %29 : vector<1x4x16xf32> to vector<4x16xf32>
    %31 = tpu.concatenate %30, %12 in 1 : vector<4x16xf32>, vector<4x6xf32> -> vector<4x22xf32>
    %c0_27 = arith.constant 0 : index
    %c157 = arith.constant 157 : index
    %32 = vector.load %arg7[%c0_27, %c157] : memref<8x1100xf32, #tpu.memory_space<vmem>>, vector<4x22xf32>
    tpu.vector_store %arg7[%c0_27, %c157], %31 {strides = array<i32>} : memref<8x1100xf32, #tpu.memory_space<vmem>>, vector<4x22xf32>,
    %c0_28 = arith.constant 0 : index
    %c0_29 = arith.constant 0 : index
    %c80 = arith.constant 80 : index
    %33 = vector.load %arg1[%c0_28, %c0_29, %c80] : memref<2x4x256xf32, #tpu.memory_space<vmem>>, vector<1x4x16xf32>
    %34 = vector.shape_cast %33 : vector<1x4x16xf32> to vector<4x16xf32>
    %35 = tpu.concatenate %34, %12 in 1 : vector<4x16xf32>, vector<4x6xf32> -> vector<4x22xf32>
    %c0_30 = arith.constant 0 : index
    %c179 = arith.constant 179 : index
    %36 = vector.load %arg7[%c0_30, %c179] : memref<8x1100xf32, #tpu.memory_space<vmem>>, vector<4x22xf32>
    tpu.vector_store %arg7[%c0_30, %c179], %35 {strides = array<i32>} : memref<8x1100xf32, #tpu.memory_space<vmem>>, vector<4x22xf32>,
    %c0_31 = arith.constant 0 : index
    %c0_32 = arith.constant 0 : index
    %c96 = arith.constant 96 : index
    %37 = vector.load %arg1[%c0_31, %c0_32, %c96] : memref<2x4x256xf32, #tpu.memory_space<vmem>>, vector<1x4x16xf32>
    %38 = vector.shape_cast %37 : vector<1x4x16xf32> to vector<4x16xf32>
    %39 = tpu.concatenate %38, %12 in 1 : vector<4x16xf32>, vector<4x6xf32> -> vector<4x22xf32>
    %c0_33 = arith.constant 0 : index
    %c201 = arith.constant 201 : index
    %40 = vector.load %arg7[%c0_33, %c201] : memref<8x1100xf32, #tpu.memory_space<vmem>>, vector<4x22xf32>
    tpu.vector_store %arg7[%c0_33, %c201], %39 {strides = array<i32>} : memref<8x1100xf32, #tpu.memory_space<vmem>>, vector<4x22xf32>,
    %c0_34 = arith.constant 0 : index
    %c0_35 = arith.constant 0 : index
    %c112 = arith.constant 112 : index
    %41 = vector.load %arg1[%c0_34, %c0_35, %c112] : memref<2x4x256xf32, #tpu.memory_space<vmem>>, vector<1x4x16xf32>
    %42 = vector.shape_cast %41 : vector<1x4x16xf32> to vector<4x16xf32>
    %43 = tpu.concatenate %42, %12 in 1 : vector<4x16xf32>, vector<4x6xf32> -> vector<4x22xf32>
    %c0_36 = arith.constant 0 : index
    %c223 = arith.constant 223 : index
    %44 = vector.load %arg7[%c0_36, %c223] : memref<8x1100xf32, #tpu.memory_space<vmem>>, vector<4x22xf32>
    tpu.vector_store %arg7[%c0_36, %c223], %43 {strides = array<i32>} : memref<8x1100xf32, #tpu.memory_space<vmem>>, vector<4x22xf32>,
    %c0_37 = arith.constant 0 : index
    %c0_38 = arith.constant 0 : index
    %c128 = arith.constant 128 : index
    %45 = vector.load %arg1[%c0_37, %c0_38, %c128] : memref<2x4x256xf32, #tpu.memory_space<vmem>>, vector<1x4x16xf32>
    %46 = vector.shape_cast %45 : vector<1x4x16xf32> to vector<4x16xf32>
    %47 = tpu.concatenate %46, %12 in 1 : vector<4x16xf32>, vector<4x6xf32> -> vector<4x22xf32>
    %c0_39 = arith.constant 0 : index
    %c245 = arith.constant 245 : index
    %48 = vector.load %arg7[%c0_39, %c245] : memref<8x1100xf32, #tpu.memory_space<vmem>>, vector<4x22xf32>
    tpu.vector_store %arg7[%c0_39, %c245], %47 {strides = array<i32>} : memref<8x1100xf32, #tpu.memory_space<vmem>>, vector<4x22xf32>,
    %c0_40 = arith.constant 0 : index
    %c0_41 = arith.constant 0 : index
    %c144 = arith.constant 144 : index
    %49 = vector.load %arg1[%c0_40, %c0_41, %c144] : memref<2x4x256xf32, #tpu.memory_space<vmem>>, vector<1x4x16xf32>
    %50 = vector.shape_cast %49 : vector<1x4x16xf32> to vector<4x16xf32>
    %51 = tpu.concatenate %50, %12 in 1 : vector<4x16xf32>, vector<4x6xf32> -> vector<4x22xf32>
    %c0_42 = arith.constant 0 : index
    %c267 = arith.constant 267 : index
    %52 = vector.load %arg7[%c0_42, %c267] : memref<8x1100xf32, #tpu.memory_space<vmem>>, vector<4x22xf32>
    tpu.vector_store %arg7[%c0_42, %c267], %51 {strides = array<i32>} : memref<8x1100xf32, #tpu.memory_space<vmem>>, vector<4x22xf32>,
    %c0_43 = arith.constant 0 : index
    %c0_44 = arith.constant 0 : index
    %c160 = arith.constant 160 : index
    %53 = vector.load %arg1[%c0_43, %c0_44, %c160] : memref<2x4x256xf32, #tpu.memory_space<vmem>>, vector<1x4x16xf32>
    %54 = vector.shape_cast %53 : vector<1x4x16xf32> to vector<4x16xf32>
    %55 = tpu.concatenate %54, %12 in 1 : vector<4x16xf32>, vector<4x6xf32> -> vector<4x22xf32>
    %c0_45 = arith.constant 0 : index
    %c289 = arith.constant 289 : index
    %56 = vector.load %arg7[%c0_45, %c289] : memref<8x1100xf32, #tpu.memory_space<vmem>>, vector<4x22xf32>
    tpu.vector_store %arg7[%c0_45, %c289], %55 {strides = array<i32>} : memref<8x1100xf32, #tpu.memory_space<vmem>>, vector<4x22xf32>,
    %c0_46 = arith.constant 0 : index
    %c0_47 = arith.constant 0 : index
    %c176 = arith.constant 176 : index
    %57 = vector.load %arg1[%c0_46, %c0_47, %c176] : memref<2x4x256xf32, #tpu.memory_space<vmem>>, vector<1x4x16xf32>
    %58 = vector.shape_cast %57 : vector<1x4x16xf32> to vector<4x16xf32>
    %59 = tpu.concatenate %58, %12 in 1 : vector<4x16xf32>, vector<4x6xf32> -> vector<4x22xf32>
    %c0_48 = arith.constant 0 : index
    %c311 = arith.constant 311 : index
    %60 = vector.load %arg7[%c0_48, %c311] : memref<8x1100xf32, #tpu.memory_space<vmem>>, vector<4x22xf32>
    tpu.vector_store %arg7[%c0_48, %c311], %59 {strides = array<i32>} : memref<8x1100xf32, #tpu.memory_space<vmem>>, vector<4x22xf32>,
    %c0_49 = arith.constant 0 : index
    %c0_50 = arith.constant 0 : index
    %c192 = arith.constant 192 : index
    %61 = vector.load %arg1[%c0_49, %c0_50, %c192] : memref<2x4x256xf32, #tpu.memory_space<vmem>>, vector<1x4x16xf32>
    %62 = vector.shape_cast %61 : vector<1x4x16xf32> to vector<4x16xf32>
    %63 = tpu.concatenate %62, %12 in 1 : vector<4x16xf32>, vector<4x6xf32> -> vector<4x22xf32>
    %c0_51 = arith.constant 0 : index
    %c333 = arith.constant 333 : index
    %64 = vector.load %arg7[%c0_51, %c333] : memref<8x1100xf32, #tpu.memory_space<vmem>>, vector<4x22xf32>
    tpu.vector_store %arg7[%c0_51, %c333], %63 {strides = array<i32>} : memref<8x1100xf32, #tpu.memory_space<vmem>>, vector<4x22xf32>,
    %c0_52 = arith.constant 0 : index
    %c0_53 = arith.constant 0 : index
    %c208 = arith.constant 208 : index
    %65 = vector.load %arg1[%c0_52, %c0_53, %c208] : memref<2x4x256xf32, #tpu.memory_space<vmem>>, vector<1x4x16xf32>
    %66 = vector.shape_cast %65 : vector<1x4x16xf32> to vector<4x16xf32>
    %67 = tpu.concatenate %66, %12 in 1 : vector<4x16xf32>, vector<4x6xf32> -> vector<4x22xf32>
    %c0_54 = arith.constant 0 : index
    %c355 = arith.constant 355 : index
    %68 = vector.load %arg7[%c0_54, %c355] : memref<8x1100xf32, #tpu.memory_space<vmem>>, vector<4x22xf32>
    tpu.vector_store %arg7[%c0_54, %c355], %67 {strides = array<i32>} : memref<8x1100xf32, #tpu.memory_space<vmem>>, vector<4x22xf32>,
    %c0_55 = arith.constant 0 : index
    %c0_56 = arith.constant 0 : index
    %c224 = arith.constant 224 : index
    %69 = vector.load %arg1[%c0_55, %c0_56, %c224] : memref<2x4x256xf32, #tpu.memory_space<vmem>>, vector<1x4x16xf32>
    %70 = vector.shape_cast %69 : vector<1x4x16xf32> to vector<4x16xf32>
    %71 = tpu.concatenate %70, %12 in 1 : vector<4x16xf32>, vector<4x6xf32> -> vector<4x22xf32>
    %c0_57 = arith.constant 0 : index
    %c377 = arith.constant 377 : index
    %72 = vector.load %arg7[%c0_57, %c377] : memref<8x1100xf32, #tpu.memory_space<vmem>>, vector<4x22xf32>
    tpu.vector_store %arg7[%c0_57, %c377], %71 {strides = array<i32>} : memref<8x1100xf32, #tpu.memory_space<vmem>>, vector<4x22xf32>,
    %c0_58 = arith.constant 0 : index
    %c0_59 = arith.constant 0 : index
    %c240 = arith.constant 240 : index
    %73 = vector.load %arg1[%c0_58, %c0_59, %c240] : memref<2x4x256xf32, #tpu.memory_space<vmem>>, vector<1x4x16xf32>
    %74 = vector.shape_cast %73 : vector<1x4x16xf32> to vector<4x16xf32>
    %75 = tpu.concatenate %74, %12 in 1 : vector<4x16xf32>, vector<4x6xf32> -> vector<4x22xf32>
    %c0_60 = arith.constant 0 : index
    %c399 = arith.constant 399 : index
    %76 = vector.load %arg7[%c0_60, %c399] : memref<8x1100xf32, #tpu.memory_space<vmem>>, vector<4x22xf32>
    tpu.vector_store %arg7[%c0_60, %c399], %75 {strides = array<i32>} : memref<8x1100xf32, #tpu.memory_space<vmem>>, vector<4x22xf32>,
    %c1 = arith.constant 1 : index
    %c0_61 = arith.constant 0 : index
    %c0_62 = arith.constant 0 : index
    %77 = vector.load %arg1[%c1, %c0_61, %c0_62] : memref<2x4x256xf32, #tpu.memory_space<vmem>>, vector<1x4x16xf32>
    %78 = vector.shape_cast %77 : vector<1x4x16xf32> to vector<4x16xf32>
    %79 = tpu.concatenate %78, %12 in 1 : vector<4x16xf32>, vector<4x6xf32> -> vector<4x22xf32>
    %c0_63 = arith.constant 0 : index
    %c553 = arith.constant 553 : index
    %80 = vector.load %arg7[%c0_63, %c553] : memref<8x1100xf32, #tpu.memory_space<vmem>>, vector<4x22xf32>
    tpu.vector_store %arg7[%c0_63, %c553], %79 {strides = array<i32>} : memref<8x1100xf32, #tpu.memory_space<vmem>>, vector<4x22xf32>,
    %c1_64 = arith.constant 1 : index
    %c0_65 = arith.constant 0 : index
    %c16_66 = arith.constant 16 : index
    %81 = vector.load %arg1[%c1_64, %c0_65, %c16_66] : memref<2x4x256xf32, #tpu.memory_space<vmem>>, vector<1x4x16xf32>
    %82 = vector.shape_cast %81 : vector<1x4x16xf32> to vector<4x16xf32>
    %83 = tpu.concatenate %82, %12 in 1 : vector<4x16xf32>, vector<4x6xf32> -> vector<4x22xf32>
    %c0_67 = arith.constant 0 : index
    %c575 = arith.constant 575 : index
    %84 = vector.load %arg7[%c0_67, %c575] : memref<8x1100xf32, #tpu.memory_space<vmem>>, vector<4x22xf32>
    tpu.vector_store %arg7[%c0_67, %c575], %83 {strides = array<i32>} : memref<8x1100xf32, #tpu.memory_space<vmem>>, vector<4x22xf32>,
    %c1_68 = arith.constant 1 : index
    %c0_69 = arith.constant 0 : index
    %c32_70 = arith.constant 32 : index
    %85 = vector.load %arg1[%c1_68, %c0_69, %c32_70] : memref<2x4x256xf32, #tpu.memory_space<vmem>>, vector<1x4x16xf32>
    %86 = vector.shape_cast %85 : vector<1x4x16xf32> to vector<4x16xf32>
    %87 = tpu.concatenate %86, %12 in 1 : vector<4x16xf32>, vector<4x6xf32> -> vector<4x22xf32>
    %c0_71 = arith.constant 0 : index
    %c597 = arith.constant 597 : index
    %88 = vector.load %arg7[%c0_71, %c597] : memref<8x1100xf32, #tpu.memory_space<vmem>>, vector<4x22xf32>
    tpu.vector_store %arg7[%c0_71, %c597], %87 {strides = array<i32>} : memref<8x1100xf32, #tpu.memory_space<vmem>>, vector<4x22xf32>,
    %c1_72 = arith.constant 1 : index
    %c0_73 = arith.constant 0 : index
    %c48_74 = arith.constant 48 : index
    %89 = vector.load %arg1[%c1_72, %c0_73, %c48_74] : memref<2x4x256xf32, #tpu.memory_space<vmem>>, vector<1x4x16xf32>
    %90 = vector.shape_cast %89 : vector<1x4x16xf32> to vector<4x16xf32>
    %91 = tpu.concatenate %90, %12 in 1 : vector<4x16xf32>, vector<4x6xf32> -> vector<4x22xf32>
    %c0_75 = arith.constant 0 : index
    %c619 = arith.constant 619 : index
    %92 = vector.load %arg7[%c0_75, %c619] : memref<8x1100xf32, #tpu.memory_space<vmem>>, vector<4x22xf32>
    tpu.vector_store %arg7[%c0_75, %c619], %91 {strides = array<i32>} : memref<8x1100xf32, #tpu.memory_space<vmem>>, vector<4x22xf32>,
    %c1_76 = arith.constant 1 : index
    %c0_77 = arith.constant 0 : index
    %c64_78 = arith.constant 64 : index
    %93 = vector.load %arg1[%c1_76, %c0_77, %c64_78] : memref<2x4x256xf32, #tpu.memory_space<vmem>>, vector<1x4x16xf32>
    %94 = vector.shape_cast %93 : vector<1x4x16xf32> to vector<4x16xf32>
    %95 = tpu.concatenate %94, %12 in 1 : vector<4x16xf32>, vector<4x6xf32> -> vector<4x22xf32>
    %c0_79 = arith.constant 0 : index
    %c641 = arith.constant 641 : index
    %96 = vector.load %arg7[%c0_79, %c641] : memref<8x1100xf32, #tpu.memory_space<vmem>>, vector<4x22xf32>
    tpu.vector_store %arg7[%c0_79, %c641], %95 {strides = array<i32>} : memref<8x1100xf32, #tpu.memory_space<vmem>>, vector<4x22xf32>,
    %c1_80 = arith.constant 1 : index
    %c0_81 = arith.constant 0 : index
    %c80_82 = arith.constant 80 : index
    %97 = vector.load %arg1[%c1_80, %c0_81, %c80_82] : memref<2x4x256xf32, #tpu.memory_space<vmem>>, vector<1x4x16xf32>
    %98 = vector.shape_cast %97 : vector<1x4x16xf32> to vector<4x16xf32>
    %99 = tpu.concatenate %98, %12 in 1 : vector<4x16xf32>, vector<4x6xf32> -> vector<4x22xf32>
    %c0_83 = arith.constant 0 : index
    %c663 = arith.constant 663 : index
    %100 = vector.load %arg7[%c0_83, %c663] : memref<8x1100xf32, #tpu.memory_space<vmem>>, vector<4x22xf32>
    tpu.vector_store %arg7[%c0_83, %c663], %99 {strides = array<i32>} : memref<8x1100xf32, #tpu.memory_space<vmem>>, vector<4x22xf32>,
    %c1_84 = arith.constant 1 : index
    %c0_85 = arith.constant 0 : index
    %c96_86 = arith.constant 96 : index
    %101 = vector.load %arg1[%c1_84, %c0_85, %c96_86] : memref<2x4x256xf32, #tpu.memory_space<vmem>>, vector<1x4x16xf32>
    %102 = vector.shape_cast %101 : vector<1x4x16xf32> to vector<4x16xf32>
    %103 = tpu.concatenate %102, %12 in 1 : vector<4x16xf32>, vector<4x6xf32> -> vector<4x22xf32>
    %c0_87 = arith.constant 0 : index
    %c685 = arith.constant 685 : index
    %104 = vector.load %arg7[%c0_87, %c685] : memref<8x1100xf32, #tpu.memory_space<vmem>>, vector<4x22xf32>
    tpu.vector_store %arg7[%c0_87, %c685], %103 {strides = array<i32>} : memref<8x1100xf32, #tpu.memory_space<vmem>>, vector<4x22xf32>,
    %c1_88 = arith.constant 1 : index
    %c0_89 = arith.constant 0 : index
    %c112_90 = arith.constant 112 : index
    %105 = vector.load %arg1[%c1_88, %c0_89, %c112_90] : memref<2x4x256xf32, #tpu.memory_space<vmem>>, vector<1x4x16xf32>
    %106 = vector.shape_cast %105 : vector<1x4x16xf32> to vector<4x16xf32>
    %107 = tpu.concatenate %106, %12 in 1 : vector<4x16xf32>, vector<4x6xf32> -> vector<4x22xf32>
    %c0_91 = arith.constant 0 : index
    %c707 = arith.constant 707 : index
    %108 = vector.load %arg7[%c0_91, %c707] : memref<8x1100xf32, #tpu.memory_space<vmem>>, vector<4x22xf32>
    tpu.vector_store %arg7[%c0_91, %c707], %107 {strides = array<i32>} : memref<8x1100xf32, #tpu.memory_space<vmem>>, vector<4x22xf32>,
    %c1_92 = arith.constant 1 : index
    %c0_93 = arith.constant 0 : index
    %c128_94 = arith.constant 128 : index
    %109 = vector.load %arg1[%c1_92, %c0_93, %c128_94] : memref<2x4x256xf32, #tpu.memory_space<vmem>>, vector<1x4x16xf32>
    %110 = vector.shape_cast %109 : vector<1x4x16xf32> to vector<4x16xf32>
    %111 = tpu.concatenate %110, %12 in 1 : vector<4x16xf32>, vector<4x6xf32> -> vector<4x22xf32>
    %c0_95 = arith.constant 0 : index
    %c729 = arith.constant 729 : index
    %112 = vector.load %arg7[%c0_95, %c729] : memref<8x1100xf32, #tpu.memory_space<vmem>>, vector<4x22xf32>
    tpu.vector_store %arg7[%c0_95, %c729], %111 {strides = array<i32>} : memref<8x1100xf32, #tpu.memory_space<vmem>>, vector<4x22xf32>,
    %c1_96 = arith.constant 1 : index
    %c0_97 = arith.constant 0 : index
    %c144_98 = arith.constant 144 : index
    %113 = vector.load %arg1[%c1_96, %c0_97, %c144_98] : memref<2x4x256xf32, #tpu.memory_space<vmem>>, vector<1x4x16xf32>
    %114 = vector.shape_cast %113 : vector<1x4x16xf32> to vector<4x16xf32>
    %115 = tpu.concatenate %114, %12 in 1 : vector<4x16xf32>, vector<4x6xf32> -> vector<4x22xf32>
    %c0_99 = arith.constant 0 : index
    %c751 = arith.constant 751 : index
    %116 = vector.load %arg7[%c0_99, %c751] : memref<8x1100xf32, #tpu.memory_space<vmem>>, vector<4x22xf32>
    tpu.vector_store %arg7[%c0_99, %c751], %115 {strides = array<i32>} : memref<8x1100xf32, #tpu.memory_space<vmem>>, vector<4x22xf32>,
    %c1_100 = arith.constant 1 : index
    %c0_101 = arith.constant 0 : index
    %c160_102 = arith.constant 160 : index
    %117 = vector.load %arg1[%c1_100, %c0_101, %c160_102] : memref<2x4x256xf32, #tpu.memory_space<vmem>>, vector<1x4x16xf32>
    %118 = vector.shape_cast %117 : vector<1x4x16xf32> to vector<4x16xf32>
    %119 = tpu.concatenate %118, %12 in 1 : vector<4x16xf32>, vector<4x6xf32> -> vector<4x22xf32>
    %c0_103 = arith.constant 0 : index
    %c773 = arith.constant 773 : index
    %120 = vector.load %arg7[%c0_103, %c773] : memref<8x1100xf32, #tpu.memory_space<vmem>>, vector<4x22xf32>
    tpu.vector_store %arg7[%c0_103, %c773], %119 {strides = array<i32>} : memref<8x1100xf32, #tpu.memory_space<vmem>>, vector<4x22xf32>,
    %c1_104 = arith.constant 1 : index
    %c0_105 = arith.constant 0 : index
    %c176_106 = arith.constant 176 : index
    %121 = vector.load %arg1[%c1_104, %c0_105, %c176_106] : memref<2x4x256xf32, #tpu.memory_space<vmem>>, vector<1x4x16xf32>
    %122 = vector.shape_cast %121 : vector<1x4x16xf32> to vector<4x16xf32>
    %123 = tpu.concatenate %122, %12 in 1 : vector<4x16xf32>, vector<4x6xf32> -> vector<4x22xf32>
    %c0_107 = arith.constant 0 : index
    %c795 = arith.constant 795 : index
    %124 = vector.load %arg7[%c0_107, %c795] : memref<8x1100xf32, #tpu.memory_space<vmem>>, vector<4x22xf32>
    tpu.vector_store %arg7[%c0_107, %c795], %123 {strides = array<i32>} : memref<8x1100xf32, #tpu.memory_space<vmem>>, vector<4x22xf32>,
    %c1_108 = arith.constant 1 : index
    %c0_109 = arith.constant 0 : index
    %c192_110 = arith.constant 192 : index
    %125 = vector.load %arg1[%c1_108, %c0_109, %c192_110] : memref<2x4x256xf32, #tpu.memory_space<vmem>>, vector<1x4x16xf32>
    %126 = vector.shape_cast %125 : vector<1x4x16xf32> to vector<4x16xf32>
    %127 = tpu.concatenate %126, %12 in 1 : vector<4x16xf32>, vector<4x6xf32> -> vector<4x22xf32>
    %c0_111 = arith.constant 0 : index
    %c817 = arith.constant 817 : index
    %128 = vector.load %arg7[%c0_111, %c817] : memref<8x1100xf32, #tpu.memory_space<vmem>>, vector<4x22xf32>
    tpu.vector_store %arg7[%c0_111, %c817], %127 {strides = array<i32>} : memref<8x1100xf32, #tpu.memory_space<vmem>>, vector<4x22xf32>,
    %c1_112 = arith.constant 1 : index
    %c0_113 = arith.constant 0 : index
    %c208_114 = arith.constant 208 : index
    %129 = vector.load %arg1[%c1_112, %c0_113, %c208_114] : memref<2x4x256xf32, #tpu.memory_space<vmem>>, vector<1x4x16xf32>
    %130 = vector.shape_cast %129 : vector<1x4x16xf32> to vector<4x16xf32>
    %131 = tpu.concatenate %130, %12 in 1 : vector<4x16xf32>, vector<4x6xf32> -> vector<4x22xf32>
    %c0_115 = arith.constant 0 : index
    %c839 = arith.constant 839 : index
    %132 = vector.load %arg7[%c0_115, %c839] : memref<8x1100xf32, #tpu.memory_space<vmem>>, vector<4x22xf32>
    tpu.vector_store %arg7[%c0_115, %c839], %131 {strides = array<i32>} : memref<8x1100xf32, #tpu.memory_space<vmem>>, vector<4x22xf32>,
    %c1_116 = arith.constant 1 : index
    %c0_117 = arith.constant 0 : index
    %c224_118 = arith.constant 224 : index
    %133 = vector.load %arg1[%c1_116, %c0_117, %c224_118] : memref<2x4x256xf32, #tpu.memory_space<vmem>>, vector<1x4x16xf32>
    %134 = vector.shape_cast %133 : vector<1x4x16xf32> to vector<4x16xf32>
    %135 = tpu.concatenate %134, %12 in 1 : vector<4x16xf32>, vector<4x6xf32> -> vector<4x22xf32>
    %c0_119 = arith.constant 0 : index
    %c861 = arith.constant 861 : index
    %136 = vector.load %arg7[%c0_119, %c861] : memref<8x1100xf32, #tpu.memory_space<vmem>>, vector<4x22xf32>
    tpu.vector_store %arg7[%c0_119, %c861], %135 {strides = array<i32>} : memref<8x1100xf32, #tpu.memory_space<vmem>>, vector<4x22xf32>,
    %c1_120 = arith.constant 1 : index
    %c0_121 = arith.constant 0 : index
    %c240_122 = arith.constant 240 : index
    %137 = vector.load %arg1[%c1_120, %c0_121, %c240_122] : memref<2x4x256xf32, #tpu.memory_space<vmem>>, vector<1x4x16xf32>
    %138 = vector.shape_cast %137 : vector<1x4x16xf32> to vector<4x16xf32>
    %139 = tpu.concatenate %138, %12 in 1 : vector<4x16xf32>, vector<4x6xf32> -> vector<4x22xf32>
    %c0_123 = arith.constant 0 : index
    %c883 = arith.constant 883 : index
    %140 = vector.load %arg7[%c0_123, %c883] : memref<8x1100xf32, #tpu.memory_space<vmem>>, vector<4x22xf32>
    tpu.vector_store %arg7[%c0_123, %c883], %139 {strides = array<i32>} : memref<8x1100xf32, #tpu.memory_space<vmem>>, vector<4x22xf32>,
    %c0_124 = arith.constant 0 : index
    %c0_125 = arith.constant 0 : index
    %141 = vector.load %arg7[%c0_124, %c0_125] : memref<8x1100xf32, #tpu.memory_space<vmem>>, vector<8x968xf32>
    %c0_126 = arith.constant 0 : index
    %c0_127 = arith.constant 0 : index
    %142 = vector.load %arg8[%c0_126, %c0_127] : memref<112x968xf32, #tpu.memory_space<vmem>>, vector<8x968xf32>
    tpu.vector_store %arg8[%c0_126, %c0_127], %141 {strides = array<i32>} : memref<112x968xf32, #tpu.memory_space<vmem>>, vector<8x968xf32>,
    %c0_128 = arith.constant 0 : index
    %c22 = arith.constant 22 : index
    %143 = vector.load %arg7[%c0_128, %c22] : memref<8x1100xf32, #tpu.memory_space<vmem>>, vector<8x968xf32>
    %c8 = arith.constant 8 : index
    %c0_129 = arith.constant 0 : index
    %144 = vector.load %arg8[%c8, %c0_129] : memref<112x968xf32, #tpu.memory_space<vmem>>, vector<8x968xf32>
    tpu.vector_store %arg8[%c8, %c0_129], %143 {strides = array<i32>} : memref<112x968xf32, #tpu.memory_space<vmem>>, vector<8x968xf32>,
    %c0_130 = arith.constant 0 : index
    %c44 = arith.constant 44 : index
    %145 = vector.load %arg7[%c0_130, %c44] : memref<8x1100xf32, #tpu.memory_space<vmem>>, vector<8x968xf32>
    %c16_131 = arith.constant 16 : index
    %c0_132 = arith.constant 0 : index
    %146 = vector.load %arg8[%c16_131, %c0_132] : memref<112x968xf32, #tpu.memory_space<vmem>>, vector<8x968xf32>
    tpu.vector_store %arg8[%c16_131, %c0_132], %145 {strides = array<i32>} : memref<112x968xf32, #tpu.memory_space<vmem>>, vector<8x968xf32>,
    %c0_133 = arith.constant 0 : index
    %c66 = arith.constant 66 : index
    %147 = vector.load %arg7[%c0_133, %c66] : memref<8x1100xf32, #tpu.memory_space<vmem>>, vector<8x968xf32>
    %c24 = arith.constant 24 : index
    %c0_134 = arith.constant 0 : index
    %148 = vector.load %arg8[%c24, %c0_134] : memref<112x968xf32, #tpu.memory_space<vmem>>, vector<8x968xf32>
    tpu.vector_store %arg8[%c24, %c0_134], %147 {strides = array<i32>} : memref<112x968xf32, #tpu.memory_space<vmem>>, vector<8x968xf32>,
    %c0_135 = arith.constant 0 : index
    %c88 = arith.constant 88 : index
    %149 = vector.load %arg7[%c0_135, %c88] : memref<8x1100xf32, #tpu.memory_space<vmem>>, vector<8x968xf32>
    %c32_136 = arith.constant 32 : index
    %c0_137 = arith.constant 0 : index
    %150 = vector.load %arg8[%c32_136, %c0_137] : memref<112x968xf32, #tpu.memory_space<vmem>>, vector<8x968xf32>
    tpu.vector_store %arg8[%c32_136, %c0_137], %149 {strides = array<i32>} : memref<112x968xf32, #tpu.memory_space<vmem>>, vector<8x968xf32>,
    %c0_138 = arith.constant 0 : index
    %c110 = arith.constant 110 : index
    %151 = vector.load %arg7[%c0_138, %c110] : memref<8x1100xf32, #tpu.memory_space<vmem>>, vector<8x968xf32>
    %c40 = arith.constant 40 : index
    %c0_139 = arith.constant 0 : index
    %152 = vector.load %arg8[%c40, %c0_139] : memref<112x968xf32, #tpu.memory_space<vmem>>, vector<8x968xf32>
    tpu.vector_store %arg8[%c40, %c0_139], %151 {strides = array<i32>} : memref<112x968xf32, #tpu.memory_space<vmem>>, vector<8x968xf32>,
    %c0_140 = arith.constant 0 : index
    %c132 = arith.constant 132 : index
    %153 = vector.load %arg7[%c0_140, %c132] : memref<8x1100xf32, #tpu.memory_space<vmem>>, vector<8x968xf32>
    %c48_141 = arith.constant 48 : index
    %c0_142 = arith.constant 0 : index
    %154 = vector.load %arg8[%c48_141, %c0_142] : memref<112x968xf32, #tpu.memory_space<vmem>>, vector<8x968xf32>
    tpu.vector_store %arg8[%c48_141, %c0_142], %153 {strides = array<i32>} : memref<112x968xf32, #tpu.memory_space<vmem>>, vector<8x968xf32>,
    %c0_143 = arith.constant 0 : index
    %c0_144 = arith.constant 0 : index
    %155 = vector.load %arg7[%c0_143, %c0_144] : memref<8x1100xf32, #tpu.memory_space<vmem>>, vector<8x968xf32>
    %c56 = arith.constant 56 : index
    %c0_145 = arith.constant 0 : index
    %156 = vector.load %arg8[%c56, %c0_145] : memref<112x968xf32, #tpu.memory_space<vmem>>, vector<8x968xf32>
    tpu.vector_store %arg8[%c56, %c0_145], %155 {strides = array<i32>} : memref<112x968xf32, #tpu.memory_space<vmem>>, vector<8x968xf32>,
    %c0_146 = arith.constant 0 : index
    %c1_147 = arith.constant 1 : index
    %157 = vector.load %arg7[%c0_146, %c1_147] : memref<8x1100xf32, #tpu.memory_space<vmem>>, vector<8x968xf32>
    %c64_148 = arith.constant 64 : index
    %c0_149 = arith.constant 0 : index
    %158 = vector.load %arg8[%c64_148, %c0_149] : memref<112x968xf32, #tpu.memory_space<vmem>>, vector<8x968xf32>
    tpu.vector_store %arg8[%c64_148, %c0_149], %157 {strides = array<i32>} : memref<112x968xf32, #tpu.memory_space<vmem>>, vector<8x968xf32>,
    %c0_150 = arith.constant 0 : index
    %c2 = arith.constant 2 : index
    %159 = vector.load %arg7[%c0_150, %c2] : memref<8x1100xf32, #tpu.memory_space<vmem>>, vector<8x968xf32>
    %c72 = arith.constant 72 : index
    %c0_151 = arith.constant 0 : index
    %160 = vector.load %arg8[%c72, %c0_151] : memref<112x968xf32, #tpu.memory_space<vmem>>, vector<8x968xf32>
    tpu.vector_store %arg8[%c72, %c0_151], %159 {strides = array<i32>} : memref<112x968xf32, #tpu.memory_space<vmem>>, vector<8x968xf32>,
    %c0_152 = arith.constant 0 : index
    %c3 = arith.constant 3 : index
    %161 = vector.load %arg7[%c0_152, %c3] : memref<8x1100xf32, #tpu.memory_space<vmem>>, vector<8x968xf32>
    %c80_153 = arith.constant 80 : index
    %c0_154 = arith.constant 0 : index
    %162 = vector.load %arg8[%c80_153, %c0_154] : memref<112x968xf32, #tpu.memory_space<vmem>>, vector<8x968xf32>
    tpu.vector_store %arg8[%c80_153, %c0_154], %161 {strides = array<i32>} : memref<112x968xf32, #tpu.memory_space<vmem>>, vector<8x968xf32>,
    %c0_155 = arith.constant 0 : index
    %c4_156 = arith.constant 4 : index
    %163 = vector.load %arg7[%c0_155, %c4_156] : memref<8x1100xf32, #tpu.memory_space<vmem>>, vector<8x968xf32>
    %c88_157 = arith.constant 88 : index
    %c0_158 = arith.constant 0 : index
    %164 = vector.load %arg8[%c88_157, %c0_158] : memref<112x968xf32, #tpu.memory_space<vmem>>, vector<8x968xf32>
    tpu.vector_store %arg8[%c88_157, %c0_158], %163 {strides = array<i32>} : memref<112x968xf32, #tpu.memory_space<vmem>>, vector<8x968xf32>,
    %c0_159 = arith.constant 0 : index
    %c5 = arith.constant 5 : index
    %165 = vector.load %arg7[%c0_159, %c5] : memref<8x1100xf32, #tpu.memory_space<vmem>>, vector<8x968xf32>
    %c96_160 = arith.constant 96 : index
    %c0_161 = arith.constant 0 : index
    %166 = vector.load %arg8[%c96_160, %c0_161] : memref<112x968xf32, #tpu.memory_space<vmem>>, vector<8x968xf32>
    tpu.vector_store %arg8[%c96_160, %c0_161], %165 {strides = array<i32>} : memref<112x968xf32, #tpu.memory_space<vmem>>, vector<8x968xf32>,
    %c0_162 = arith.constant 0 : index
    %c6 = arith.constant 6 : index
    %167 = vector.load %arg7[%c0_162, %c6] : memref<8x1100xf32, #tpu.memory_space<vmem>>, vector<8x968xf32>
    %c104 = arith.constant 104 : index
    %c0_163 = arith.constant 0 : index
    %168 = vector.load %arg8[%c104, %c0_163] : memref<112x968xf32, #tpu.memory_space<vmem>>, vector<8x968xf32>
    tpu.vector_store %arg8[%c104, %c0_163], %167 {strides = array<i32>} : memref<112x968xf32, #tpu.memory_space<vmem>>, vector<8x968xf32>,
    %c0_164 = arith.constant 0 : index
    %c0_165 = arith.constant 0 : index
    %169 = vector.load %arg2[%c0_164, %c0_165] : memref<16x112xf32, #tpu.memory_space<vmem>>, vector<16x112xf32>
    %c0_166 = arith.constant 0 : index
    %c0_167 = arith.constant 0 : index
    %170 = vector.load %arg8[%c0_166, %c0_167] : memref<112x968xf32, #tpu.memory_space<vmem>>, vector<112x968xf32>
    %cst_168 = arith.constant dense<0.000000e+00> : vector<16x968xf32>
    %171 = tpu.matmul %169, %170, %cst_168 {dimension_numbers = #tpu.dot_dimension_numbers<[1], [0], [0], [1], [0, 0, 1, 1], [], []>} : vector<16x112xf32>, vector<112x968xf32>, vector<16x968xf32> -> vector<16x968xf32>
    %c0_169 = arith.constant 0 : index
    %c0_170 = arith.constant 0 : index
    %172 = vector.load %arg3[%c0_169, %c0_170] : memref<16x968xf32, #tpu.memory_space<vmem>>, vector<16x968xf32>
    %173 = arith.addf %171, %172 : vector<16x968xf32>
    %c0_171 = arith.constant 0 : index
    %c0_172 = arith.constant 0 : index
    %174 = vector.load %arg9[%c0_171, %c0_172] : memref<16x968xf32, #tpu.memory_space<vmem>>, vector<16x968xf32>
    tpu.vector_store %arg9[%c0_171, %c0_172], %173 {strides = array<i32>} : memref<16x968xf32, #tpu.memory_space<vmem>>, vector<16x968xf32>,
    %c0_173 = arith.constant 0 : index
    %c0_174 = arith.constant 0 : index
    %175 = vector.load %arg9[%c0_173, %c0_174] : memref<16x968xf32, #tpu.memory_space<vmem>>, vector<8x352xf32>
    %c0_175 = arith.constant 0 : index
    %c0_176 = arith.constant 0 : index
    %176 = vector.load %arg10[%c0_175, %c0_176] : memref<112x352xf32, #tpu.memory_space<vmem>>, vector<8x352xf32>
    tpu.vector_store %arg10[%c0_175, %c0_176], %175 {strides = array<i32>} : memref<112x352xf32, #tpu.memory_space<vmem>>, vector<8x352xf32>,
    %c0_177 = arith.constant 0 : index
    %c1_178 = arith.constant 1 : index
    %177 = vector.load %arg9[%c0_177, %c1_178] : memref<16x968xf32, #tpu.memory_space<vmem>>, vector<8x352xf32>
    %c8_179 = arith.constant 8 : index
    %c0_180 = arith.constant 0 : index
    %178 = vector.load %arg10[%c8_179, %c0_180] : memref<112x352xf32, #tpu.memory_space<vmem>>, vector<8x352xf32>
    tpu.vector_store %arg10[%c8_179, %c0_180], %177 {strides = array<i32>} : memref<112x352xf32, #tpu.memory_space<vmem>>, vector<8x352xf32>,
    %c0_181 = arith.constant 0 : index
    %c2_182 = arith.constant 2 : index
    %179 = vector.load %arg9[%c0_181, %c2_182] : memref<16x968xf32, #tpu.memory_space<vmem>>, vector<8x352xf32>
    %c16_183 = arith.constant 16 : index
    %c0_184 = arith.constant 0 : index
    %180 = vector.load %arg10[%c16_183, %c0_184] : memref<112x352xf32, #tpu.memory_space<vmem>>, vector<8x352xf32>
    tpu.vector_store %arg10[%c16_183, %c0_184], %179 {strides = array<i32>} : memref<112x352xf32, #tpu.memory_space<vmem>>, vector<8x352xf32>,
    %c0_185 = arith.constant 0 : index
    %c3_186 = arith.constant 3 : index
    %181 = vector.load %arg9[%c0_185, %c3_186] : memref<16x968xf32, #tpu.memory_space<vmem>>, vector<8x352xf32>
    %c24_187 = arith.constant 24 : index
    %c0_188 = arith.constant 0 : index
    %182 = vector.load %arg10[%c24_187, %c0_188] : memref<112x352xf32, #tpu.memory_space<vmem>>, vector<8x352xf32>
    tpu.vector_store %arg10[%c24_187, %c0_188], %181 {strides = array<i32>} : memref<112x352xf32, #tpu.memory_space<vmem>>, vector<8x352xf32>,
    %c0_189 = arith.constant 0 : index
    %c4_190 = arith.constant 4 : index
    %183 = vector.load %arg9[%c0_189, %c4_190] : memref<16x968xf32, #tpu.memory_space<vmem>>, vector<8x352xf32>
    %c32_191 = arith.constant 32 : index
    %c0_192 = arith.constant 0 : index
    %184 = vector.load %arg10[%c32_191, %c0_192] : memref<112x352xf32, #tpu.memory_space<vmem>>, vector<8x352xf32>
    tpu.vector_store %arg10[%c32_191, %c0_192], %183 {strides = array<i32>} : memref<112x352xf32, #tpu.memory_space<vmem>>, vector<8x352xf32>,
    %c0_193 = arith.constant 0 : index
    %c5_194 = arith.constant 5 : index
    %185 = vector.load %arg9[%c0_193, %c5_194] : memref<16x968xf32, #tpu.memory_space<vmem>>, vector<8x352xf32>
    %c40_195 = arith.constant 40 : index
    %c0_196 = arith.constant 0 : index
    %186 = vector.load %arg10[%c40_195, %c0_196] : memref<112x352xf32, #tpu.memory_space<vmem>>, vector<8x352xf32>
    tpu.vector_store %arg10[%c40_195, %c0_196], %185 {strides = array<i32>} : memref<112x352xf32, #tpu.memory_space<vmem>>, vector<8x352xf32>,
    %c0_197 = arith.constant 0 : index
    %c6_198 = arith.constant 6 : index
    %187 = vector.load %arg9[%c0_197, %c6_198] : memref<16x968xf32, #tpu.memory_space<vmem>>, vector<8x352xf32>
    %c48_199 = arith.constant 48 : index
    %c0_200 = arith.constant 0 : index
    %188 = vector.load %arg10[%c48_199, %c0_200] : memref<112x352xf32, #tpu.memory_space<vmem>>, vector<8x352xf32>
    tpu.vector_store %arg10[%c48_199, %c0_200], %187 {strides = array<i32>} : memref<112x352xf32, #tpu.memory_space<vmem>>, vector<8x352xf32>,
    %c8_201 = arith.constant 8 : index
    %c0_202 = arith.constant 0 : index
    %189 = vector.load %arg9[%c8_201, %c0_202] : memref<16x968xf32, #tpu.memory_space<vmem>>, vector<8x352xf32>
    %c56_203 = arith.constant 56 : index
    %c0_204 = arith.constant 0 : index
    %190 = vector.load %arg10[%c56_203, %c0_204] : memref<112x352xf32, #tpu.memory_space<vmem>>, vector<8x352xf32>
    tpu.vector_store %arg10[%c56_203, %c0_204], %189 {strides = array<i32>} : memref<112x352xf32, #tpu.memory_space<vmem>>, vector<8x352xf32>,
    %c8_205 = arith.constant 8 : index
    %c22_206 = arith.constant 22 : index
    %191 = vector.load %arg9[%c8_205, %c22_206] : memref<16x968xf32, #tpu.memory_space<vmem>>, vector<8x352xf32>
    %c64_207 = arith.constant 64 : index
    %c0_208 = arith.constant 0 : index
    %192 = vector.load %arg10[%c64_207, %c0_208] : memref<112x352xf32, #tpu.memory_space<vmem>>, vector<8x352xf32>
    tpu.vector_store %arg10[%c64_207, %c0_208], %191 {strides = array<i32>} : memref<112x352xf32, #tpu.memory_space<vmem>>, vector<8x352xf32>,
    %c8_209 = arith.constant 8 : index
    %c44_210 = arith.constant 44 : index
    %193 = vector.load %arg9[%c8_209, %c44_210] : memref<16x968xf32, #tpu.memory_space<vmem>>, vector<8x352xf32>
    %c72_211 = arith.constant 72 : index
    %c0_212 = arith.constant 0 : index
    %194 = vector.load %arg10[%c72_211, %c0_212] : memref<112x352xf32, #tpu.memory_space<vmem>>, vector<8x352xf32>
    tpu.vector_store %arg10[%c72_211, %c0_212], %193 {strides = array<i32>} : memref<112x352xf32, #tpu.memory_space<vmem>>, vector<8x352xf32>,
    %c8_213 = arith.constant 8 : index
    %c66_214 = arith.constant 66 : index
    %195 = vector.load %arg9[%c8_213, %c66_214] : memref<16x968xf32, #tpu.memory_space<vmem>>, vector<8x352xf32>
    %c80_215 = arith.constant 80 : index
    %c0_216 = arith.constant 0 : index
    %196 = vector.load %arg10[%c80_215, %c0_216] : memref<112x352xf32, #tpu.memory_space<vmem>>, vector<8x352xf32>
    tpu.vector_store %arg10[%c80_215, %c0_216], %195 {strides = array<i32>} : memref<112x352xf32, #tpu.memory_space<vmem>>, vector<8x352xf32>,
    %c8_217 = arith.constant 8 : index
    %c88_218 = arith.constant 88 : index
    %197 = vector.load %arg9[%c8_217, %c88_218] : memref<16x968xf32, #tpu.memory_space<vmem>>, vector<8x352xf32>
    %c88_219 = arith.constant 88 : index
    %c0_220 = arith.constant 0 : index
    %198 = vector.load %arg10[%c88_219, %c0_220] : memref<112x352xf32, #tpu.memory_space<vmem>>, vector<8x352xf32>
    tpu.vector_store %arg10[%c88_219, %c0_220], %197 {strides = array<i32>} : memref<112x352xf32, #tpu.memory_space<vmem>>, vector<8x352xf32>,
    %c8_221 = arith.constant 8 : index
    %c110_222 = arith.constant 110 : index
    %199 = vector.load %arg9[%c8_221, %c110_222] : memref<16x968xf32, #tpu.memory_space<vmem>>, vector<8x352xf32>
    %c96_223 = arith.constant 96 : index
    %c0_224 = arith.constant 0 : index
    %200 = vector.load %arg10[%c96_223, %c0_224] : memref<112x352xf32, #tpu.memory_space<vmem>>, vector<8x352xf32>
    tpu.vector_store %arg10[%c96_223, %c0_224], %199 {strides = array<i32>} : memref<112x352xf32, #tpu.memory_space<vmem>>, vector<8x352xf32>,
    %c8_225 = arith.constant 8 : index
    %c132_226 = arith.constant 132 : index
    %201 = vector.load %arg9[%c8_225, %c132_226] : memref<16x968xf32, #tpu.memory_space<vmem>>, vector<8x352xf32>
    %c104_227 = arith.constant 104 : index
    %c0_228 = arith.constant 0 : index
    %202 = vector.load %arg10[%c104_227, %c0_228] : memref<112x352xf32, #tpu.memory_space<vmem>>, vector<8x352xf32>
    tpu.vector_store %arg10[%c104_227, %c0_228], %201 {strides = array<i32>} : memref<112x352xf32, #tpu.memory_space<vmem>>, vector<8x352xf32>,
    %c0_229 = arith.constant 0 : index
    %c0_230 = arith.constant 0 : index
    %203 = vector.load %arg4[%c0_229, %c0_230] : memref<8x112xf32, #tpu.memory_space<vmem>>, vector<8x112xf32>
    %c0_231 = arith.constant 0 : index
    %c0_232 = arith.constant 0 : index
    %204 = vector.load %arg10[%c0_231, %c0_232] : memref<112x352xf32, #tpu.memory_space<vmem>>, vector<112x352xf32>
    %cst_233 = arith.constant dense<0.000000e+00> : vector<8x352xf32>
    %205 = tpu.matmul %203, %204, %cst_233 {dimension_numbers = #tpu.dot_dimension_numbers<[1], [0], [0], [1], [0, 0, 1, 1], [], []>} : vector<8x112xf32>, vector<112x352xf32>, vector<8x352xf32> -> vector<8x352xf32>
    %c0_234 = arith.constant 0 : index
    %c0_235 = arith.constant 0 : index
    %206 = vector.load %arg5[%c0_234, %c0_235] : memref<8x352xf32, #tpu.memory_space<vmem>>, vector<8x352xf32>
    %207 = arith.addf %205, %206 : vector<8x352xf32>
    %c0_236 = arith.constant 0 : index
    %c0_237 = arith.constant 0 : index
    %c0_238 = arith.constant 0 : index
    %208 = vector.load %arg6[%c0_236, %c0_237, %c0_238] : memref<2x8x352xf32, #tpu.memory_space<vmem>>, vector<1x8x352xf32>
    %209 = vector.shape_cast %208 : vector<1x8x352xf32> to vector<8x352xf32>
    %210 = vector.shape_cast %207 : vector<8x352xf32> to vector<1x8x352xf32>
    tpu.vector_store %arg6[%c0_236, %c0_237, %c0_238], %210 {strides = array<i32>} : memref<2x8x352xf32, #tpu.memory_space<vmem>>, vector<1x8x352xf32>,
    %c0_239 = arith.constant 0 : index
    %c484_240 = arith.constant 484 : index
    %211 = vector.load %arg9[%c0_239, %c484_240] : memref<16x968xf32, #tpu.memory_space<vmem>>, vector<8x352xf32>
    %c0_241 = arith.constant 0 : index
    %c0_242 = arith.constant 0 : index
    %212 = vector.load %arg10[%c0_241, %c0_242] : memref<112x352xf32, #tpu.memory_space<vmem>>, vector<8x352xf32>
    tpu.vector_store %arg10[%c0_241, %c0_242], %211 {strides = array<i32>} : memref<112x352xf32, #tpu.memory_space<vmem>>, vector<8x352xf32>,
    %c0_243 = arith.constant 0 : index
    %c485 = arith.constant 485 : index
    %213 = vector.load %arg9[%c0_243, %c485] : memref<16x968xf32, #tpu.memory_space<vmem>>, vector<8x352xf32>
    %c8_244 = arith.constant 8 : index
    %c0_245 = arith.constant 0 : index
    %214 = vector.load %arg10[%c8_244, %c0_245] : memref<112x352xf32, #tpu.memory_space<vmem>>, vector<8x352xf32>
    tpu.vector_store %arg10[%c8_244, %c0_245], %213 {strides = array<i32>} : memref<112x352xf32, #tpu.memory_space<vmem>>, vector<8x352xf32>,
    %c0_246 = arith.constant 0 : index
    %c486 = arith.constant 486 : index
    %215 = vector.load %arg9[%c0_246, %c486] : memref<16x968xf32, #tpu.memory_space<vmem>>, vector<8x352xf32>
    %c16_247 = arith.constant 16 : index
    %c0_248 = arith.constant 0 : index
    %216 = vector.load %arg10[%c16_247, %c0_248] : memref<112x352xf32, #tpu.memory_space<vmem>>, vector<8x352xf32>
    tpu.vector_store %arg10[%c16_247, %c0_248], %215 {strides = array<i32>} : memref<112x352xf32, #tpu.memory_space<vmem>>, vector<8x352xf32>,
    %c0_249 = arith.constant 0 : index
    %c487 = arith.constant 487 : index
    %217 = vector.load %arg9[%c0_249, %c487] : memref<16x968xf32, #tpu.memory_space<vmem>>, vector<8x352xf32>
    %c24_250 = arith.constant 24 : index
    %c0_251 = arith.constant 0 : index
    %218 = vector.load %arg10[%c24_250, %c0_251] : memref<112x352xf32, #tpu.memory_space<vmem>>, vector<8x352xf32>
    tpu.vector_store %arg10[%c24_250, %c0_251], %217 {strides = array<i32>} : memref<112x352xf32, #tpu.memory_space<vmem>>, vector<8x352xf32>,
    %c0_252 = arith.constant 0 : index
    %c488 = arith.constant 488 : index
    %219 = vector.load %arg9[%c0_252, %c488] : memref<16x968xf32, #tpu.memory_space<vmem>>, vector<8x352xf32>
    %c32_253 = arith.constant 32 : index
    %c0_254 = arith.constant 0 : index
    %220 = vector.load %arg10[%c32_253, %c0_254] : memref<112x352xf32, #tpu.memory_space<vmem>>, vector<8x352xf32>
    tpu.vector_store %arg10[%c32_253, %c0_254], %219 {strides = array<i32>} : memref<112x352xf32, #tpu.memory_space<vmem>>, vector<8x352xf32>,
    %c0_255 = arith.constant 0 : index
    %c489 = arith.constant 489 : index
    %221 = vector.load %arg9[%c0_255, %c489] : memref<16x968xf32, #tpu.memory_space<vmem>>, vector<8x352xf32>
    %c40_256 = arith.constant 40 : index
    %c0_257 = arith.constant 0 : index
    %222 = vector.load %arg10[%c40_256, %c0_257] : memref<112x352xf32, #tpu.memory_space<vmem>>, vector<8x352xf32>
    tpu.vector_store %arg10[%c40_256, %c0_257], %221 {strides = array<i32>} : memref<112x352xf32, #tpu.memory_space<vmem>>, vector<8x352xf32>,
    %c0_258 = arith.constant 0 : index
    %c490 = arith.constant 490 : index
    %223 = vector.load %arg9[%c0_258, %c490] : memref<16x968xf32, #tpu.memory_space<vmem>>, vector<8x352xf32>
    %c48_259 = arith.constant 48 : index
    %c0_260 = arith.constant 0 : index
    %224 = vector.load %arg10[%c48_259, %c0_260] : memref<112x352xf32, #tpu.memory_space<vmem>>, vector<8x352xf32>
    tpu.vector_store %arg10[%c48_259, %c0_260], %223 {strides = array<i32>} : memref<112x352xf32, #tpu.memory_space<vmem>>, vector<8x352xf32>,
    %c8_261 = arith.constant 8 : index
    %c484_262 = arith.constant 484 : index
    %225 = vector.load %arg9[%c8_261, %c484_262] : memref<16x968xf32, #tpu.memory_space<vmem>>, vector<8x352xf32>
    %c56_263 = arith.constant 56 : index
    %c0_264 = arith.constant 0 : index
    %226 = vector.load %arg10[%c56_263, %c0_264] : memref<112x352xf32, #tpu.memory_space<vmem>>, vector<8x352xf32>
    tpu.vector_store %arg10[%c56_263, %c0_264], %225 {strides = array<i32>} : memref<112x352xf32, #tpu.memory_space<vmem>>, vector<8x352xf32>,
    %c8_265 = arith.constant 8 : index
    %c506 = arith.constant 506 : index
    %227 = vector.load %arg9[%c8_265, %c506] : memref<16x968xf32, #tpu.memory_space<vmem>>, vector<8x352xf32>
    %c64_266 = arith.constant 64 : index
    %c0_267 = arith.constant 0 : index
    %228 = vector.load %arg10[%c64_266, %c0_267] : memref<112x352xf32, #tpu.memory_space<vmem>>, vector<8x352xf32>
    tpu.vector_store %arg10[%c64_266, %c0_267], %227 {strides = array<i32>} : memref<112x352xf32, #tpu.memory_space<vmem>>, vector<8x352xf32>,
    %c8_268 = arith.constant 8 : index
    %c528 = arith.constant 528 : index
    %229 = vector.load %arg9[%c8_268, %c528] : memref<16x968xf32, #tpu.memory_space<vmem>>, vector<8x352xf32>
    %c72_269 = arith.constant 72 : index
    %c0_270 = arith.constant 0 : index
    %230 = vector.load %arg10[%c72_269, %c0_270] : memref<112x352xf32, #tpu.memory_space<vmem>>, vector<8x352xf32>
    tpu.vector_store %arg10[%c72_269, %c0_270], %229 {strides = array<i32>} : memref<112x352xf32, #tpu.memory_space<vmem>>, vector<8x352xf32>,
    %c8_271 = arith.constant 8 : index
    %c550 = arith.constant 550 : index
    %231 = vector.load %arg9[%c8_271, %c550] : memref<16x968xf32, #tpu.memory_space<vmem>>, vector<8x352xf32>
    %c80_272 = arith.constant 80 : index
    %c0_273 = arith.constant 0 : index
    %232 = vector.load %arg10[%c80_272, %c0_273] : memref<112x352xf32, #tpu.memory_space<vmem>>, vector<8x352xf32>
    tpu.vector_store %arg10[%c80_272, %c0_273], %231 {strides = array<i32>} : memref<112x352xf32, #tpu.memory_space<vmem>>, vector<8x352xf32>,
    %c8_274 = arith.constant 8 : index
    %c572 = arith.constant 572 : index
    %233 = vector.load %arg9[%c8_274, %c572] : memref<16x968xf32, #tpu.memory_space<vmem>>, vector<8x352xf32>
    %c88_275 = arith.constant 88 : index
    %c0_276 = arith.constant 0 : index
    %234 = vector.load %arg10[%c88_275, %c0_276] : memref<112x352xf32, #tpu.memory_space<vmem>>, vector<8x352xf32>
    tpu.vector_store %arg10[%c88_275, %c0_276], %233 {strides = array<i32>} : memref<112x352xf32, #tpu.memory_space<vmem>>, vector<8x352xf32>,
    %c8_277 = arith.constant 8 : index
    %c594 = arith.constant 594 : index
    %235 = vector.load %arg9[%c8_277, %c594] : memref<16x968xf32, #tpu.memory_space<vmem>>, vector<8x352xf32>
    %c96_278 = arith.constant 96 : index
    %c0_279 = arith.constant 0 : index
    %236 = vector.load %arg10[%c96_278, %c0_279] : memref<112x352xf32, #tpu.memory_space<vmem>>, vector<8x352xf32>
    tpu.vector_store %arg10[%c96_278, %c0_279], %235 {strides = array<i32>} : memref<112x352xf32, #tpu.memory_space<vmem>>, vector<8x352xf32>,
    %c8_280 = arith.constant 8 : index
    %c616 = arith.constant 616 : index
    %237 = vector.load %arg9[%c8_280, %c616] : memref<16x968xf32, #tpu.memory_space<vmem>>, vector<8x352xf32>
    %c104_281 = arith.constant 104 : index
    %c0_282 = arith.constant 0 : index
    %238 = vector.load %arg10[%c104_281, %c0_282] : memref<112x352xf32, #tpu.memory_space<vmem>>, vector<8x352xf32>
    tpu.vector_store %arg10[%c104_281, %c0_282], %237 {strides = array<i32>} : memref<112x352xf32, #tpu.memory_space<vmem>>, vector<8x352xf32>,
    %c0_283 = arith.constant 0 : index
    %c0_284 = arith.constant 0 : index
    %239 = vector.load %arg4[%c0_283, %c0_284] : memref<8x112xf32, #tpu.memory_space<vmem>>, vector<8x112xf32>
    %c0_285 = arith.constant 0 : index
    %c0_286 = arith.constant 0 : index
    %240 = vector.load %arg10[%c0_285, %c0_286] : memref<112x352xf32, #tpu.memory_space<vmem>>, vector<112x352xf32>
    %cst_287 = arith.constant dense<0.000000e+00> : vector<8x352xf32>
    %241 = tpu.matmul %239, %240, %cst_287 {dimension_numbers = #tpu.dot_dimension_numbers<[1], [0], [0], [1], [0, 0, 1, 1], [], []>} : vector<8x112xf32>, vector<112x352xf32>, vector<8x352xf32> -> vector<8x352xf32>
    %c0_288 = arith.constant 0 : index
    %c0_289 = arith.constant 0 : index
    %242 = vector.load %arg5[%c0_288, %c0_289] : memref<8x352xf32, #tpu.memory_space<vmem>>, vector<8x352xf32>
    %243 = arith.addf %241, %242 : vector<8x352xf32>
    %c1_290 = arith.constant 1 : index
    %c0_291 = arith.constant 0 : index
    %c0_292 = arith.constant 0 : index
    %244 = vector.load %arg6[%c1_290, %c0_291, %c0_292] : memref<2x8x352xf32, #tpu.memory_space<vmem>>, vector<1x8x352xf32>
    %245 = vector.shape_cast %244 : vector<1x8x352xf32> to vector<8x352xf32>
    %246 = vector.shape_cast %243 : vector<8x352xf32> to vector<1x8x352xf32>
    tpu.vector_store %arg6[%c1_290, %c0_291, %c0_292], %246 {strides = array<i32>} : memref<2x8x352xf32, #tpu.memory_space<vmem>>, vector<1x8x352xf32>,
    return
  }
  func.func @transform_0(%arg0: i32) -> (i32, i32, i32) {
    %c0_i32 = arith.constant 0 : i32
    %c0_i32_0 = arith.constant 0 : i32
    %c0_i32_1 = arith.constant 0 : i32
    return %arg0, %c0_i32, %c0_i32_0 : i32, i32, i32
  }
  func.func @transform_1(%arg0: i32) -> (i32, i32) {
    %c0_i32 = arith.constant 0 : i32
    %c0_i32_0 = arith.constant 0 : i32
    %c0_i32_1 = arith.constant 0 : i32
    return %c0_i32, %c0_i32_0 : i32, i32
  }
  func.func @transform_2(%arg0: i32) -> (i32, i32) {
    %c0_i32 = arith.constant 0 : i32
    %c0_i32_0 = arith.constant 0 : i32
    %c0_i32_1 = arith.constant 0 : i32
    return %c0_i32, %c0_i32_0 : i32, i32
  }
  func.func @transform_3(%arg0: i32) -> (i32, i32) {
    %c0_i32 = arith.constant 0 : i32
    %c0_i32_0 = arith.constant 0 : i32
    %c0_i32_1 = arith.constant 0 : i32
    return %c0_i32, %c0_i32_0 : i32, i32
  }
  func.func @transform_4(%arg0: i32) -> (i32, i32) {
    %c0_i32 = arith.constant 0 : i32
    %c0_i32_0 = arith.constant 0 : i32
    %c0_i32_1 = arith.constant 0 : i32
    return %c0_i32, %c0_i32_0 : i32, i32
  }
  func.func @transform_5(%arg0: i32) -> (i32, i32, i32) {
    %c0_i32 = arith.constant 0 : i32
    %c0_i32_0 = arith.constant 0 : i32
    %c0_i32_1 = arith.constant 0 : i32
    return %arg0, %c0_i32, %c0_i32_0 : i32, i32, i32
  }
}

</mosaic_0001>

<llo_original>
// kernel: global_conv_module.1
$region0: #{global_conv_module.1}
  #allocation0 [shape = 'u32[]', space=smem, size = 0x4, offset = 0x4, fixed_abs, tag = 'smem constant byte address 0x4 - core index']
  #allocation1 [shape = 'u32[72,128]{1,0:T(1,128)}', space=vmem, size = 0x9000, scoped, tag = 'internal scratch']
  #allocation2 [shape = 'f32[8,1100]{1,0:T(8,128)}', space=vmem, size = 0x9000, scoped, tag = 'scratch operand']
  #allocation3 [shape = 'f32[112,968]{1,0:T(8,128)}', space=vmem, size = 0x70000, scoped, tag = 'scratch operand']
  #allocation4 [shape = 'f32[16,968]{1,0:T(8,128)}', space=vmem, size = 0x10000, scoped, tag = 'scratch operand']
  #allocation5 [shape = 'f32[112,352]{1,0:T(8,128)}', space=vmem, size = 0x2a000, scoped, tag = 'scratch operand']
  %s0 = inlined_call_operand.vmem [shape: f32[4,4,256], index: 0, kind: input, shape index: {}]
  %s1 = inlined_call_operand.vmem [shape: f32[16,112], index: 1, kind: input, shape index: {}]
  %s2 = inlined_call_operand.vmem [shape: f32[16,968], index: 2, kind: input, shape index: {}]
  %s3 = inlined_call_operand.vmem [shape: f32[8,112], index: 3, kind: input, shape index: {}]
  %s4 = inlined_call_operand.vmem [shape: f32[8,352], index: 4, kind: input, shape index: {}]
  %s5 = inlined_call_operand.vmem [shape: f32[4,8,352], index: 5, kind: output, shape index: {}]
  %s6 = sld [smem:[#allocation0]]
  $region53: #{global_conv_module.1} parent=0
    _
  %s8 = ssub.s32 1, %s6
  %s9 = scalar_select 0, %s8, %s6
  loop: start=0, step=1, limit=4
  $region2: #{global_conv_module.1} parent=0 // loop_pre_header
    _
  $region3: #{global_conv_module.1} parent=0 // loop_header
    %s11 = sphi 0, %s15
    %p12 = scmp.ge.s32.totalorder %s11, 4
    %s21 = sphi 0, %s23
    %s24 = sphi 0, %s21
    %s25 = sphi 0, %s24
    %s41 = sphi 0, %s25
    %s45 = sphi 0, %s45
    %s47 = sphi 0, %s45
    %s48 = sphi 0, %s47
    %s62 = sphi 0, %s48
    %s66 = sphi 0, %s66
    %s68 = sphi 0, %s66
    %s69 = sphi 0, %s68
    %s83 = sphi 0, %s69
    %s87 = sphi 0, %s87
    %s89 = sphi 0, %s87
    %s90 = sphi 0, %s89
    %s104 = sphi 0, %s90
    %s108 = sphi 0, %s108
    %s110 = sphi 0, %s108
    %s111 = sphi 0, %s110
    %s125 = sphi 0, %s111
    %s131 = sphi 0, %s133
    %s134 = sphi 0, %s131
    %s135 = sphi 0, %s134
    %s151 = sphi 0, %s135
  $region4: #{global_conv_module.1} parent=0 // loop_header_branch
    %14 = sbr.rel (%p12) target = $region8
  $region5: #{global_conv_module.1} parent=0 // loop_body
    %s16 = ssub.s32 %s11, 1
    %s17 = ssub.s32 %s11, 2
    %s18 = sadd.s32 %s11, 1
    %s19 = ssub.s32 %s11, %s18
    %p20 = scmp.eq.s32.totalorder %s19, 0
    %s22 = sadd.s32 %s21, 1
    %s23 = scalar_select %p20, %s21, %s22
    %p26 = pneg %p20
    %p27 = scmp.eq.s32.totalorder %s11, 1
    %p28 = por %p26, %p27
    %p29 = scmp.ne.s32.totalorder %s21, %s24
    %p30 = scmp.eq.s32.totalorder %s11, 0
    %p31 = por %p29, %p30
    %p32 = scmp.ne.s32.totalorder %s21, %s24
    %p33 = scmp.eq.s32.totalorder %s16, 1
    %p34 = por %p32, %p33
    %p35 = scmp.ne.s32.totalorder %s24, %s25
    %p36 = scmp.eq.s32.totalorder %s16, 0
    %p37 = por %p35, %p36
    %p38 = scmp.ne.s32.totalorder %s24, %s25
    %p39 = scmp.eq.s32.totalorder %s17, 1
    %p40 = por %p38, %p39
    %p42 = scmp.ne.s32.totalorder %s25, %s41
    %p43 = scmp.eq.s32.totalorder %s17, 0
    %p44 = por %p42, %p43
    %s46 = sadd.s32 %s45, 1
    %p49 = scmp.eq.s32.totalorder %s11, 1
    %p50 = scmp.ne.s32.totalorder %s45, %s47
    %p51 = scmp.eq.s32.totalorder %s11, 0
    %p52 = por %p50, %p51
    %p53 = scmp.ne.s32.totalorder %s45, %s47
    %p54 = scmp.eq.s32.totalorder %s16, 1
    %p55 = por %p53, %p54
    %p56 = scmp.ne.s32.totalorder %s47, %s48
    %p57 = scmp.eq.s32.totalorder %s16, 0
    %p58 = por %p56, %p57
    %p59 = scmp.ne.s32.totalorder %s47, %s48
    %p60 = scmp.eq.s32.totalorder %s17, 1
    %p61 = por %p59, %p60
    %p63 = scmp.ne.s32.totalorder %s48, %s62
    %p64 = scmp.eq.s32.totalorder %s17, 0
    %p65 = por %p63, %p64
    %s67 = sadd.s32 %s66, 1
    %p70 = scmp.eq.s32.totalorder %s11, 1
    %p71 = scmp.ne.s32.totalorder %s66, %s68
    %p72 = scmp.eq.s32.totalorder %s11, 0
    %p73 = por %p71, %p72
    %p74 = scmp.ne.s32.totalorder %s66, %s68
    %p75 = scmp.eq.s32.totalorder %s16, 1
    %p76 = por %p74, %p75
    %p77 = scmp.ne.s32.totalorder %s68, %s69
    %p78 = scmp.eq.s32.totalorder %s16, 0
    %p79 = por %p77, %p78
    %p80 = scmp.ne.s32.totalorder %s68, %s69
    %p81 = scmp.eq.s32.totalorder %s17, 1
    %p82 = por %p80, %p81
    %p84 = scmp.ne.s32.totalorder %s69, %s83
    %p85 = scmp.eq.s32.totalorder %s17, 0
    %p86 = por %p84, %p85
    %s88 = sadd.s32 %s87, 1
    %p91 = scmp.eq.s32.totalorder %s11, 1
    %p92 = scmp.ne.s32.totalorder %s87, %s89
    %p93 = scmp.eq.s32.totalorder %s11, 0
    %p94 = por %p92, %p93
    %p95 = scmp.ne.s32.totalorder %s87, %s89
    %p96 = scmp.eq.s32.totalorder %s16, 1
    %p97 = por %p95, %p96
    %p98 = scmp.ne.s32.totalorder %s89, %s90
    %p99 = scmp.eq.s32.totalorder %s16, 0
    %p100 = por %p98, %p99
    %p101 = scmp.ne.s32.totalorder %s89, %s90
    %p102 = scmp.eq.s32.totalorder %s17, 1
    %p103 = por %p101, %p102
    %p105 = scmp.ne.s32.totalorder %s90, %s104
    %p106 = scmp.eq.s32.totalorder %s17, 0
    %p107 = por %p105, %p106
    %s109 = sadd.s32 %s108, 1
    %p112 = scmp.eq.s32.totalorder %s11, 1
    %p113 = scmp.ne.s32.totalorder %s108, %s110
    %p114 = scmp.eq.s32.totalorder %s11, 0
    %p115 = por %p113, %p114
    %p116 = scmp.ne.s32.totalorder %s108, %s110
    %p117 = scmp.eq.s32.totalorder %s16, 1
    %p118 = por %p116, %p117
    %p119 = scmp.ne.s32.totalorder %s110, %s111
    %p120 = scmp.eq.s32.totalorder %s16, 0
    %p121 = por %p119, %p120
    %p122 = scmp.ne.s32.totalorder %s110, %s111
    %p123 = scmp.eq.s32.totalorder %s17, 1
    %p124 = por %p122, %p123
    %p126 = scmp.ne.s32.totalorder %s111, %s125
    %p127 = scmp.eq.s32.totalorder %s17, 0
    %p128 = por %p126, %p127
    %s129 = ssub.s32 %s11, %s18
    %p130 = scmp.eq.s32.totalorder %s129, 0
    %s132 = sadd.s32 %s131, 1
    %s133 = scalar_select %p130, %s131, %s132
    %p136 = pneg %p130
    %p137 = scmp.eq.s32.totalorder %s11, 1
    %p138 = por %p136, %p137
    %p139 = scmp.ne.s32.totalorder %s131, %s134
    %p140 = scmp.eq.s32.totalorder %s11, 0
    %p141 = por %p139, %p140
    %p142 = scmp.ne.s32.totalorder %s131, %s134
    %p143 = scmp.eq.s32.totalorder %s16, 1
    %p144 = por %p142, %p143
    %p145 = scmp.ne.s32.totalorder %s134, %s135
    %p146 = scmp.eq.s32.totalorder %s16, 0
    %p147 = por %p145, %p146
    %p148 = scmp.ne.s32.totalorder %s134, %s135
    %p149 = scmp.eq.s32.totalorder %s17, 1
    %p150 = por %p148, %p149
    %p152 = scmp.ne.s32.totalorder %s135, %s151
    %p153 = scmp.eq.s32.totalorder %s17, 0
    %p154 = por %p152, %p153
    %p155 = scmp.le.s32.totalorder 1, %s11
    %p156 = scmp.lt.s32.totalorder %s11, 3
    %p157 = pnand %p155, %p156
    %p158 = pneg %p157
    // Predicated region
    $region9: #{global_conv_module.1} parent=5 // pred_check
      _
    $region10: #{global_conv_module.1} parent=5 // pred_check_branch
      %160 = sbr.rel (%p157) target = $region12
    $region11: #{global_conv_module.1} parent=5 // pred_region
      %s161 = ssub.s32 %s11, 1
      // Predicated region
      $region13: #{global_conv_module.1} parent=11 // pred_check
        %p162 = pneg %p58
      $region14: #{global_conv_module.1} parent=11 // pred_check_branch
        %164 = sbr.rel (%p162) target = $region16
      $region15: #{global_conv_module.1} parent=11 // pred_region
        _
      $region16: #{global_conv_module.1} parent=11 // pred_fallthru
        _
      // Predicated region
      $region17: #{global_conv_module.1} parent=11 // pred_check
        %p165 = pneg %p79
      $region18: #{global_conv_module.1} parent=11 // pred_check_branch
        %167 = sbr.rel (%p165) target = $region20
      $region19: #{global_conv_module.1} parent=11 // pred_region
        _
      $region20: #{global_conv_module.1} parent=11 // pred_fallthru
        _
      // Predicated region
      $region21: #{global_conv_module.1} parent=11 // pred_check
        %p168 = pneg %p100
      $region22: #{global_conv_module.1} parent=11 // pred_check_branch
        %170 = sbr.rel (%p168) target = $region24
      $region23: #{global_conv_module.1} parent=11 // pred_region
        _
      $region24: #{global_conv_module.1} parent=11 // pred_fallthru
        _
      // Predicated region
      $region25: #{global_conv_module.1} parent=11 // pred_check
        %p171 = pneg %p121
      $region26: #{global_conv_module.1} parent=11 // pred_check_branch
        %173 = sbr.rel (%p171) target = $region28
      $region27: #{global_conv_module.1} parent=11 // pred_region
        _
      $region28: #{global_conv_module.1} parent=11 // pred_fallthru
        _
    $region12: #{global_conv_module.1} parent=5 // pred_fallthru
      _
    %p174 = scmp.lt.s32.totalorder %s11, 2
    // Predicated region
    $region29: #{global_conv_module.1} parent=5 // pred_check
      %p175 = pneg %p174
    $region30: #{global_conv_module.1} parent=5 // pred_check_branch
      %177 = sbr.rel (%p175) target = $region32
    $region31: #{global_conv_module.1} parent=5 // pred_region
      // Predicated region
      $region33: #{global_conv_module.1} parent=31 // pred_check
        %p178 = pneg %p31
      $region34: #{global_conv_module.1} parent=31 // pred_check_branch
        %180 = sbr.rel (%p178) target = $region36
      $region35: #{global_conv_module.1} parent=31 // pred_region
        %s181 = smul.u32 2, %s11
        %p182 = scmp.lt.s32.totalorder %s181, 3
        %s183 = scalar_select %p182, %s181, 3
        %s184 = smul.addr %s183, 2
        %s185 = smul.addr %s184, 4
        %s186 = scalar_lea.vmem %s0, %s185
        %s187 = smul.u32 2, %s11
      $region36: #{global_conv_module.1} parent=31 // pred_fallthru
        _
    $region32: #{global_conv_module.1} parent=5 // pred_fallthru
      _
    %p188 = scmp.le.s32.totalorder 1, %s11
    %p189 = scmp.lt.s32.totalorder %s11, 3
    %p190 = pnand %p188, %p189
    %p191 = pneg %p190
    // Predicated region
    $region37: #{global_conv_module.1} parent=5 // pred_check
      _
    $region38: #{global_conv_module.1} parent=5 // pred_check_branch
      %193 = sbr.rel (%p190) target = $region40
    $region39: #{global_conv_module.1} parent=5 // pred_region
      %s194 = ssub.s32 %s11, 1
      %s195 = smul.u32 2, %s16
      %p196 = scmp.lt.s32.totalorder %s195, 3
      %s197 = scalar_select %p196, %s195, 3
      %s198 = smul.addr %s197, 2
      %s199 = smul.addr %s198, 4
      %s200 = scalar_lea.vmem %s0, %s199
      %p201 = pneg %p37
      %p202 = pneg %p34
      %p203 = pneg %p58
      %p204 = pneg %p55
      %p205 = pneg %p79
      %p206 = pneg %p76
      %p207 = pneg %p100
      %p208 = pneg %p97
      %p209 = pneg %p121
      %p210 = pneg %p118
      %p211 = pneg %p147
      %p212 = pneg %p144
      %s213 = smul.u32 2, %s16
      %p214 = scmp.lt.s32.totalorder %s213, 3
      %s215 = scalar_select %p214, %s213, 3
      %s216 = smul.addr %s215, 3
      %s217 = smul.addr %s216, 8
      %s218 = scalar_lea.vmem %s5, %s217
      %s219 = smul.u32 2, %s16
      %p220 = scmp.lt.s32.totalorder %s219, 3
      %s221 = scalar_select %p220, %s219, 3
      %s222 = smul.addr %s221, 2
      %s223 = smul.addr %s222, 4
      %s224 = scalar_lea.vmem %s0, %s223
      %s225 = smul.u32 2, %s16
      %s226 = smul.u32 2, %s16
      %p227 = scmp.lt.s32.totalorder %s226, 3
      %s228 = scalar_select %p227, %s226, 3
      %s229 = smul.addr %s228, 3
      %s230 = smul.addr %s229, 8
      %s231 = scalar_lea.vmem %s5, %s230
      %s232 = smul.u32 2, %s16
      %233 = vst [vmem:[#allocation2] sm:$0xf0] 0.0
      %234 = vst [vmem:[#allocation2 + $0x8] sm:$0xf0] 0.0
      %235 = vst [vmem:[#allocation2 + $0x10] sm:$0xf0] 0.0
      %236 = vst [vmem:[#allocation2 + $0x18] sm:$0xf0] 0.0
      %237 = vst [vmem:[#allocation2 + $0x20] sm:$0xf0] 0.0
      %238 = vst [vmem:[#allocation2 + $0x28] sm:$0xf0] 0.0
      %239 = vst [vmem:[#allocation2 + $0x30] sm:$0xf0] 0.0
      %240 = vst [vmem:[#allocation2 + $0x38] sm:$0xf0] 0.0
      %vm241 = vcmask 621572
      %242 = vst.msk [vmem:[#allocation2 + $0x40] sm:$0xf0] %vm241, 0.0
      %vm243 = vcmask 1044032
      %244 = vst.msk [vmem:[#allocation2 + $0x38] sm:$0xf] %vm243, 0.0
      %vm245 = vcmask 617472
      %246 = vst.msk [vmem:[#allocation2 + $0x40] sm:$0xf] %vm245, 0.0
      %vm247 = vcmask 560128
      %248 = vst.msk [vmem:[#allocation2] sm:$0xf] %vm247, 0.0
      %vm249 = vcmask 814328
      %250 = vst.msk [vmem:[#allocation2 + $0x18] sm:$0xf] %vm249, 0.0
      %vm251 = vcmask 1044256
      %252 = vst.msk [vmem:[#allocation2 + $0x18] sm:$0xf] %vm251, 0.0
      %vm253 = vcmask 330752
      %254 = vst.msk [vmem:[#allocation2 + $0x20] sm:$0xf] %vm253, 0.0
      %vm255 = vcmask 584728
      %256 = vst.msk [vmem:[#allocation2 + $0x38] sm:$0xf] %vm255, 0.0
      %v257 = vld [vmem:[%s224] sm:$0xf]
      %vm258 = vcmask 130048
      %v259 = vsel %vm258, %v257, 0.0
      %261 = vrot.lane.b32.xlu0 %v259, 69
      %v262 = vpop.permute.xlu0 %261
      %vm264 = vcmask 740904
      %265 = vst.msk [vmem:[#allocation2] sm:$0xf] %vm264, %v262
      %v266 = vld [vmem:[%s224] sm:$0xf]
      %268 = vst [vmem:[#allocation1] ss:$2 sm:$0xff] %v266
      %v269 = vld.sshfl [vmem:[#allocation1] sm:$0xff pattern:$0x75316420]
      %270 = vrot.lane.b32.xlu0 %v269, 112
      %v271 = vpop.permute.xlu0 %270
      %v273 = vsel %vm258, %v271, 0.0
      %275 = vrot.lane.b32.xlu0 %v273, 91
      %v276 = vpop.permute.xlu0 %275
      %vm278 = vcmask 921304
      %279 = vst.msk [vmem:[#allocation2] sm:$0xf] %vm278, %v276
      %v280 = vld [vmem:[%s224] sm:$0xf]
      %282 = vst [vmem:[#allocation1] ss:$2 sm:$0xff] %v280
      %v283 = vld.sshfl [vmem:[#allocation1] sm:$0xff pattern:$0x75316420]
      %284 = vrot.lane.b32.xlu0 %v283, 96
      %v285 = vpop.permute.xlu0 %284
      %v287 = vsel %vm258, %v285, 0.0
      %289 = vrot.lane.b32.xlu0 %v287, 113
      %v290 = vpop.permute.xlu0 %289
      %vm292 = vcmask 1044360
      %293 = vst.msk [vmem:[#allocation2] sm:$0xf] %vm292, %v290
      %vm294 = vcmask 52224
      %295 = vst.msk [vmem:[#allocation2 + $0x8] sm:$0xf] %vm294, %v290
      %v296 = vld [vmem:[%s224] sm:$0xf]
      %298 = vst [vmem:[#allocation1] ss:$2 sm:$0xff] %v296
      %v299 = vld.sshfl [vmem:[#allocation1] sm:$0xff pattern:$0x75316420]
      %300 = vrot.lane.b32.xlu0 %v299, 80
      %v301 = vpop.permute.xlu0 %300
      %v303 = vsel %vm258, %v301, 0.0
      %305 = vrot.lane.b32.xlu0 %v303, 7
      %v306 = vpop.permute.xlu0 %305
      %vm308 = vcmask 232504
      %309 = vst.msk [vmem:[#allocation2 + $0x8] sm:$0xf] %vm308, %v306
      %v310 = vld [vmem:[%s224] sm:$0xf]
      %312 = vst [vmem:[#allocation1] ss:$2 sm:$0xff] %v310
      %v313 = vld.sshfl [vmem:[#allocation1] sm:$0xff pattern:$0x75316420]
      %314 = vrot.lane.b32.xlu0 %v313, 64
      %v315 = vpop.permute.xlu0 %314
      %v317 = vsel %vm258, %v315, 0.0
      %319 = vrot.lane.b32.xlu0 %v317, 29
      %v320 = vpop.permute.xlu0 %319
      %vm322 = vcmask 412904
      %323 = vst.msk [vmem:[#allocation2 + $0x8] sm:$0xf] %vm322, %v320
      %v324 = vld [vmem:[%s224] sm:$0xf]
      %326 = vst [vmem:[#allocation1] ss:$2 sm:$0xff] %v324
      %v327 = vld.sshfl [vmem:[#allocation1] sm:$0xff pattern:$0x75316420]
      %328 = vrot.lane.b32.xlu0 %v327, 48
      %v329 = vpop.permute.xlu0 %328
      %v331 = vsel %vm258, %v329, 0.0
      %333 = vrot.lane.b32.xlu0 %v331, 51
      %v334 = vpop.permute.xlu0 %333
      %vm336 = vcmask 593304
      %337 = vst.msk [vmem:[#allocation2 + $0x8] sm:$0xf] %vm336, %v334
      %v338 = vld [vmem:[%s224] sm:$0xf]
      %340 = vst [vmem:[#allocation1] ss:$2 sm:$0xff] %v338
      %v341 = vld.sshfl [vmem:[#allocation1] sm:$0xff pattern:$0x75316420]
      %342 = vrot.lane.b32.xlu0 %v341, 32
      %v343 = vpop.permute.xlu0 %342
      %v345 = vsel %vm258, %v343, 0.0
      %347 = vrot.lane.b32.xlu0 %v345, 73
      %v348 = vpop.permute.xlu0 %347
      %vm350 = vcmask 773704
      %351 = vst.msk [vmem:[#allocation2 + $0x8] sm:$0xf] %vm350, %v348
      %v352 = vld [vmem:[%s224] sm:$0xf]
      %354 = vst [vmem:[#allocation1] ss:$2 sm:$0xff] %v352
      %v355 = vld.sshfl [vmem:[#allocation1] sm:$0xff pattern:$0x75316420]
      %356 = vrot.lane.b32.xlu0 %v355, 16
      %v357 = vpop.permute.xlu0 %356
      %v359 = vsel %vm258, %v357, 0.0
      %361 = vrot.lane.b32.xlu0 %v359, 95
      %v362 = vpop.permute.xlu0 %361
      %vm364 = vcmask 954104
      %365 = vst.msk [vmem:[#allocation2 + $0x8] sm:$0xf] %vm364, %v362
      %v366 = vld [vmem:[%s224 + $0x4] sm:$0xf]
      %v367 = vsel %vm258, %v366, 0.0
      %369 = vrot.lane.b32.xlu0 %v367, 117
      %v370 = vpop.permute.xlu0 %369
      %vm372 = vcmask 1044392
      %373 = vst.msk [vmem:[#allocation2 + $0x8] sm:$0xf] %vm372, %v370
      %vm374 = vcmask 84992
      %375 = vst.msk [vmem:[#allocation2 + $0x10] sm:$0xf] %vm374, %v370
      %v376 = vld [vmem:[%s224 + $0x4] sm:$0xf]
      %378 = vst [vmem:[#allocation1] ss:$2 sm:$0xff] %v376
      %v379 = vld.sshfl [vmem:[#allocation1] sm:$0xff pattern:$0x75316420]
      %380 = vrot.lane.b32.xlu0 %v379, 112
      %v381 = vpop.permute.xlu0 %380
      %v383 = vsel %vm258, %v381, 0.0
      %385 = vrot.lane.b32.xlu0 %v383, 11
      %v386 = vpop.permute.xlu0 %385
      %vm388 = vcmask 265304
      %389 = vst.msk [vmem:[#allocation2 + $0x10] sm:$0xf] %vm388, %v386
      %v390 = vld [vmem:[%s224 + $0x4] sm:$0xf]
      %392 = vst [vmem:[#allocation1] ss:$2 sm:$0xff] %v390
      %v393 = vld.sshfl [vmem:[#allocation1] sm:$0xff pattern:$0x75316420]
      %394 = vrot.lane.b32.xlu0 %v393, 96
      %v395 = vpop.permute.xlu0 %394
      %v397 = vsel %vm258, %v395, 0.0
      %399 = vrot.lane.b32.xlu0 %v397, 33
      %v400 = vpop.permute.xlu0 %399
      %vm402 = vcmask 445704
      %403 = vst.msk [vmem:[#allocation2 + $0x10] sm:$0xf] %vm402, %v400
      %v404 = vld [vmem:[%s224 + $0x4] sm:$0xf]
      %406 = vst [vmem:[#allocation1] ss:$2 sm:$0xff] %v404
      %v407 = vld.sshfl [vmem:[#allocation1] sm:$0xff pattern:$0x75316420]
      %408 = vrot.lane.b32.xlu0 %v407, 80
      %v409 = vpop.permute.xlu0 %408
      %v411 = vsel %vm258, %v409, 0.0
      %413 = vrot.lane.b32.xlu0 %v411, 55
      %v414 = vpop.permute.xlu0 %413
      %vm416 = vcmask 626104
      %417 = vst.msk [vmem:[#allocation2 + $0x10] sm:$0xf] %vm416, %v414
      %v418 = vld [vmem:[%s224 + $0x4] sm:$0xf]
      %420 = vst [vmem:[#allocation1] ss:$2 sm:$0xff] %v418
      %v421 = vld.sshfl [vmem:[#allocation1] sm:$0xff pattern:$0x75316420]
      %422 = vrot.lane.b32.xlu0 %v421, 64
      %v423 = vpop.permute.xlu0 %422
      %v425 = vsel %vm258, %v423, 0.0
      %427 = vrot.lane.b32.xlu0 %v425, 77
      %v428 = vpop.permute.xlu0 %427
      %vm430 = vcmask 806504
      %431 = vst.msk [vmem:[#allocation2 + $0x10] sm:$0xf] %vm430, %v428
      %v432 = vld [vmem:[%s224 + $0x4] sm:$0xf]
      %434 = vst [vmem:[#allocation1] ss:$2 sm:$0xff] %v432
      %v435 = vld.sshfl [vmem:[#allocation1] sm:$0xff pattern:$0x75316420]
      %436 = vrot.lane.b32.xlu0 %v435, 48
      %v437 = vpop.permute.xlu0 %436
      %v439 = vsel %vm258, %v437, 0.0
      %441 = vrot.lane.b32.xlu0 %v439, 99
      %v442 = vpop.permute.xlu0 %441
      %vm444 = vcmask 986904
      %445 = vst.msk [vmem:[#allocation2 + $0x10] sm:$0xf] %vm444, %v442
      %v446 = vld [vmem:[%s224 + $0x4] sm:$0xf]
      %448 = vst [vmem:[#allocation1] ss:$2 sm:$0xff] %v446
      %v449 = vld.sshfl [vmem:[#allocation1] sm:$0xff pattern:$0x75316420]
      %450 = vrot.lane.b32.xlu0 %v449, 32
      %v451 = vpop.permute.xlu0 %450
      %v453 = vsel %vm258, %v451, 0.0
      %455 = vrot.lane.b32.xlu0 %v453, 121
      %v456 = vpop.permute.xlu0 %455
      %vm458 = vcmask 1044424
      %459 = vst.msk [vmem:[#allocation2 + $0x10] sm:$0xf] %vm458, %v456
      %vm460 = vcmask 117760
      %461 = vst.msk [vmem:[#allocation2 + $0x18] sm:$0xf] %vm460, %v456
      %v462 = vld [vmem:[%s224 + $0x4] sm:$0xf]
      %464 = vst [vmem:[#allocation1] ss:$2 sm:$0xff] %v462
      %v465 = vld.sshfl [vmem:[#allocation1] sm:$0xff pattern:$0x75316420]
      %466 = vrot.lane.b32.xlu0 %v465, 16
      %v467 = vpop.permute.xlu0 %466
      %v469 = vsel %vm258, %v467, 0.0
      %471 = vrot.lane.b32.xlu0 %v469, 15
      %v472 = vpop.permute.xlu0 %471
      %vm474 = vcmask 298104
      %475 = vst.msk [vmem:[#allocation2 + $0x18] sm:$0xf] %vm474, %v472
      %s476 = scalar_lea.vmem %s224, 8
      %v477 = vld [vmem:[%s476] sm:$0xf]
      %v478 = vsel %vm258, %v477, 0.0
      %480 = vrot.lane.b32.xlu0 %v478, 41
      %v481 = vpop.permute.xlu0 %480
      %vm483 = vcmask 511304
      %484 = vst.msk [vmem:[#allocation2 + $0x20] sm:$0xf] %vm483, %v481
      %v485 = vld [vmem:[%s476] sm:$0xf]
      %487 = vst [vmem:[#allocation1] ss:$2 sm:$0xff] %v485
      %v488 = vld.sshfl [vmem:[#allocation1] sm:$0xff pattern:$0x75316420]
      %489 = vrot.lane.b32.xlu0 %v488, 112
      %v490 = vpop.permute.xlu0 %489
      %v492 = vsel %vm258, %v490, 0.0
      %494 = vrot.lane.b32.xlu0 %v492, 63
      %v495 = vpop.permute.xlu0 %494
      %vm497 = vcmask 691704
      %498 = vst.msk [vmem:[#allocation2 + $0x20] sm:$0xf] %vm497, %v495
      %v499 = vld [vmem:[%s476] sm:$0xf]
      %501 = vst [vmem:[#allocation1] ss:$2 sm:$0xff] %v499
      %v502 = vld.sshfl [vmem:[#allocation1] sm:$0xff pattern:$0x75316420]
      %503 = vrot.lane.b32.xlu0 %v502, 96
      %v504 = vpop.permute.xlu0 %503
      %v506 = vsel %vm258, %v504, 0.0
      %508 = vrot.lane.b32.xlu0 %v506, 85
      %v509 = vpop.permute.xlu0 %508
      %vm511 = vcmask 872104
      %512 = vst.msk [vmem:[#allocation2 + $0x20] sm:$0xf] %vm511, %v509
      %v513 = vld [vmem:[%s476] sm:$0xf]
      %515 = vst [vmem:[#allocation1] ss:$2 sm:$0xff] %v513
      %v516 = vld.sshfl [vmem:[#allocation1] sm:$0xff pattern:$0x75316420]
      %517 = vrot.lane.b32.xlu0 %v516, 80
      %v518 = vpop.permute.xlu0 %517
      %v520 = vsel %vm258, %v518, 0.0
      %522 = vrot.lane.b32.xlu0 %v520, 107
      %v523 = vpop.permute.xlu0 %522
      %vm525 = vcmask 1044312
      %526 = vst.msk [vmem:[#allocation2 + $0x20] sm:$0xf] %vm525, %v523
      %vm527 = vcmask 3072
      %528 = vst.msk [vmem:[#allocation2 + $0x28] sm:$0xf] %vm527, %v523
      %v529 = vld [vmem:[%s476] sm:$0xf]
      %531 = vst [vmem:[#allocation1] ss:$2 sm:$0xff] %v529
      %v532 = vld.sshfl [vmem:[#allocation1] sm:$0xff pattern:$0x75316420]
      %533 = vrot.lane.b32.xlu0 %v532, 64
      %v534 = vpop.permute.xlu0 %533
      %v536 = vsel %vm258, %v534, 0.0
      %538 = vrot.lane.b32.xlu0 %v536, 1
      %v539 = vpop.permute.xlu0 %538
      %vm541 = vcmask 183304
      %542 = vst.msk [vmem:[#allocation2 + $0x28] sm:$0xf] %vm541, %v539
      %v543 = vld [vmem:[%s476] sm:$0xf]
      %545 = vst [vmem:[#allocation1] ss:$2 sm:$0xff] %v543
      %v546 = vld.sshfl [vmem:[#allocation1] sm:$0xff pattern:$0x75316420]
      %547 = vrot.lane.b32.xlu0 %v546, 48
      %v548 = vpop.permute.xlu0 %547
      %v550 = vsel %vm258, %v548, 0.0
      %552 = vrot.lane.b32.xlu0 %v550, 23
      %v553 = vpop.permute.xlu0 %552
      %vm555 = vcmask 363704
      %556 = vst.msk [vmem:[#allocation2 + $0x28] sm:$0xf] %vm555, %v553
      %v557 = vld [vmem:[%s476] sm:$0xf]
      %559 = vst [vmem:[#allocation1] ss:$2 sm:$0xff] %v557
      %v560 = vld.sshfl [vmem:[#allocation1] sm:$0xff pattern:$0x75316420]
      %561 = vrot.lane.b32.xlu0 %v560, 32
      %v562 = vpop.permute.xlu0 %561
      %v564 = vsel %vm258, %v562, 0.0
      %566 = vrot.lane.b32.xlu0 %v564, 45
      %v567 = vpop.permute.xlu0 %566
      %vm569 = vcmask 544104
      %570 = vst.msk [vmem:[#allocation2 + $0x28] sm:$0xf] %vm569, %v567
      %v571 = vld [vmem:[%s476] sm:$0xf]
      %573 = vst [vmem:[#allocation1] ss:$2 sm:$0xff] %v571
      %v574 = vld.sshfl [vmem:[#allocation1] sm:$0xff pattern:$0x75316420]
      %575 = vrot.lane.b32.xlu0 %v574, 16
      %v576 = vpop.permute.xlu0 %575
      %v578 = vsel %vm258, %v576, 0.0
      %580 = vrot.lane.b32.xlu0 %v578, 67
      %v581 = vpop.permute.xlu0 %580
      %vm583 = vcmask 724504
      %584 = vst.msk [vmem:[#allocation2 + $0x28] sm:$0xf] %vm583, %v581
      %v585 = vld [vmem:[%s476 + $0x4] sm:$0xf]
      %v586 = vsel %vm258, %v585, 0.0
      %588 = vrot.lane.b32.xlu0 %v586, 89
      %v589 = vpop.permute.xlu0 %588
      %vm591 = vcmask 904904
      %592 = vst.msk [vmem:[#allocation2 + $0x28] sm:$0xf] %vm591, %v589
      %v593 = vld [vmem:[%s476 + $0x4] sm:$0xf]
      %595 = vst [vmem:[#allocation1] ss:$2 sm:$0xff] %v593
      %v596 = vld.sshfl [vmem:[#allocation1] sm:$0xff pattern:$0x75316420]
      %597 = vrot.lane.b32.xlu0 %v596, 112
      %v598 = vpop.permute.xlu0 %597
      %v600 = vsel %vm258, %v598, 0.0
      %602 = vrot.lane.b32.xlu0 %v600, 111
      %v603 = vpop.permute.xlu0 %602
      %vm605 = vcmask 1044344
      %606 = vst.msk [vmem:[#allocation2 + $0x28] sm:$0xf] %vm605, %v603
      %vm607 = vcmask 35840
      %608 = vst.msk [vmem:[#allocation2 + $0x30] sm:$0xf] %vm607, %v603
      %v609 = vld [vmem:[%s476 + $0x4] sm:$0xf]
      %611 = vst [vmem:[#allocation1] ss:$2 sm:$0xff] %v609
      %v612 = vld.sshfl [vmem:[#allocation1] sm:$0xff pattern:$0x75316420]
      %613 = vrot.lane.b32.xlu0 %v612, 96
      %v614 = vpop.permute.xlu0 %613
      %v616 = vsel %vm258, %v614, 0.0
      %618 = vrot.lane.b32.xlu0 %v616, 5
      %v619 = vpop.permute.xlu0 %618
      %vm621 = vcmask 216104
      %622 = vst.msk [vmem:[#allocation2 + $0x30] sm:$0xf] %vm621, %v619
      %v623 = vld [vmem:[%s476 + $0x4] sm:$0xf]
      %625 = vst [vmem:[#allocation1] ss:$2 sm:$0xff] %v623
      %v626 = vld.sshfl [vmem:[#allocation1] sm:$0xff pattern:$0x75316420]
      %627 = vrot.lane.b32.xlu0 %v626, 80
      %v628 = vpop.permute.xlu0 %627
      %v630 = vsel %vm258, %v628, 0.0
      %632 = vrot.lane.b32.xlu0 %v630, 27
      %v633 = vpop.permute.xlu0 %632
      %vm635 = vcmask 396504
      %636 = vst.msk [vmem:[#allocation2 + $0x30] sm:$0xf] %vm635, %v633
      %v637 = vld [vmem:[%s476 + $0x4] sm:$0xf]
      %639 = vst [vmem:[#allocation1] ss:$2 sm:$0xff] %v637
      %v640 = vld.sshfl [vmem:[#allocation1] sm:$0xff pattern:$0x75316420]
      %641 = vrot.lane.b32.xlu0 %v640, 64
      %v642 = vpop.permute.xlu0 %641
      %v644 = vsel %vm258, %v642, 0.0
      %646 = vrot.lane.b32.xlu0 %v644, 49
      %v647 = vpop.permute.xlu0 %646
      %vm649 = vcmask 576904
      %650 = vst.msk [vmem:[#allocation2 + $0x30] sm:$0xf] %vm649, %v647
      %v651 = vld [vmem:[%s476 + $0x4] sm:$0xf]
      %653 = vst [vmem:[#allocation1] ss:$2 sm:$0xff] %v651
      %v654 = vld.sshfl [vmem:[#allocation1] sm:$0xff pattern:$0x75316420]
      %655 = vrot.lane.b32.xlu0 %v654, 48
      %v656 = vpop.permute.xlu0 %655
      %v658 = vsel %vm258, %v656, 0.0
      %660 = vrot.lane.b32.xlu0 %v658, 71
      %v661 = vpop.permute.xlu0 %660
      %vm663 = vcmask 757304
      %664 = vst.msk [vmem:[#allocation2 + $0x30] sm:$0xf] %vm663, %v661
      %v665 = vld [vmem:[%s476 + $0x4] sm:$0xf]
      %667 = vst [vmem:[#allocation1] ss:$2 sm:$0xff] %v665
      %v668 = vld.sshfl [vmem:[#allocation1] sm:$0xff pattern:$0x75316420]
      %669 = vrot.lane.b32.xlu0 %v668, 32
      %v670 = vpop.permute.xlu0 %669
      %v672 = vsel %vm258, %v670, 0.0
      %674 = vrot.lane.b32.xlu0 %v672, 93
      %v675 = vpop.permute.xlu0 %674
      %vm677 = vcmask 937704
      %678 = vst.msk [vmem:[#allocation2 + $0x30] sm:$0xf] %vm677, %v675
      %v679 = vld [vmem:[%s476 + $0x4] sm:$0xf]
      %681 = vst [vmem:[#allocation1] ss:$2 sm:$0xff] %v679
      %v682 = vld.sshfl [vmem:[#allocation1] sm:$0xff pattern:$0x75316420]
      %683 = vrot.lane.b32.xlu0 %v682, 16
      %v684 = vpop.permute.xlu0 %683
      %v686 = vsel %vm258, %v684, 0.0
      %688 = vrot.lane.b32.xlu0 %v686, 115
      %v689 = vpop.permute.xlu0 %688
      %vm691 = vcmask 1044376
      %692 = vst.msk [vmem:[#allocation2 + $0x30] sm:$0xf] %vm691, %v689
      %vm693 = vcmask 68608
      %694 = vst.msk [vmem:[#allocation2 + $0x38] sm:$0xf] %vm693, %v689
      %v695 = vld [vmem:[#allocation2] sm:$0xff]
      %v696 = vld [vmem:[#allocation2 + $0x8] sm:$0xff]
      %v697 = vld [vmem:[#allocation2 + $0x10] sm:$0xff]
      %v698 = vld [vmem:[#allocation2 + $0x18] sm:$0xff]
      %v699 = vld [vmem:[#allocation2 + $0x20] sm:$0xff]
      %v700 = vld [vmem:[#allocation2 + $0x28] sm:$0xff]
      %v701 = vld [vmem:[#allocation2 + $0x30] sm:$0xff]
      %v702 = vld [vmem:[#allocation2 + $0x38] sm:$0xff]
      %703 = vst [vmem:[#allocation3] sm:$0xff] %v695
      %704 = vst [vmem:[#allocation3 + $0x8] sm:$0xff] %v696
      %705 = vst [vmem:[#allocation3 + $0x10] sm:$0xff] %v697
      %706 = vst [vmem:[#allocation3 + $0x18] sm:$0xff] %v698
      %707 = vst [vmem:[#allocation3 + $0x20] sm:$0xff] %v699
      %708 = vst [vmem:[#allocation3 + $0x28] sm:$0xff] %v700
      %709 = vst [vmem:[#allocation3 + $0x30] sm:$0xff] %v701
      %vm710 = vcmask 588800
      %711 = vst.msk [vmem:[#allocation3 + $0x38] sm:$0xff] %vm710, %v702
      %v712 = vld [vmem:[#allocation2] sm:$0xff]
      %v713 = vld [vmem:[#allocation2 + $0x8] sm:$0xff]
      %v714 = vld [vmem:[#allocation2 + $0x10] sm:$0xff]
      %v715 = vld [vmem:[#allocation2 + $0x18] sm:$0xff]
      %v716 = vld [vmem:[#allocation2 + $0x20] sm:$0xff]
      %v717 = vld [vmem:[#allocation2 + $0x28] sm:$0xff]
      %v718 = vld [vmem:[#allocation2 + $0x30] sm:$0xff]
      %v719 = vld [vmem:[#allocation2 + $0x38] sm:$0xff]
      %728 = vrot.lane.b32.xlu0 %v712, 106
      %v729 = vpop.permute.xlu0 %728
      %730 = vrot.lane.b32.xlu0 %v713, 106
      %v731 = vpop.permute.xlu0 %730
      %732 = vrot.lane.b32.xlu0 %v714, 106
      %v733 = vpop.permute.xlu0 %732
      %734 = vrot.lane.b32.xlu0 %v715, 106
      %v735 = vpop.permute.xlu0 %734
      %736 = vrot.lane.b32.xlu0 %v716, 106
      %v737 = vpop.permute.xlu0 %736
      %738 = vrot.lane.b32.xlu0 %v717, 106
      %v739 = vpop.permute.xlu0 %738
      %740 = vrot.lane.b32.xlu0 %v718, 106
      %v741 = vpop.permute.xlu0 %740
      %742 = vrot.lane.b32.xlu0 %v719, 106
      %v743 = vpop.permute.xlu0 %742
      %vm744 = vcmask 867328
      %v745 = vsel %vm744, %v729, %v731
      %v746 = vsel %vm744, %v731, %v733
      %v747 = vsel %vm744, %v733, %v735
      %v748 = vsel %vm744, %v735, %v737
      %v749 = vsel %vm744, %v737, %v739
      %v750 = vsel %vm744, %v739, %v741
      %v751 = vsel %vm744, %v741, %v743
      %760 = vst [vmem:[#allocation3 + $0x40] sm:$0xff] %v745
      %761 = vst [vmem:[#allocation3 + $0x48] sm:$0xff] %v746
      %762 = vst [vmem:[#allocation3 + $0x50] sm:$0xff] %v747
      %763 = vst [vmem:[#allocation3 + $0x58] sm:$0xff] %v748
      %764 = vst [vmem:[#allocation3 + $0x60] sm:$0xff] %v749
      %765 = vst [vmem:[#allocation3 + $0x68] sm:$0xff] %v750
      %766 = vst [vmem:[#allocation3 + $0x70] sm:$0xff] %v751
      %767 = vst.msk [vmem:[#allocation3 + $0x78] sm:$0xff] %vm710, %v743
      %v768 = vld [vmem:[#allocation2] sm:$0xff]
      %v769 = vld [vmem:[#allocation2 + $0x8] sm:$0xff]
      %v770 = vld [vmem:[#allocation2 + $0x10] sm:$0xff]
      %v771 = vld [vmem:[#allocation2 + $0x18] sm:$0xff]
      %v772 = vld [vmem:[#allocation2 + $0x20] sm:$0xff]
      %v773 = vld [vmem:[#allocation2 + $0x28] sm:$0xff]
      %v774 = vld [vmem:[#allocation2 + $0x30] sm:$0xff]
      %v775 = vld [vmem:[#allocation2 + $0x38] sm:$0xff]
      %784 = vrot.lane.b32.xlu0 %v768, 84
      %v785 = vpop.permute.xlu0 %784
      %786 = vrot.lane.b32.xlu0 %v769, 84
      %v787 = vpop.permute.xlu0 %786
      %788 = vrot.lane.b32.xlu0 %v770, 84
      %v789 = vpop.permute.xlu0 %788
      %790 = vrot.lane.b32.xlu0 %v771, 84
      %v791 = vpop.permute.xlu0 %790
      %792 = vrot.lane.b32.xlu0 %v772, 84
      %v793 = vpop.permute.xlu0 %792
      %794 = vrot.lane.b32.xlu0 %v773, 84
      %v795 = vpop.permute.xlu0 %794
      %796 = vrot.lane.b32.xlu0 %v774, 84
      %v797 = vpop.permute.xlu0 %796
      %798 = vrot.lane.b32.xlu0 %v775, 84
      %v799 = vpop.permute.xlu0 %798
      %vm800 = vcmask 687104
      %v801 = vsel %vm800, %v785, %v787
      %v802 = vsel %vm800, %v787, %v789
      %v803 = vsel %vm800, %v789, %v791
      %v804 = vsel %vm800, %v791, %v793
      %v805 = vsel %vm800, %v793, %v795
      %v806 = vsel %vm800, %v795, %v797
      %v807 = vsel %vm800, %v797, %v799
      %816 = vst [vmem:[#allocation3 + $0x80] sm:$0xff] %v801
      %817 = vst [vmem:[#allocation3 + $0x88] sm:$0xff] %v802
      %818 = vst [vmem:[#allocation3 + $0x90] sm:$0xff] %v803
      %819 = vst [vmem:[#allocation3 + $0x98] sm:$0xff] %v804
      %820 = vst [vmem:[#allocation3 + $0xa0] sm:$0xff] %v805
      %821 = vst [vmem:[#allocation3 + $0xa8] sm:$0xff] %v806
      %822 = vst [vmem:[#allocation3 + $0xb0] sm:$0xff] %v807
      %823 = vst.msk [vmem:[#allocation3 + $0xb8] sm:$0xff] %vm710, %v799
      %v824 = vld [vmem:[#allocation2] sm:$0xff]
      %v825 = vld [vmem:[#allocation2 + $0x8] sm:$0xff]
      %v826 = vld [vmem:[#allocation2 + $0x10] sm:$0xff]
      %v827 = vld [vmem:[#allocation2 + $0x18] sm:$0xff]
      %v828 = vld [vmem:[#allocation2 + $0x20] sm:$0xff]
      %v829 = vld [vmem:[#allocation2 + $0x28] sm:$0xff]
      %v830 = vld [vmem:[#allocation2 + $0x30] sm:$0xff]
      %v831 = vld [vmem:[#allocation2 + $0x38] sm:$0xff]
      %v832 = vld [vmem:[#allocation2 + $0x40] sm:$0xff]
      %842 = vrot.lane.b32.xlu0 %v824, 62
      %v843 = vpop.permute.xlu0 %842
      %844 = vrot.lane.b32.xlu0 %v825, 62
      %v845 = vpop.permute.xlu0 %844
      %846 = vrot.lane.b32.xlu0 %v826, 62
      %v847 = vpop.permute.xlu0 %846
      %848 = vrot.lane.b32.xlu0 %v827, 62
      %v849 = vpop.permute.xlu0 %848
      %850 = vrot.lane.b32.xlu0 %v828, 62
      %v851 = vpop.permute.xlu0 %850
      %852 = vrot.lane.b32.xlu0 %v829, 62
      %v853 = vpop.permute.xlu0 %852
      %854 = vrot.lane.b32.xlu0 %v830, 62
      %v855 = vpop.permute.xlu0 %854
      %856 = vrot.lane.b32.xlu0 %v831, 62
      %v857 = vpop.permute.xlu0 %856
      %858 = vrot.lane.b32.xlu0 %v832, 62
      %v859 = vpop.permute.xlu0 %858
      %vm860 = vcmask 506880
      %v861 = vsel %vm860, %v843, %v845
      %v862 = vsel %vm860, %v845, %v847
      %v863 = vsel %vm860, %v847, %v849
      %v864 = vsel %vm860, %v849, %v851
      %v865 = vsel %vm860, %v851, %v853
      %v866 = vsel %vm860, %v853, %v855
      %v867 = vsel %vm860, %v855, %v857
      %v868 = vsel %vm860, %v857, %v859
      %877 = vst [vmem:[#allocation3 + $0xc0] sm:$0xff] %v861
      %878 = vst [vmem:[#allocation3 + $0xc8] sm:$0xff] %v862
      %879 = vst [vmem:[#allocation3 + $0xd0] sm:$0xff] %v863
      %880 = vst [vmem:[#allocation3 + $0xd8] sm:$0xff] %v864
      %881 = vst [vmem:[#allocation3 + $0xe0] sm:$0xff] %v865
      %882 = vst [vmem:[#allocation3 + $0xe8] sm:$0xff] %v866
      %883 = vst [vmem:[#allocation3 + $0xf0] sm:$0xff] %v867
      %884 = vst.msk [vmem:[#allocation3 + $0xf8] sm:$0xff] %vm710, %v868
      %v885 = vld [vmem:[#allocation2] sm:$0xff]
      %v886 = vld [vmem:[#allocation2 + $0x8] sm:$0xff]
      %v887 = vld [vmem:[#allocation2 + $0x10] sm:$0xff]
      %v888 = vld [vmem:[#allocation2 + $0x18] sm:$0xff]
      %v889 = vld [vmem:[#allocation2 + $0x20] sm:$0xff]
      %v890 = vld [vmem:[#allocation2 + $0x28] sm:$0xff]
      %v891 = vld [vmem:[#allocation2 + $0x30] sm:$0xff]
      %v892 = vld [vmem:[#allocation2 + $0x38] sm:$0xff]
      %v893 = vld [vmem:[#allocation2 + $0x40] sm:$0xff]
      %903 = vrot.lane.b32.xlu0 %v885, 40
      %v904 = vpop.permute.xlu0 %903
      %905 = vrot.lane.b32.xlu0 %v886, 40
      %v906 = vpop.permute.xlu0 %905
      %907 = vrot.lane.b32.xlu0 %v887, 40
      %v908 = vpop.permute.xlu0 %907
      %909 = vrot.lane.b32.xlu0 %v888, 40
      %v910 = vpop.permute.xlu0 %909
      %911 = vrot.lane.b32.xlu0 %v889, 40
      %v912 = vpop.permute.xlu0 %911
      %913 = vrot.lane.b32.xlu0 %v890, 40
      %v914 = vpop.permute.xlu0 %913
      %915 = vrot.lane.b32.xlu0 %v891, 40
      %v916 = vpop.permute.xlu0 %915
      %917 = vrot.lane.b32.xlu0 %v892, 40
      %v918 = vpop.permute.xlu0 %917
      %919 = vrot.lane.b32.xlu0 %v893, 40
      %v920 = vpop.permute.xlu0 %919
      %vm921 = vcmask 326656
      %v922 = vsel %vm921, %v904, %v906
      %v923 = vsel %vm921, %v906, %v908
      %v924 = vsel %vm921, %v908, %v910
      %v925 = vsel %vm921, %v910, %v912
      %v926 = vsel %vm921, %v912, %v914
      %v927 = vsel %vm921, %v914, %v916
      %v928 = vsel %vm921, %v916, %v918
      %v929 = vsel %vm921, %v918, %v920
      %938 = vst [vmem:[#allocation3 + $0x100] sm:$0xff] %v922
      %939 = vst [vmem:[#allocation3 + $0x108] sm:$0xff] %v923
      %940 = vst [vmem:[#allocation3 + $0x110] sm:$0xff] %v924
      %941 = vst [vmem:[#allocation3 + $0x118] sm:$0xff] %v925
      %942 = vst [vmem:[#allocation3 + $0x120] sm:$0xff] %v926
      %943 = vst [vmem:[#allocation3 + $0x128] sm:$0xff] %v927
      %944 = vst [vmem:[#allocation3 + $0x130] sm:$0xff] %v928
      %945 = vst.msk [vmem:[#allocation3 + $0x138] sm:$0xff] %vm710, %v929
      %v946 = vld [vmem:[#allocation2] sm:$0xff]
      %v947 = vld [vmem:[#allocation2 + $0x8] sm:$0xff]
      %v948 = vld [vmem:[#allocation2 + $0x10] sm:$0xff]
      %v949 = vld [vmem:[#allocation2 + $0x18] sm:$0xff]
      %v950 = vld [vmem:[#allocation2 + $0x20] sm:$0xff]
      %v951 = vld [vmem:[#allocation2 + $0x28] sm:$0xff]
      %v952 = vld [vmem:[#allocation2 + $0x30] sm:$0xff]
      %v953 = vld [vmem:[#allocation2 + $0x38] sm:$0xff]
      %v954 = vld [vmem:[#allocation2 + $0x40] sm:$0xff]
      %964 = vrot.lane.b32.xlu0 %v946, 18
      %v965 = vpop.permute.xlu0 %964
      %966 = vrot.lane.b32.xlu0 %v947, 18
      %v967 = vpop.permute.xlu0 %966
      %968 = vrot.lane.b32.xlu0 %v948, 18
      %v969 = vpop.permute.xlu0 %968
      %970 = vrot.lane.b32.xlu0 %v949, 18
      %v971 = vpop.permute.xlu0 %970
      %972 = vrot.lane.b32.xlu0 %v950, 18
      %v973 = vpop.permute.xlu0 %972
      %974 = vrot.lane.b32.xlu0 %v951, 18
      %v975 = vpop.permute.xlu0 %974
      %976 = vrot.lane.b32.xlu0 %v952, 18
      %v977 = vpop.permute.xlu0 %976
      %978 = vrot.lane.b32.xlu0 %v953, 18
      %v979 = vpop.permute.xlu0 %978
      %980 = vrot.lane.b32.xlu0 %v954, 18
      %v981 = vpop.permute.xlu0 %980
      %vm982 = vcmask 146432
      %v983 = vsel %vm982, %v965, %v967
      %v984 = vsel %vm982, %v967, %v969
      %v985 = vsel %vm982, %v969, %v971
      %v986 = vsel %vm982, %v971, %v973
      %v987 = vsel %vm982, %v973, %v975
      %v988 = vsel %vm982, %v975, %v977
      %v989 = vsel %vm982, %v977, %v979
      %v990 = vsel %vm982, %v979, %v981
      %999 = vst [vmem:[#allocation3 + $0x140] sm:$0xff] %v983
      %1000 = vst [vmem:[#allocation3 + $0x148] sm:$0xff] %v984
      %1001 = vst [vmem:[#allocation3 + $0x150] sm:$0xff] %v985
      %1002 = vst [vmem:[#allocation3 + $0x158] sm:$0xff] %v986
      %1003 = vst [vmem:[#allocation3 + $0x160] sm:$0xff] %v987
      %1004 = vst [vmem:[#allocation3 + $0x168] sm:$0xff] %v988
      %1005 = vst [vmem:[#allocation3 + $0x170] sm:$0xff] %v989
      %1006 = vst.msk [vmem:[#allocation3 + $0x178] sm:$0xff] %vm710, %v990
      %v1007 = vld [vmem:[#allocation2 + $0x8] sm:$0xff]
      %v1008 = vld [vmem:[#allocation2 + $0x10] sm:$0xff]
      %v1009 = vld [vmem:[#allocation2 + $0x18] sm:$0xff]
      %v1010 = vld [vmem:[#allocation2 + $0x20] sm:$0xff]
      %v1011 = vld [vmem:[#allocation2 + $0x28] sm:$0xff]
      %v1012 = vld [vmem:[#allocation2 + $0x30] sm:$0xff]
      %v1013 = vld [vmem:[#allocation2 + $0x38] sm:$0xff]
      %v1014 = vld [vmem:[#allocation2 + $0x40] sm:$0xff]
      %1023 = vrot.lane.b32.xlu0 %v1007, 124
      %v1024 = vpop.permute.xlu0 %1023
      %1025 = vrot.lane.b32.xlu0 %v1008, 124
      %v1026 = vpop.permute.xlu0 %1025
      %1027 = vrot.lane.b32.xlu0 %v1009, 124
      %v1028 = vpop.permute.xlu0 %1027
      %1029 = vrot.lane.b32.xlu0 %v1010, 124
      %v1030 = vpop.permute.xlu0 %1029
      %1031 = vrot.lane.b32.xlu0 %v1011, 124
      %v1032 = vpop.permute.xlu0 %1031
      %1033 = vrot.lane.b32.xlu0 %v1012, 124
      %v1034 = vpop.permute.xlu0 %1033
      %1035 = vrot.lane.b32.xlu0 %v1013, 124
      %v1036 = vpop.permute.xlu0 %1035
      %1037 = vrot.lane.b32.xlu0 %v1014, 124
      %v1038 = vpop.permute.xlu0 %1037
      %vm1039 = vcmask 1014784
      %v1040 = vsel %vm1039, %v1024, %v1026
      %v1041 = vsel %vm1039, %v1026, %v1028
      %v1042 = vsel %vm1039, %v1028, %v1030
      %v1043 = vsel %vm1039, %v1030, %v1032
      %v1044 = vsel %vm1039, %v1032, %v1034
      %v1045 = vsel %vm1039, %v1034, %v1036
      %v1046 = vsel %vm1039, %v1036, %v1038
      %1055 = vst [vmem:[#allocation3 + $0x180] sm:$0xff] %v1040
      %1056 = vst [vmem:[#allocation3 + $0x188] sm:$0xff] %v1041
      %1057 = vst [vmem:[#allocation3 + $0x190] sm:$0xff] %v1042
      %1058 = vst [vmem:[#allocation3 + $0x198] sm:$0xff] %v1043
      %1059 = vst [vmem:[#allocation3 + $0x1a0] sm:$0xff] %v1044
      %1060 = vst [vmem:[#allocation3 + $0x1a8] sm:$0xff] %v1045
      %1061 = vst [vmem:[#allocation3 + $0x1b0] sm:$0xff] %v1046
      %1062 = vst.msk [vmem:[#allocation3 + $0x1b8] sm:$0xff] %vm710, %v1038
      %v1063 = vld [vmem:[#allocation2] sm:$0xff]
      %v1064 = vld [vmem:[#allocation2 + $0x8] sm:$0xff]
      %v1065 = vld [vmem:[#allocation2 + $0x10] sm:$0xff]
      %v1066 = vld [vmem:[#allocation2 + $0x18] sm:$0xff]
      %v1067 = vld [vmem:[#allocation2 + $0x20] sm:$0xff]
      %v1068 = vld [vmem:[#allocation2 + $0x28] sm:$0xff]
      %v1069 = vld [vmem:[#allocation2 + $0x30] sm:$0xff]
      %v1070 = vld [vmem:[#allocation2 + $0x38] sm:$0xff]
      %1071 = vst [vmem:[#allocation3 + $0x1c0] sm:$0xff] %v1063
      %1072 = vst [vmem:[#allocation3 + $0x1c8] sm:$0xff] %v1064
      %1073 = vst [vmem:[#allocation3 + $0x1d0] sm:$0xff] %v1065
      %1074 = vst [vmem:[#allocation3 + $0x1d8] sm:$0xff] %v1066
      %1075 = vst [vmem:[#allocation3 + $0x1e0] sm:$0xff] %v1067
      %1076 = vst [vmem:[#allocation3 + $0x1e8] sm:$0xff] %v1068
      %1077 = vst [vmem:[#allocation3 + $0x1f0] sm:$0xff] %v1069
      %1078 = vst.msk [vmem:[#allocation3 + $0x1f8] sm:$0xff] %vm710, %v1070
      %v1079 = vld [vmem:[#allocation2] sm:$0xff]
      %v1080 = vld [vmem:[#allocation2 + $0x8] sm:$0xff]
      %v1081 = vld [vmem:[#allocation2 + $0x10] sm:$0xff]
      %v1082 = vld [vmem:[#allocation2 + $0x18] sm:$0xff]
      %v1083 = vld [vmem:[#allocation2 + $0x20] sm:$0xff]
      %v1084 = vld [vmem:[#allocation2 + $0x28] sm:$0xff]
      %v1085 = vld [vmem:[#allocation2 + $0x30] sm:$0xff]
      %v1086 = vld [vmem:[#allocation2 + $0x38] sm:$0xff]
      %1095 = vrot.lane.b32.xlu0 %v1079, 127
      %v1096 = vpop.permute.xlu0 %1095
      %1097 = vrot.lane.b32.xlu0 %v1080, 127
      %v1098 = vpop.permute.xlu0 %1097
      %1099 = vrot.lane.b32.xlu0 %v1081, 127
      %v1100 = vpop.permute.xlu0 %1099
      %1101 = vrot.lane.b32.xlu0 %v1082, 127
      %v1102 = vpop.permute.xlu0 %1101
      %1103 = vrot.lane.b32.xlu0 %v1083, 127
      %v1104 = vpop.permute.xlu0 %1103
      %1105 = vrot.lane.b32.xlu0 %v1084, 127
      %v1106 = vpop.permute.xlu0 %1105
      %1107 = vrot.lane.b32.xlu0 %v1085, 127
      %v1108 = vpop.permute.xlu0 %1107
      %1109 = vrot.lane.b32.xlu0 %v1086, 127
      %v1110 = vpop.permute.xlu0 %1109
      %vm1111 = vcmask 1039360
      %v1112 = vsel %vm1111, %v1096, %v1098
      %v1113 = vsel %vm1111, %v1098, %v1100
      %v1114 = vsel %vm1111, %v1100, %v1102
      %v1115 = vsel %vm1111, %v1102, %v1104
      %v1116 = vsel %vm1111, %v1104, %v1106
      %v1117 = vsel %vm1111, %v1106, %v1108
      %v1118 = vsel %vm1111, %v1108, %v1110
      %1127 = vst [vmem:[#allocation3 + $0x200] sm:$0xff] %v1112
      %1128 = vst [vmem:[#allocation3 + $0x208] sm:$0xff] %v1113
      %1129 = vst [vmem:[#allocation3 + $0x210] sm:$0xff] %v1114
      %1130 = vst [vmem:[#allocation3 + $0x218] sm:$0xff] %v1115
      %1131 = vst [vmem:[#allocation3 + $0x220] sm:$0xff] %v1116
      %1132 = vst [vmem:[#allocation3 + $0x228] sm:$0xff] %v1117
      %1133 = vst [vmem:[#allocation3 + $0x230] sm:$0xff] %v1118
      %1134 = vst.msk [vmem:[#allocation3 + $0x238] sm:$0xff] %vm710, %v1110
      %v1135 = vld [vmem:[#allocation2] sm:$0xff]
      %v1136 = vld [vmem:[#allocation2 + $0x8] sm:$0xff]
      %v1137 = vld [vmem:[#allocation2 + $0x10] sm:$0xff]
      %v1138 = vld [vmem:[#allocation2 + $0x18] sm:$0xff]
      %v1139 = vld [vmem:[#allocation2 + $0x20] sm:$0xff]
      %v1140 = vld [vmem:[#allocation2 + $0x28] sm:$0xff]
      %v1141 = vld [vmem:[#allocation2 + $0x30] sm:$0xff]
      %v1142 = vld [vmem:[#allocation2 + $0x38] sm:$0xff]
      %1151 = vrot.lane.b32.xlu0 %v1135, 126
      %v1152 = vpop.permute.xlu0 %1151
      %1153 = vrot.lane.b32.xlu0 %v1136, 126
      %v1154 = vpop.permute.xlu0 %1153
      %1155 = vrot.lane.b32.xlu0 %v1137, 126
      %v1156 = vpop.permute.xlu0 %1155
      %1157 = vrot.lane.b32.xlu0 %v1138, 126
      %v1158 = vpop.permute.xlu0 %1157
      %1159 = vrot.lane.b32.xlu0 %v1139, 126
      %v1160 = vpop.permute.xlu0 %1159
      %1161 = vrot.lane.b32.xlu0 %v1140, 126
      %v1162 = vpop.permute.xlu0 %1161
      %1163 = vrot.lane.b32.xlu0 %v1141, 126
      %v1164 = vpop.permute.xlu0 %1163
      %1165 = vrot.lane.b32.xlu0 %v1142, 126
      %v1166 = vpop.permute.xlu0 %1165
      %vm1167 = vcmask 1031168
      %v1168 = vsel %vm1167, %v1152, %v1154
      %v1169 = vsel %vm1167, %v1154, %v1156
      %v1170 = vsel %vm1167, %v1156, %v1158
      %v1171 = vsel %vm1167, %v1158, %v1160
      %v1172 = vsel %vm1167, %v1160, %v1162
      %v1173 = vsel %vm1167, %v1162, %v1164
      %v1174 = vsel %vm1167, %v1164, %v1166
      %1183 = vst [vmem:[#allocation3 + $0x240] sm:$0xff] %v1168
      %1184 = vst [vmem:[#allocation3 + $0x248] sm:$0xff] %v1169
      %1185 = vst [vmem:[#allocation3 + $0x250] sm:$0xff] %v1170
      %1186 = vst [vmem:[#allocation3 + $0x258] sm:$0xff] %v1171
      %1187 = vst [vmem:[#allocation3 + $0x260] sm:$0xff] %v1172
      %1188 = vst [vmem:[#allocation3 + $0x268] sm:$0xff] %v1173
      %1189 = vst [vmem:[#allocation3 + $0x270] sm:$0xff] %v1174
      %1190 = vst.msk [vmem:[#allocation3 + $0x278] sm:$0xff] %vm710, %v1166
      %v1191 = vld [vmem:[#allocation2] sm:$0xff]
      %v1192 = vld [vmem:[#allocation2 + $0x8] sm:$0xff]
      %v1193 = vld [vmem:[#allocation2 + $0x10] sm:$0xff]
      %v1194 = vld [vmem:[#allocation2 + $0x18] sm:$0xff]
      %v1195 = vld [vmem:[#allocation2 + $0x20] sm:$0xff]
      %v1196 = vld [vmem:[#allocation2 + $0x28] sm:$0xff]
      %v1197 = vld [vmem:[#allocation2 + $0x30] sm:$0xff]
      %v1198 = vld [vmem:[#allocation2 + $0x38] sm:$0xff]
      %1207 = vrot.lane.b32.xlu0 %v1191, 125
      %v1208 = vpop.permute.xlu0 %1207
      %1209 = vrot.lane.b32.xlu0 %v1192, 125
      %v1210 = vpop.permute.xlu0 %1209
      %1211 = vrot.lane.b32.xlu0 %v1193, 125
      %v1212 = vpop.permute.xlu0 %1211
      %1213 = vrot.lane.b32.xlu0 %v1194, 125
      %v1214 = vpop.permute.xlu0 %1213
      %1215 = vrot.lane.b32.xlu0 %v1195, 125
      %v1216 = vpop.permute.xlu0 %1215
      %1217 = vrot.lane.b32.xlu0 %v1196, 125
      %v1218 = vpop.permute.xlu0 %1217
      %1219 = vrot.lane.b32.xlu0 %v1197, 125
      %v1220 = vpop.permute.xlu0 %1219
      %1221 = vrot.lane.b32.xlu0 %v1198, 125
      %v1222 = vpop.permute.xlu0 %1221
      %vm1223 = vcmask 1022976
      %v1224 = vsel %vm1223, %v1208, %v1210
      %v1225 = vsel %vm1223, %v1210, %v1212
      %v1226 = vsel %vm1223, %v1212, %v1214
      %v1227 = vsel %vm1223, %v1214, %v1216
      %v1228 = vsel %vm1223, %v1216, %v1218
      %v1229 = vsel %vm1223, %v1218, %v1220
      %v1230 = vsel %vm1223, %v1220, %v1222
      %1239 = vst [vmem:[#allocation3 + $0x280] sm:$0xff] %v1224
      %1240 = vst [vmem:[#allocation3 + $0x288] sm:$0xff] %v1225
      %1241 = vst [vmem:[#allocation3 + $0x290] sm:$0xff] %v1226
      %1242 = vst [vmem:[#allocation3 + $0x298] sm:$0xff] %v1227
      %1243 = vst [vmem:[#allocation3 + $0x2a0] sm:$0xff] %v1228
      %1244 = vst [vmem:[#allocation3 + $0x2a8] sm:$0xff] %v1229
      %1245 = vst [vmem:[#allocation3 + $0x2b0] sm:$0xff] %v1230
      %1246 = vst.msk [vmem:[#allocation3 + $0x2b8] sm:$0xff] %vm710, %v1222
      %v1247 = vld [vmem:[#allocation2] sm:$0xff]
      %v1248 = vld [vmem:[#allocation2 + $0x8] sm:$0xff]
      %v1249 = vld [vmem:[#allocation2 + $0x10] sm:$0xff]
      %v1250 = vld [vmem:[#allocation2 + $0x18] sm:$0xff]
      %v1251 = vld [vmem:[#allocation2 + $0x20] sm:$0xff]
      %v1252 = vld [vmem:[#allocation2 + $0x28] sm:$0xff]
      %v1253 = vld [vmem:[#allocation2 + $0x30] sm:$0xff]
      %v1254 = vld [vmem:[#allocation2 + $0x38] sm:$0xff]
      %1263 = vrot.lane.b32.xlu0 %v1247, 124
      %v1264 = vpop.permute.xlu0 %1263
      %1265 = vrot.lane.b32.xlu0 %v1248, 124
      %v1266 = vpop.permute.xlu0 %1265
      %1267 = vrot.lane.b32.xlu0 %v1249, 124
      %v1268 = vpop.permute.xlu0 %1267
      %1269 = vrot.lane.b32.xlu0 %v1250, 124
      %v1270 = vpop.permute.xlu0 %1269
      %1271 = vrot.lane.b32.xlu0 %v1251, 124
      %v1272 = vpop.permute.xlu0 %1271
      %1273 = vrot.lane.b32.xlu0 %v1252, 124
      %v1274 = vpop.permute.xlu0 %1273
      %1275 = vrot.lane.b32.xlu0 %v1253, 124
      %v1276 = vpop.permute.xlu0 %1275
      %1277 = vrot.lane.b32.xlu0 %v1254, 124
      %v1278 = vpop.permute.xlu0 %1277
      %v1279 = vsel %vm1039, %v1264, %v1266
      %v1280 = vsel %vm1039, %v1266, %v1268
      %v1281 = vsel %vm1039, %v1268, %v1270
      %v1282 = vsel %vm1039, %v1270, %v1272
      %v1283 = vsel %vm1039, %v1272, %v1274
      %v1284 = vsel %vm1039, %v1274, %v1276
      %v1285 = vsel %vm1039, %v1276, %v1278
      %1294 = vst [vmem:[#allocation3 + $0x2c0] sm:$0xff] %v1279
      %1295 = vst [vmem:[#allocation3 + $0x2c8] sm:$0xff] %v1280
      %1296 = vst [vmem:[#allocation3 + $0x2d0] sm:$0xff] %v1281
      %1297 = vst [vmem:[#allocation3 + $0x2d8] sm:$0xff] %v1282
      %1298 = vst [vmem:[#allocation3 + $0x2e0] sm:$0xff] %v1283
      %1299 = vst [vmem:[#allocation3 + $0x2e8] sm:$0xff] %v1284
      %1300 = vst [vmem:[#allocation3 + $0x2f0] sm:$0xff] %v1285
      %1301 = vst.msk [vmem:[#allocation3 + $0x2f8] sm:$0xff] %vm710, %v1278
      %v1302 = vld [vmem:[#allocation2] sm:$0xff]
      %v1303 = vld [vmem:[#allocation2 + $0x8] sm:$0xff]
      %v1304 = vld [vmem:[#allocation2 + $0x10] sm:$0xff]
      %v1305 = vld [vmem:[#allocation2 + $0x18] sm:$0xff]
      %v1306 = vld [vmem:[#allocation2 + $0x20] sm:$0xff]
      %v1307 = vld [vmem:[#allocation2 + $0x28] sm:$0xff]
      %v1308 = vld [vmem:[#allocation2 + $0x30] sm:$0xff]
      %v1309 = vld [vmem:[#allocation2 + $0x38] sm:$0xff]
      %1318 = vrot.lane.b32.xlu0 %v1302, 123
      %v1319 = vpop.permute.xlu0 %1318
      %1320 = vrot.lane.b32.xlu0 %v1303, 123
      %v1321 = vpop.permute.xlu0 %1320
      %1322 = vrot.lane.b32.xlu0 %v1304, 123
      %v1323 = vpop.permute.xlu0 %1322
      %1324 = vrot.lane.b32.xlu0 %v1305, 123
      %v1325 = vpop.permute.xlu0 %1324
      %1326 = vrot.lane.b32.xlu0 %v1306, 123
      %v1327 = vpop.permute.xlu0 %1326
      %1328 = vrot.lane.b32.xlu0 %v1307, 123
      %v1329 = vpop.permute.xlu0 %1328
      %1330 = vrot.lane.b32.xlu0 %v1308, 123
      %v1331 = vpop.permute.xlu0 %1330
      %1332 = vrot.lane.b32.xlu0 %v1309, 123
      %v1333 = vpop.permute.xlu0 %1332
      %vm1334 = vcmask 1006592
      %v1335 = vsel %vm1334, %v1319, %v1321
      %v1336 = vsel %vm1334, %v1321, %v1323
      %v1337 = vsel %vm1334, %v1323, %v1325
      %v1338 = vsel %vm1334, %v1325, %v1327
      %v1339 = vsel %vm1334, %v1327, %v1329
      %v1340 = vsel %vm1334, %v1329, %v1331
      %v1341 = vsel %vm1334, %v1331, %v1333
      %1350 = vst [vmem:[#allocation3 + $0x300] sm:$0xff] %v1335
      %1351 = vst [vmem:[#allocation3 + $0x308] sm:$0xff] %v1336
      %1352 = vst [vmem:[#allocation3 + $0x310] sm:$0xff] %v1337
      %1353 = vst [vmem:[#allocation3 + $0x318] sm:$0xff] %v1338
      %1354 = vst [vmem:[#allocation3 + $0x320] sm:$0xff] %v1339
      %1355 = vst [vmem:[#allocation3 + $0x328] sm:$0xff] %v1340
      %1356 = vst [vmem:[#allocation3 + $0x330] sm:$0xff] %v1341
      %1357 = vst.msk [vmem:[#allocation3 + $0x338] sm:$0xff] %vm710, %v1333
      %v1358 = vld [vmem:[#allocation2] sm:$0xff]
      %v1359 = vld [vmem:[#allocation2 + $0x8] sm:$0xff]
      %v1360 = vld [vmem:[#allocation2 + $0x10] sm:$0xff]
      %v1361 = vld [vmem:[#allocation2 + $0x18] sm:$0xff]
      %v1362 = vld [vmem:[#allocation2 + $0x20] sm:$0xff]
      %v1363 = vld [vmem:[#allocation2 + $0x28] sm:$0xff]
      %v1364 = vld [vmem:[#allocation2 + $0x30] sm:$0xff]
      %v1365 = vld [vmem:[#allocation2 + $0x38] sm:$0xff]
      %1374 = vrot.lane.b32.xlu0 %v1358, 122
      %v1375 = vpop.permute.xlu0 %1374
      %1376 = vrot.lane.b32.xlu0 %v1359, 122
      %v1377 = vpop.permute.xlu0 %1376
      %1378 = vrot.lane.b32.xlu0 %v1360, 122
      %v1379 = vpop.permute.xlu0 %1378
      %1380 = vrot.lane.b32.xlu0 %v1361, 122
      %v1381 = vpop.permute.xlu0 %1380
      %1382 = vrot.lane.b32.xlu0 %v1362, 122
      %v1383 = vpop.permute.xlu0 %1382
      %1384 = vrot.lane.b32.xlu0 %v1363, 122
      %v1385 = vpop.permute.xlu0 %1384
      %1386 = vrot.lane.b32.xlu0 %v1364, 122
      %v1387 = vpop.permute.xlu0 %1386
      %1388 = vrot.lane.b32.xlu0 %v1365, 122
      %v1389 = vpop.permute.xlu0 %1388
      %vm1390 = vcmask 998400
      %v1391 = vsel %vm1390, %v1375, %v1377
      %v1392 = vsel %vm1390, %v1377, %v1379
      %v1393 = vsel %vm1390, %v1379, %v1381
      %v1394 = vsel %vm1390, %v1381, %v1383
      %v1395 = vsel %vm1390, %v1383, %v1385
      %v1396 = vsel %vm1390, %v1385, %v1387
      %v1397 = vsel %vm1390, %v1387, %v1389
      %1406 = vst [vmem:[#allocation3 + $0x340] sm:$0xff] %v1391
      %1407 = vst [vmem:[#allocation3 + $0x348] sm:$0xff] %v1392
      %1408 = vst [vmem:[#allocation3 + $0x350] sm:$0xff] %v1393
      %1409 = vst [vmem:[#allocation3 + $0x358] sm:$0xff] %v1394
      %1410 = vst [vmem:[#allocation3 + $0x360] sm:$0xff] %v1395
      %1411 = vst [vmem:[#allocation3 + $0x368] sm:$0xff] %v1396
      %1412 = vst [vmem:[#allocation3 + $0x370] sm:$0xff] %v1397
      %1413 = vst.msk [vmem:[#allocation3 + $0x378] sm:$0xff] %vm710, %v1389
      %v1414 = vld [vmem:[%s1] sm:$0xff]
      %v1415 = vld [vmem:[%s1 + $0x8] sm:$0xff]
      %v1416 = vld [vmem:[#allocation3] sm:$0xff]
      %v1417 = vld [vmem:[#allocation3 + $0x8] sm:$0xff]
      %v1418 = vld [vmem:[#allocation3 + $0x10] sm:$0xff]
      %v1419 = vld [vmem:[#allocation3 + $0x18] sm:$0xff]
      %v1420 = vld [vmem:[#allocation3 + $0x20] sm:$0xff]
      %v1421 = vld [vmem:[#allocation3 + $0x28] sm:$0xff]
      %v1422 = vld [vmem:[#allocation3 + $0x30] sm:$0xff]
      %v1423 = vld [vmem:[#allocation3 + $0x38] sm:$0xff]
      %v1424 = vld [vmem:[#allocation3 + $0x40] sm:$0xff]
      %v1425 = vld [vmem:[#allocation3 + $0x48] sm:$0xff]
      %v1426 = vld [vmem:[#allocation3 + $0x50] sm:$0xff]
      %v1427 = vld [vmem:[#allocation3 + $0x58] sm:$0xff]
      %v1428 = vld [vmem:[#allocation3 + $0x60] sm:$0xff]
      %v1429 = vld [vmem:[#allocation3 + $0x68] sm:$0xff]
      %v1430 = vld [vmem:[#allocation3 + $0x70] sm:$0xff]
      %v1431 = vld [vmem:[#allocation3 + $0x78] sm:$0xff]
      %v1432 = vld [vmem:[#allocation3 + $0x80] sm:$0xff]
      %v1433 = vld [vmem:[#allocation3 + $0x88] sm:$0xff]
      %v1434 = vld [vmem:[#allocation3 + $0x90] sm:$0xff]
      %v1435 = vld [vmem:[#allocation3 + $0x98] sm:$0xff]
      %v1436 = vld [vmem:[#allocation3 + $0xa0] sm:$0xff]
      %v1437 = vld [vmem:[#allocation3 + $0xa8] sm:$0xff]
      %v1438 = vld [vmem:[#allocation3 + $0xb0] sm:$0xff]
      %v1439 = vld [vmem:[#allocation3 + $0xb8] sm:$0xff]
      %v1440 = vld [vmem:[#allocation3 + $0xc0] sm:$0xff]
      %v1441 = vld [vmem:[#allocation3 + $0xc8] sm:$0xff]
      %v1442 = vld [vmem:[#allocation3 + $0xd0] sm:$0xff]
      %v1443 = vld [vmem:[#allocation3 + $0xd8] sm:$0xff]
      %v1444 = vld [vmem:[#allocation3 + $0xe0] sm:$0xff]
      %v1445 = vld [vmem:[#allocation3 + $0xe8] sm:$0xff]
      %v1446 = vld [vmem:[#allocation3 + $0xf0] sm:$0xff]
      %v1447 = vld [vmem:[#allocation3 + $0xf8] sm:$0xff]
      %v1448 = vld [vmem:[#allocation3 + $0x100] sm:$0xff]
      %v1449 = vld [vmem:[#allocation3 + $0x108] sm:$0xff]
      %v1450 = vld [vmem:[#allocation3 + $0x110] sm:$0xff]
      %v1451 = vld [vmem:[#allocation3 + $0x118] sm:$0xff]
      %v1452 = vld [vmem:[#allocation3 + $0x120] sm:$0xff]
      %v1453 = vld [vmem:[#allocation3 + $0x128] sm:$0xff]
      %v1454 = vld [vmem:[#allocation3 + $0x130] sm:$0xff]
      %v1455 = vld [vmem:[#allocation3 + $0x138] sm:$0xff]
      %v1456 = vld [vmem:[#allocation3 + $0x140] sm:$0xff]
      %v1457 = vld [vmem:[#allocation3 + $0x148] sm:$0xff]
      %v1458 = vld [vmem:[#allocation3 + $0x150] sm:$0xff]
      %v1459 = vld [vmem:[#allocation3 + $0x158] sm:$0xff]
      %v1460 = vld [vmem:[#allocation3 + $0x160] sm:$0xff]
      %v1461 = vld [vmem:[#allocation3 + $0x168] sm:$0xff]
      %v1462 = vld [vmem:[#allocation3 + $0x170] sm:$0xff]
      %v1463 = vld [vmem:[#allocation3 + $0x178] sm:$0xff]
      %v1464 = vld [vmem:[#allocation3 + $0x180] sm:$0xff]
      %v1465 = vld [vmem:[#allocation3 + $0x188] sm:$0xff]
      %v1466 = vld [vmem:[#allocation3 + $0x190] sm:$0xff]
      %v1467 = vld [vmem:[#allocation3 + $0x198] sm:$0xff]
      %v1468 = vld [vmem:[#allocation3 + $0x1a0] sm:$0xff]
      %v1469 = vld [vmem:[#allocation3 + $0x1a8] sm:$0xff]
      %v1470 = vld [vmem:[#allocation3 + $0x1b0] sm:$0xff]
      %v1471 = vld [vmem:[#allocation3 + $0x1b8] sm:$0xff]
      %v1472 = vld [vmem:[#allocation3 + $0x1c0] sm:$0xff]
      %v1473 = vld [vmem:[#allocation3 + $0x1c8] sm:$0xff]
      %v1474 = vld [vmem:[#allocation3 + $0x1d0] sm:$0xff]
      %v1475 = vld [vmem:[#allocation3 + $0x1d8] sm:$0xff]
      %v1476 = vld [vmem:[#allocation3 + $0x1e0] sm:$0xff]
      %v1477 = vld [vmem:[#allocation3 + $0x1e8] sm:$0xff]
      %v1478 = vld [vmem:[#allocation3 + $0x1f0] sm:$0xff]
      %v1479 = vld [vmem:[#allocation3 + $0x1f8] sm:$0xff]
      %v1480 = vld [vmem:[#allocation3 + $0x200] sm:$0xff]
      %v1481 = vld [vmem:[#allocation3 + $0x208] sm:$0xff]
      %v1482 = vld [vmem:[#allocation3 + $0x210] sm:$0xff]
      %v1483 = vld [vmem:[#allocation3 + $0x218] sm:$0xff]
      %v1484 = vld [vmem:[#allocation3 + $0x220] sm:$0xff]
      %v1485 = vld [vmem:[#allocation3 + $0x228] sm:$0xff]
      %v1486 = vld [vmem:[#allocation3 + $0x230] sm:$0xff]
      %v1487 = vld [vmem:[#allocation3 + $0x238] sm:$0xff]
      %v1488 = vld [vmem:[#allocation3 + $0x240] sm:$0xff]
      %v1489 = vld [vmem:[#allocation3 + $0x248] sm:$0xff]
      %v1490 = vld [vmem:[#allocation3 + $0x250] sm:$0xff]
      %v1491 = vld [vmem:[#allocation3 + $0x258] sm:$0xff]
      %v1492 = vld [vmem:[#allocation3 + $0x260] sm:$0xff]
      %v1493 = vld [vmem:[#allocation3 + $0x268] sm:$0xff]
      %v1494 = vld [vmem:[#allocation3 + $0x270] sm:$0xff]
      %v1495 = vld [vmem:[#allocation3 + $0x278] sm:$0xff]
      %v1496 = vld [vmem:[#allocation3 + $0x280] sm:$0xff]
      %v1497 = vld [vmem:[#allocation3 + $0x288] sm:$0xff]
      %v1498 = vld [vmem:[#allocation3 + $0x290] sm:$0xff]
      %v1499 = vld [vmem:[#allocation3 + $0x298] sm:$0xff]
      %v1500 = vld [vmem:[#allocation3 + $0x2a0] sm:$0xff]
      %v1501 = vld [vmem:[#allocation3 + $0x2a8] sm:$0xff]
      %v1502 = vld [vmem:[#allocation3 + $0x2b0] sm:$0xff]
      %v1503 = vld [vmem:[#allocation3 + $0x2b8] sm:$0xff]
      %v1504 = vld [vmem:[#allocation3 + $0x2c0] sm:$0xff]
      %v1505 = vld [vmem:[#allocation3 + $0x2c8] sm:$0xff]
      %v1506 = vld [vmem:[#allocation3 + $0x2d0] sm:$0xff]
      %v1507 = vld [vmem:[#allocation3 + $0x2d8] sm:$0xff]
      %v1508 = vld [vmem:[#allocation3 + $0x2e0] sm:$0xff]
      %v1509 = vld [vmem:[#allocation3 + $0x2e8] sm:$0xff]
      %v1510 = vld [vmem:[#allocation3 + $0x2f0] sm:$0xff]
      %v1511 = vld [vmem:[#allocation3 + $0x2f8] sm:$0xff]
      %v1512 = vld [vmem:[#allocation3 + $0x300] sm:$0xff]
      %v1513 = vld [vmem:[#allocation3 + $0x308] sm:$0xff]
      %v1514 = vld [vmem:[#allocation3 + $0x310] sm:$0xff]
      %v1515 = vld [vmem:[#allocation3 + $0x318] sm:$0xff]
      %v1516 = vld [vmem:[#allocation3 + $0x320] sm:$0xff]
      %v1517 = vld [vmem:[#allocation3 + $0x328] sm:$0xff]
      %v1518 = vld [vmem:[#allocation3 + $0x330] sm:$0xff]
      %v1519 = vld [vmem:[#allocation3 + $0x338] sm:$0xff]
      %v1520 = vld [vmem:[#allocation3 + $0x340] sm:$0xff]
      %v1521 = vld [vmem:[#allocation3 + $0x348] sm:$0xff]
      %v1522 = vld [vmem:[#allocation3 + $0x350] sm:$0xff]
      %v1523 = vld [vmem:[#allocation3 + $0x358] sm:$0xff]
      %v1524 = vld [vmem:[#allocation3 + $0x360] sm:$0xff]
      %v1525 = vld [vmem:[#allocation3 + $0x368] sm:$0xff]
      %v1526 = vld [vmem:[#allocation3 + $0x370] sm:$0xff]
      %v1527 = vld [vmem:[#allocation3 + $0x378] sm:$0xff]
      %v1528 = vld [vmem:[%s2] sm:$0xff]
      %v1529 = vld [vmem:[%s2 + $0x8] sm:$0xff]
      %v1530 = vld [vmem:[%s2 + $0x10] sm:$0xff]
      %v1531 = vld [vmem:[%s2 + $0x18] sm:$0xff]
      %v1532 = vld [vmem:[%s2 + $0x20] sm:$0xff]
      %v1533 = vld [vmem:[%s2 + $0x28] sm:$0xff]
      %v1534 = vld [vmem:[%s2 + $0x30] sm:$0xff]
      %v1535 = vld [vmem:[%s2 + $0x38] sm:$0xff]
      %v1536 = vld [vmem:[%s2 + $0x40] sm:$0xff]
      %v1537 = vld [vmem:[%s2 + $0x48] sm:$0xff]
      %v1538 = vld [vmem:[%s2 + $0x50] sm:$0xff]
      %v1539 = vld [vmem:[%s2 + $0x58] sm:$0xff]
      %v1540 = vld [vmem:[%s2 + $0x60] sm:$0xff]
      %v1541 = vld [vmem:[%s2 + $0x68] sm:$0xff]
      %v1542 = vld [vmem:[%s2 + $0x70] sm:$0xff]
      %v1543 = vld [vmem:[%s2 + $0x78] sm:$0xff]
      %vm1544 = vcmask 916480
      %v1546 = vsel %vm1544, %v1414, 0
      %v1549 = vsel %vm1544, %v1415, 0
      %1551 = vmatpush.msra.mxu0 0.0
      %1552 = vmatpush.msra.mxu0 0.0
      %1553 = vmatpush.msra.mxu0 %v1520
      %1554 = vmatpush.msra.mxu0 %v1512
      %1555 = vmatpush.msra.mxu0 %v1504
      %1556 = vmatpush.msra.mxu0 %v1496
      %1557 = vmatpush.msra.mxu0 %v1488
      %1558 = vmatpush.msra.mxu0 %v1480
      %1559 = vmatpush.msra.mxu0 %v1472
      %1560 = vmatpush.msra.mxu0 %v1464
      %1561 = vmatpush.msra.mxu0 %v1456
      %1562 = vmatpush.msra.mxu0 %v1448
      %1563 = vmatpush.msra.mxu0 %v1440
      %1564 = vmatpush.msra.mxu0 %v1432
      %1565 = vmatpush.msra.mxu0 %v1424
      %1566 = vmatpush.msra.mxu0 %v1416
      %1567 = vmatmul.f32.gmra.mxu0 %v1546
      %v1568 = vpop.f32.mrf.mxu0
      %v1569 = vadd.f32 %v1528, %v1568
      %1570 = vmatmul.f32.gmra.mxu0 %v1549
      %v1571 = vpop.f32.mrf.mxu0
      %v1572 = vadd.f32 %v1536, %v1571
      %1573 = vdwg.mxu0
      %1574 = vmatpush.msra.mxu0 0.0
      %1575 = vmatpush.msra.mxu0 0.0
      %1576 = vmatpush.msra.mxu0 %v1521
      %1577 = vmatpush.msra.mxu0 %v1513
      %1578 = vmatpush.msra.mxu0 %v1505
      %1579 = vmatpush.msra.mxu0 %v1497
      %1580 = vmatpush.msra.mxu0 %v1489
      %1581 = vmatpush.msra.mxu0 %v1481
      %1582 = vmatpush.msra.mxu0 %v1473
      %1583 = vmatpush.msra.mxu0 %v1465
      %1584 = vmatpush.msra.mxu0 %v1457
      %1585 = vmatpush.msra.mxu0 %v1449
      %1586 = vmatpush.msra.mxu0 %v1441
      %1587 = vmatpush.msra.mxu0 %v1433
      %1588 = vmatpush.msra.mxu0 %v1425
      %1589 = vmatpush.msra.mxu0 %v1417
      %1590 = vmatmul.f32.gmra.mxu0 %v1546
      %v1591 = vpop.f32.mrf.mxu0
      %v1592 = vadd.f32 %v1529, %v1591
      %1593 = vmatmul.f32.gmra.mxu0 %v1549
      %v1594 = vpop.f32.mrf.mxu0
      %v1595 = vadd.f32 %v1537, %v1594
      %1596 = vdwg.mxu0
      %1597 = vmatpush.msra.mxu0 0.0
      %1598 = vmatpush.msra.mxu0 0.0
      %1599 = vmatpush.msra.mxu0 %v1522
      %1600 = vmatpush.msra.mxu0 %v1514
      %1601 = vmatpush.msra.mxu0 %v1506
      %1602 = vmatpush.msra.mxu0 %v1498
      %1603 = vmatpush.msra.mxu0 %v1490
      %1604 = vmatpush.msra.mxu0 %v1482
      %1605 = vmatpush.msra.mxu0 %v1474
      %1606 = vmatpush.msra.mxu0 %v1466
      %1607 = vmatpush.msra.mxu0 %v1458
      %1608 = vmatpush.msra.mxu0 %v1450
      %1609 = vmatpush.msra.mxu0 %v1442
      %1610 = vmatpush.msra.mxu0 %v1434
      %1611 = vmatpush.msra.mxu0 %v1426
      %1612 = vmatpush.msra.mxu0 %v1418
      %1613 = vmatmul.f32.gmra.mxu0 %v1546
      %v1614 = vpop.f32.mrf.mxu0
      %v1615 = vadd.f32 %v1530, %v1614
      %1616 = vmatmul.f32.gmra.mxu0 %v1549
      %v1617 = vpop.f32.mrf.mxu0
      %v1618 = vadd.f32 %v1538, %v1617
      %1619 = vdwg.mxu0
      %1620 = vmatpush.msra.mxu0 0.0
      %1621 = vmatpush.msra.mxu0 0.0
      %1622 = vmatpush.msra.mxu0 %v1523
      %1623 = vmatpush.msra.mxu0 %v1515
      %1624 = vmatpush.msra.mxu0 %v1507
      %1625 = vmatpush.msra.mxu0 %v1499
      %1626 = vmatpush.msra.mxu0 %v1491
      %1627 = vmatpush.msra.mxu0 %v1483
      %1628 = vmatpush.msra.mxu0 %v1475
      %1629 = vmatpush.msra.mxu0 %v1467
      %1630 = vmatpush.msra.mxu0 %v1459
      %1631 = vmatpush.msra.mxu0 %v1451
      %1632 = vmatpush.msra.mxu0 %v1443
      %1633 = vmatpush.msra.mxu0 %v1435
      %1634 = vmatpush.msra.mxu0 %v1427
      %1635 = vmatpush.msra.mxu0 %v1419
      %1636 = vmatmul.f32.gmra.mxu0 %v1546
      %v1637 = vpop.f32.mrf.mxu0
      %v1638 = vadd.f32 %v1531, %v1637
      %1639 = vmatmul.f32.gmra.mxu0 %v1549
      %v1640 = vpop.f32.mrf.mxu0
      %v1641 = vadd.f32 %v1539, %v1640
      %1642 = vdwg.mxu0
      %1643 = vmatpush.msra.mxu0 0.0
      %1644 = vmatpush.msra.mxu0 0.0
      %1645 = vmatpush.msra.mxu0 %v1524
      %1646 = vmatpush.msra.mxu0 %v1516
      %1647 = vmatpush.msra.mxu0 %v1508
      %1648 = vmatpush.msra.mxu0 %v1500
      %1649 = vmatpush.msra.mxu0 %v1492
      %1650 = vmatpush.msra.mxu0 %v1484
      %1651 = vmatpush.msra.mxu0 %v1476
      %1652 = vmatpush.msra.mxu0 %v1468
      %1653 = vmatpush.msra.mxu0 %v1460
      %1654 = vmatpush.msra.mxu0 %v1452
      %1655 = vmatpush.msra.mxu0 %v1444
      %1656 = vmatpush.msra.mxu0 %v1436
      %1657 = vmatpush.msra.mxu0 %v1428
      %1658 = vmatpush.msra.mxu0 %v1420
      %1659 = vmatmul.f32.gmra.mxu0 %v1546
      %v1660 = vpop.f32.mrf.mxu0
      %v1661 = vadd.f32 %v1532, %v1660
      %1662 = vmatmul.f32.gmra.mxu0 %v1549
      %v1663 = vpop.f32.mrf.mxu0
      %v1664 = vadd.f32 %v1540, %v1663
      %1665 = vdwg.mxu0
      %1666 = vmatpush.msra.mxu0 0.0
      %1667 = vmatpush.msra.mxu0 0.0
      %1668 = vmatpush.msra.mxu0 %v1525
      %1669 = vmatpush.msra.mxu0 %v1517
      %1670 = vmatpush.msra.mxu0 %v1509
      %1671 = vmatpush.msra.mxu0 %v1501
      %1672 = vmatpush.msra.mxu0 %v1493
      %1673 = vmatpush.msra.mxu0 %v1485
      %1674 = vmatpush.msra.mxu0 %v1477
      %1675 = vmatpush.msra.mxu0 %v1469
      %1676 = vmatpush.msra.mxu0 %v1461
      %1677 = vmatpush.msra.mxu0 %v1453
      %1678 = vmatpush.msra.mxu0 %v1445
      %1679 = vmatpush.msra.mxu0 %v1437
      %1680 = vmatpush.msra.mxu0 %v1429
      %1681 = vmatpush.msra.mxu0 %v1421
      %1682 = vmatmul.f32.gmra.mxu0 %v1546
      %v1683 = vpop.f32.mrf.mxu0
      %v1684 = vadd.f32 %v1533, %v1683
      %1685 = vmatmul.f32.gmra.mxu0 %v1549
      %v1686 = vpop.f32.mrf.mxu0
      %v1687 = vadd.f32 %v1541, %v1686
      %1688 = vdwg.mxu0
      %1689 = vmatpush.msra.mxu0 0.0
      %1690 = vmatpush.msra.mxu0 0.0
      %1691 = vmatpush.msra.mxu0 %v1526
      %1692 = vmatpush.msra.mxu0 %v1518
      %1693 = vmatpush.msra.mxu0 %v1510
      %1694 = vmatpush.msra.mxu0 %v1502
      %1695 = vmatpush.msra.mxu0 %v1494
      %1696 = vmatpush.msra.mxu0 %v1486
      %1697 = vmatpush.msra.mxu0 %v1478
      %1698 = vmatpush.msra.mxu0 %v1470
      %1699 = vmatpush.msra.mxu0 %v1462
      %1700 = vmatpush.msra.mxu0 %v1454
      %1701 = vmatpush.msra.mxu0 %v1446
      %1702 = vmatpush.msra.mxu0 %v1438
      %1703 = vmatpush.msra.mxu0 %v1430
      %1704 = vmatpush.msra.mxu0 %v1422
      %1705 = vmatmul.f32.gmra.mxu0 %v1546
      %v1706 = vpop.f32.mrf.mxu0
      %v1707 = vadd.f32 %v1534, %v1706
      %1708 = vmatmul.f32.gmra.mxu0 %v1549
      %v1709 = vpop.f32.mrf.mxu0
      %v1710 = vadd.f32 %v1542, %v1709
      %1711 = vdwg.mxu0
      %1712 = vmatpush.msra.mxu0 0.0
      %1713 = vmatpush.msra.mxu0 0.0
      %1714 = vmatpush.msra.mxu0 %v1527
      %1715 = vmatpush.msra.mxu0 %v1519
      %1716 = vmatpush.msra.mxu0 %v1511
      %1717 = vmatpush.msra.mxu0 %v1503
      %1718 = vmatpush.msra.mxu0 %v1495
      %1719 = vmatpush.msra.mxu0 %v1487
      %1720 = vmatpush.msra.mxu0 %v1479
      %1721 = vmatpush.msra.mxu0 %v1471
      %1722 = vmatpush.msra.mxu0 %v1463
      %1723 = vmatpush.msra.mxu0 %v1455
      %1724 = vmatpush.msra.mxu0 %v1447
      %1725 = vmatpush.msra.mxu0 %v1439
      %1726 = vmatpush.msra.mxu0 %v1431
      %1727 = vmatpush.msra.mxu0 %v1423
      %1728 = vmatmul.f32.gmra.mxu0 %v1546
      %v1729 = vpop.f32.mrf.mxu0
      %v1730 = vadd.f32 %v1535, %v1729
      %1731 = vmatmul.f32.gmra.mxu0 %v1549
      %v1732 = vpop.f32.mrf.mxu0
      %v1733 = vadd.f32 %v1543, %v1732
      %1734 = vdwg.mxu0
      %1735 = vst [vmem:[#allocation4] sm:$0xff] %v1569
      %1736 = vst [vmem:[#allocation4 + $0x8] sm:$0xff] %v1592
      %1737 = vst [vmem:[#allocation4 + $0x10] sm:$0xff] %v1615
      %1738 = vst [vmem:[#allocation4 + $0x18] sm:$0xff] %v1638
      %1739 = vst [vmem:[#allocation4 + $0x20] sm:$0xff] %v1661
      %1740 = vst [vmem:[#allocation4 + $0x28] sm:$0xff] %v1684
      %1741 = vst [vmem:[#allocation4 + $0x30] sm:$0xff] %v1707
      %1742 = vst.msk [vmem:[#allocation4 + $0x38] sm:$0xff] %vm710, %v1730
      %1743 = vst [vmem:[#allocation4 + $0x40] sm:$0xff] %v1572
      %1744 = vst [vmem:[#allocation4 + $0x48] sm:$0xff] %v1595
      %1745 = vst [vmem:[#allocation4 + $0x50] sm:$0xff] %v1618
      %1746 = vst [vmem:[#allocation4 + $0x58] sm:$0xff] %v1641
      %1747 = vst [vmem:[#allocation4 + $0x60] sm:$0xff] %v1664
      %1748 = vst [vmem:[#allocation4 + $0x68] sm:$0xff] %v1687
      %1749 = vst [vmem:[#allocation4 + $0x70] sm:$0xff] %v1710
      %1750 = vst.msk [vmem:[#allocation4 + $0x78] sm:$0xff] %vm710, %v1733
      %v1751 = vld [vmem:[#allocation4] sm:$0xff]
      %v1752 = vld [vmem:[#allocation4 + $0x8] sm:$0xff]
      %v1753 = vld [vmem:[#allocation4 + $0x10] sm:$0xff]
      %1754 = vst [vmem:[#allocation5] sm:$0xff] %v1751
      %1755 = vst [vmem:[#allocation5 + $0x8] sm:$0xff] %v1752
      %vm1756 = vcmask 785408
      %1757 = vst.msk [vmem:[#allocation5 + $0x10] sm:$0xff] %vm1756, %v1753
      %v1758 = vld [vmem:[#allocation4] sm:$0xff]
      %v1759 = vld [vmem:[#allocation4 + $0x8] sm:$0xff]
      %v1760 = vld [vmem:[#allocation4 + $0x10] sm:$0xff]
      %1764 = vrot.lane.b32.xlu0 %v1758, 127
      %v1765 = vpop.permute.xlu0 %1764
      %1766 = vrot.lane.b32.xlu0 %v1759, 127
      %v1767 = vpop.permute.xlu0 %1766
      %1768 = vrot.lane.b32.xlu0 %v1760, 127
      %v1769 = vpop.permute.xlu0 %1768
      %v1770 = vsel %vm1111, %v1765, %v1767
      %v1771 = vsel %vm1111, %v1767, %v1769
      %1775 = vst [vmem:[#allocation5 + $0x18] sm:$0xff] %v1770
      %1776 = vst [vmem:[#allocation5 + $0x20] sm:$0xff] %v1771
      %1777 = vst.msk [vmem:[#allocation5 + $0x28] sm:$0xff] %vm1756, %v1769
      %v1778 = vld [vmem:[#allocation4] sm:$0xff]
      %v1779 = vld [vmem:[#allocation4 + $0x8] sm:$0xff]
      %v1780 = vld [vmem:[#allocation4 + $0x10] sm:$0xff]
      %1784 = vrot.lane.b32.xlu0 %v1778, 126
      %v1785 = vpop.permute.xlu0 %1784
      %1786 = vrot.lane.b32.xlu0 %v1779, 126
      %v1787 = vpop.permute.xlu0 %1786
      %1788 = vrot.lane.b32.xlu0 %v1780, 126
      %v1789 = vpop.permute.xlu0 %1788
      %v1790 = vsel %vm1167, %v1785, %v1787
      %v1791 = vsel %vm1167, %v1787, %v1789
      %1795 = vst [vmem:[#allocation5 + $0x30] sm:$0xff] %v1790
      %1796 = vst [vmem:[#allocation5 + $0x38] sm:$0xff] %v1791
      %1797 = vst.msk [vmem:[#allocation5 + $0x40] sm:$0xff] %vm1756, %v1789
      %v1798 = vld [vmem:[#allocation4] sm:$0xff]
      %v1799 = vld [vmem:[#allocation4 + $0x8] sm:$0xff]
      %v1800 = vld [vmem:[#allocation4 + $0x10] sm:$0xff]
      %1804 = vrot.lane.b32.xlu0 %v1798, 125
      %v1805 = vpop.permute.xlu0 %1804
      %1806 = vrot.lane.b32.xlu0 %v1799, 125
      %v1807 = vpop.permute.xlu0 %1806
      %1808 = vrot.lane.b32.xlu0 %v1800, 125
      %v1809 = vpop.permute.xlu0 %1808
      %v1810 = vsel %vm1223, %v1805, %v1807
      %v1811 = vsel %vm1223, %v1807, %v1809
      %1815 = vst [vmem:[#allocation5 + $0x48] sm:$0xff] %v1810
      %1816 = vst [vmem:[#allocation5 + $0x50] sm:$0xff] %v1811
      %1817 = vst.msk [vmem:[#allocation5 + $0x58] sm:$0xff] %vm1756, %v1809
      %v1818 = vld [vmem:[#allocation4] sm:$0xff]
      %v1819 = vld [vmem:[#allocation4 + $0x8] sm:$0xff]
      %v1820 = vld [vmem:[#allocation4 + $0x10] sm:$0xff]
      %1824 = vrot.lane.b32.xlu0 %v1818, 124
      %v1825 = vpop.permute.xlu0 %1824
      %1826 = vrot.lane.b32.xlu0 %v1819, 124
      %v1827 = vpop.permute.xlu0 %1826
      %1828 = vrot.lane.b32.xlu0 %v1820, 124
      %v1829 = vpop.permute.xlu0 %1828
      %v1830 = vsel %vm1039, %v1825, %v1827
      %v1831 = vsel %vm1039, %v1827, %v1829
      %1835 = vst [vmem:[#allocation5 + $0x60] sm:$0xff] %v1830
      %1836 = vst [vmem:[#allocation5 + $0x68] sm:$0xff] %v1831
      %1837 = vst.msk [vmem:[#allocation5 + $0x70] sm:$0xff] %vm1756, %v1829
      %v1838 = vld [vmem:[#allocation4] sm:$0xff]
      %v1839 = vld [vmem:[#allocation4 + $0x8] sm:$0xff]
      %v1840 = vld [vmem:[#allocation4 + $0x10] sm:$0xff]
      %1844 = vrot.lane.b32.xlu0 %v1838, 123
      %v1845 = vpop.permute.xlu0 %1844
      %1846 = vrot.lane.b32.xlu0 %v1839, 123
      %v1847 = vpop.permute.xlu0 %1846
      %1848 = vrot.lane.b32.xlu0 %v1840, 123
      %v1849 = vpop.permute.xlu0 %1848
      %v1850 = vsel %vm1334, %v1845, %v1847
      %v1851 = vsel %vm1334, %v1847, %v1849
      %1855 = vst [vmem:[#allocation5 + $0x78] sm:$0xff] %v1850
      %1856 = vst [vmem:[#allocation5 + $0x80] sm:$0xff] %v1851
      %1857 = vst.msk [vmem:[#allocation5 + $0x88] sm:$0xff] %vm1756, %v1849
      %v1858 = vld [vmem:[#allocation4] sm:$0xff]
      %v1859 = vld [vmem:[#allocation4 + $0x8] sm:$0xff]
      %v1860 = vld [vmem:[#allocation4 + $0x10] sm:$0xff]
      %1864 = vrot.lane.b32.xlu0 %v1858, 122
      %v1865 = vpop.permute.xlu0 %1864
      %1866 = vrot.lane.b32.xlu0 %v1859, 122
      %v1867 = vpop.permute.xlu0 %1866
      %1868 = vrot.lane.b32.xlu0 %v1860, 122
      %v1869 = vpop.permute.xlu0 %1868
      %v1870 = vsel %vm1390, %v1865, %v1867
      %v1871 = vsel %vm1390, %v1867, %v1869
      %1875 = vst [vmem:[#allocation5 + $0x90] sm:$0xff] %v1870
      %1876 = vst [vmem:[#allocation5 + $0x98] sm:$0xff] %v1871
      %1877 = vst.msk [vmem:[#allocation5 + $0xa0] sm:$0xff] %vm1756, %v1869
      %v1878 = vld [vmem:[#allocation4 + $0x40] sm:$0xff]
      %v1879 = vld [vmem:[#allocation4 + $0x48] sm:$0xff]
      %v1880 = vld [vmem:[#allocation4 + $0x50] sm:$0xff]
      %1881 = vst [vmem:[#allocation5 + $0xa8] sm:$0xff] %v1878
      %1882 = vst [vmem:[#allocation5 + $0xb0] sm:$0xff] %v1879
      %1883 = vst.msk [vmem:[#allocation5 + $0xb8] sm:$0xff] %vm1756, %v1880
      %v1884 = vld [vmem:[#allocation4 + $0x40] sm:$0xff]
      %v1885 = vld [vmem:[#allocation4 + $0x48] sm:$0xff]
      %v1886 = vld [vmem:[#allocation4 + $0x50] sm:$0xff]
      %1890 = vrot.lane.b32.xlu0 %v1884, 106
      %v1891 = vpop.permute.xlu0 %1890
      %1892 = vrot.lane.b32.xlu0 %v1885, 106
      %v1893 = vpop.permute.xlu0 %1892
      %1894 = vrot.lane.b32.xlu0 %v1886, 106
      %v1895 = vpop.permute.xlu0 %1894
      %v1896 = vsel %vm744, %v1891, %v1893
      %v1897 = vsel %vm744, %v1893, %v1895
      %1901 = vst [vmem:[#allocation5 + $0xc0] sm:$0xff] %v1896
      %1902 = vst [vmem:[#allocation5 + $0xc8] sm:$0xff] %v1897
      %1903 = vst.msk [vmem:[#allocation5 + $0xd0] sm:$0xff] %vm1756, %v1895
      %v1904 = vld [vmem:[#allocation4 + $0x40] sm:$0xff]
      %v1905 = vld [vmem:[#allocation4 + $0x48] sm:$0xff]
      %v1906 = vld [vmem:[#allocation4 + $0x50] sm:$0xff]
      %v1907 = vld [vmem:[#allocation4 + $0x58] sm:$0xff]
      %1912 = vrot.lane.b32.xlu0 %v1904, 84
      %v1913 = vpop.permute.xlu0 %1912
      %1914 = vrot.lane.b32.xlu0 %v1905, 84
      %v1915 = vpop.permute.xlu0 %1914
      %1916 = vrot.lane.b32.xlu0 %v1906, 84
      %v1917 = vpop.permute.xlu0 %1916
      %1918 = vrot.lane.b32.xlu0 %v1907, 84
      %v1919 = vpop.permute.xlu0 %1918
      %v1920 = vsel %vm800, %v1913, %v1915
      %v1921 = vsel %vm800, %v1915, %v1917
      %v1922 = vsel %vm800, %v1917, %v1919
      %1926 = vst [vmem:[#allocation5 + $0xd8] sm:$0xff] %v1920
      %1927 = vst [vmem:[#allocation5 + $0xe0] sm:$0xff] %v1921
      %1928 = vst.msk [vmem:[#allocation5 + $0xe8] sm:$0xff] %vm1756, %v1922
      %v1929 = vld [vmem:[#allocation4 + $0x40] sm:$0xff]
      %v1930 = vld [vmem:[#allocation4 + $0x48] sm:$0xff]
      %v1931 = vld [vmem:[#allocation4 + $0x50] sm:$0xff]
      %v1932 = vld [vmem:[#allocation4 + $0x58] sm:$0xff]
      %1937 = vrot.lane.b32.xlu0 %v1929, 62
      %v1938 = vpop.permute.xlu0 %1937
      %1939 = vrot.lane.b32.xlu0 %v1930, 62
      %v1940 = vpop.permute.xlu0 %1939
      %1941 = vrot.lane.b32.xlu0 %v1931, 62
      %v1942 = vpop.permute.xlu0 %1941
      %1943 = vrot.lane.b32.xlu0 %v1932, 62
      %v1944 = vpop.permute.xlu0 %1943
      %v1945 = vsel %vm860, %v1938, %v1940
      %v1946 = vsel %vm860, %v1940, %v1942
      %v1947 = vsel %vm860, %v1942, %v1944
      %1951 = vst [vmem:[#allocation5 + $0xf0] sm:$0xff] %v1945
      %1952 = vst [vmem:[#allocation5 + $0xf8] sm:$0xff] %v1946
      %1953 = vst.msk [vmem:[#allocation5 + $0x100] sm:$0xff] %vm1756, %v1947
      %v1954 = vld [vmem:[#allocation4 + $0x40] sm:$0xff]
      %v1955 = vld [vmem:[#allocation4 + $0x48] sm:$0xff]
      %v1956 = vld [vmem:[#allocation4 + $0x50] sm:$0xff]
      %v1957 = vld [vmem:[#allocation4 + $0x58] sm:$0xff]
      %1962 = vrot.lane.b32.xlu0 %v1954, 40
      %v1963 = vpop.permute.xlu0 %1962
      %1964 = vrot.lane.b32.xlu0 %v1955, 40
      %v1965 = vpop.permute.xlu0 %1964
      %1966 = vrot.lane.b32.xlu0 %v1956, 40
      %v1967 = vpop.permute.xlu0 %1966
      %1968 = vrot.lane.b32.xlu0 %v1957, 40
      %v1969 = vpop.permute.xlu0 %1968
      %v1970 = vsel %vm921, %v1963, %v1965
      %v1971 = vsel %vm921, %v1965, %v1967
      %v1972 = vsel %vm921, %v1967, %v1969
      %1976 = vst [vmem:[#allocation5 + $0x108] sm:$0xff] %v1970
      %1977 = vst [vmem:[#allocation5 + $0x110] sm:$0xff] %v1971
      %1978 = vst.msk [vmem:[#allocation5 + $0x118] sm:$0xff] %vm1756, %v1972
      %v1979 = vld [vmem:[#allocation4 + $0x40] sm:$0xff]
      %v1980 = vld [vmem:[#allocation4 + $0x48] sm:$0xff]
      %v1981 = vld [vmem:[#allocation4 + $0x50] sm:$0xff]
      %v1982 = vld [vmem:[#allocation4 + $0x58] sm:$0xff]
      %1987 = vrot.lane.b32.xlu0 %v1979, 18
      %v1988 = vpop.permute.xlu0 %1987
      %1989 = vrot.lane.b32.xlu0 %v1980, 18
      %v1990 = vpop.permute.xlu0 %1989
      %1991 = vrot.lane.b32.xlu0 %v1981, 18
      %v1992 = vpop.permute.xlu0 %1991
      %1993 = vrot.lane.b32.xlu0 %v1982, 18
      %v1994 = vpop.permute.xlu0 %1993
      %v1995 = vsel %vm982, %v1988, %v1990
      %v1996 = vsel %vm982, %v1990, %v1992
      %v1997 = vsel %vm982, %v1992, %v1994
      %2001 = vst [vmem:[#allocation5 + $0x120] sm:$0xff] %v1995
      %2002 = vst [vmem:[#allocation5 + $0x128] sm:$0xff] %v1996
      %2003 = vst.msk [vmem:[#allocation5 + $0x130] sm:$0xff] %vm1756, %v1997
      %v2004 = vld [vmem:[#allocation4 + $0x48] sm:$0xff]
      %v2005 = vld [vmem:[#allocation4 + $0x50] sm:$0xff]
      %v2006 = vld [vmem:[#allocation4 + $0x58] sm:$0xff]
      %2010 = vrot.lane.b32.xlu0 %v2004, 124
      %v2011 = vpop.permute.xlu0 %2010
      %2012 = vrot.lane.b32.xlu0 %v2005, 124
      %v2013 = vpop.permute.xlu0 %2012
      %2014 = vrot.lane.b32.xlu0 %v2006, 124
      %v2015 = vpop.permute.xlu0 %2014
      %v2016 = vsel %vm1039, %v2011, %v2013
      %v2017 = vsel %vm1039, %v2013, %v2015
      %2021 = vst [vmem:[#allocation5 + $0x138] sm:$0xff] %v2016
      %2022 = vst [vmem:[#allocation5 + $0x140] sm:$0xff] %v2017
      %2023 = vst.msk [vmem:[#allocation5 + $0x148] sm:$0xff] %vm1756, %v2015
      %v2024 = vld [vmem:[%s3] sm:$0xff]
      %v2025 = vld [vmem:[#allocation5] sm:$0xff]
      %v2026 = vld [vmem:[#allocation5 + $0x8] sm:$0xff]
      %v2027 = vld [vmem:[#allocation5 + $0x10] sm:$0xff]
      %v2028 = vld [vmem:[#allocation5 + $0x18] sm:$0xff]
      %v2029 = vld [vmem:[#allocation5 + $0x20] sm:$0xff]
      %v2030 = vld [vmem:[#allocation5 + $0x28] sm:$0xff]
      %v2031 = vld [vmem:[#allocation5 + $0x30] sm:$0xff]
      %v2032 = vld [vmem:[#allocation5 + $0x38] sm:$0xff]
      %v2033 = vld [vmem:[#allocation5 + $0x40] sm:$0xff]
      %v2034 = vld [vmem:[#allocation5 + $0x48] sm:$0xff]
      %v2035 = vld [vmem:[#allocation5 + $0x50] sm:$0xff]
      %v2036 = vld [vmem:[#allocation5 + $0x58] sm:$0xff]
      %v2037 = vld [vmem:[#allocation5 + $0x60] sm:$0xff]
      %v2038 = vld [vmem:[#allocation5 + $0x68] sm:$0xff]
      %v2039 = vld [vmem:[#allocation5 + $0x70] sm:$0xff]
      %v2040 = vld [vmem:[#allocation5 + $0x78] sm:$0xff]
      %v2041 = vld [vmem:[#allocation5 + $0x80] sm:$0xff]
      %v2042 = vld [vmem:[#allocation5 + $0x88] sm:$0xff]
      %v2043 = vld [vmem:[#allocation5 + $0x90] sm:$0xff]
      %v2044 = vld [vmem:[#allocation5 + $0x98] sm:$0xff]
      %v2045 = vld [vmem:[#allocation5 + $0xa0] sm:$0xff]
      %v2046 = vld [vmem:[#allocation5 + $0xa8] sm:$0xff]
      %v2047 = vld [vmem:[#allocation5 + $0xb0] sm:$0xff]
      %v2048 = vld [vmem:[#allocation5 + $0xb8] sm:$0xff]
      %v2049 = vld [vmem:[#allocation5 + $0xc0] sm:$0xff]
      %v2050 = vld [vmem:[#allocation5 + $0xc8] sm:$0xff]
      %v2051 = vld [vmem:[#allocation5 + $0xd0] sm:$0xff]
      %v2052 = vld [vmem:[#allocation5 + $0xd8] sm:$0xff]
      %v2053 = vld [vmem:[#allocation5 + $0xe0] sm:$0xff]
      %v2054 = vld [vmem:[#allocation5 + $0xe8] sm:$0xff]
      %v2055 = vld [vmem:[#allocation5 + $0xf0] sm:$0xff]
      %v2056 = vld [vmem:[#allocation5 + $0xf8] sm:$0xff]
      %v2057 = vld [vmem:[#allocation5 + $0x100] sm:$0xff]
      %v2058 = vld [vmem:[#allocation5 + $0x108] sm:$0xff]
      %v2059 = vld [vmem:[#allocation5 + $0x110] sm:$0xff]
      %v2060 = vld [vmem:[#allocation5 + $0x118] sm:$0xff]
      %v2061 = vld [vmem:[#allocation5 + $0x120] sm:$0xff]
      %v2062 = vld [vmem:[#allocation5 + $0x128] sm:$0xff]
      %v2063 = vld [vmem:[#allocation5 + $0x130] sm:$0xff]
      %v2064 = vld [vmem:[#allocation5 + $0x138] sm:$0xff]
      %v2065 = vld [vmem:[#allocation5 + $0x140] sm:$0xff]
      %v2066 = vld [vmem:[#allocation5 + $0x148] sm:$0xff]
      %v2067 = vld [vmem:[%s4] sm:$0xff]
      %v2068 = vld [vmem:[%s4 + $0x8] sm:$0xff]
      %v2069 = vld [vmem:[%s4 + $0x10] sm:$0xff]
      %v2071 = vsel %vm1544, %v2024, 0
      %2073 = vmatpush.msra.mxu0 0.0
      %2074 = vmatpush.msra.mxu0 0.0
      %2075 = vmatpush.msra.mxu0 %v2064
      %2076 = vmatpush.msra.mxu0 %v2061
      %2077 = vmatpush.msra.mxu0 %v2058
      %2078 = vmatpush.msra.mxu0 %v2055
      %2079 = vmatpush.msra.mxu0 %v2052
      %2080 = vmatpush.msra.mxu0 %v2049
      %2081 = vmatpush.msra.mxu0 %v2046
      %2082 = vmatpush.msra.mxu0 %v2043
      %2083 = vmatpush.msra.mxu0 %v2040
      %2084 = vmatpush.msra.mxu0 %v2037
      %2085 = vmatpush.msra.mxu0 %v2034
      %2086 = vmatpush.msra.mxu0 %v2031
      %2087 = vmatpush.msra.mxu0 %v2028
      %2088 = vmatpush.msra.mxu0 %v2025
      %2089 = vmatmul.f32.gmra.mxu0 %v2071
      %v2090 = vpop.f32.mrf.mxu0
      %v2091 = vadd.f32 %v2067, %v2090
      %2092 = vdwg.mxu0
      %2093 = vmatpush.msra.mxu0 0.0
      %2094 = vmatpush.msra.mxu0 0.0
      %2095 = vmatpush.msra.mxu0 %v2065
      %2096 = vmatpush.msra.mxu0 %v2062
      %2097 = vmatpush.msra.mxu0 %v2059
      %2098 = vmatpush.msra.mxu0 %v2056
      %2099 = vmatpush.msra.mxu0 %v2053
      %2100 = vmatpush.msra.mxu0 %v2050
      %2101 = vmatpush.msra.mxu0 %v2047
      %2102 = vmatpush.msra.mxu0 %v2044
      %2103 = vmatpush.msra.mxu0 %v2041
      %2104 = vmatpush.msra.mxu0 %v2038
      %2105 = vmatpush.msra.mxu0 %v2035
      %2106 = vmatpush.msra.mxu0 %v2032
      %2107 = vmatpush.msra.mxu0 %v2029
      %2108 = vmatpush.msra.mxu0 %v2026
      %2109 = vmatmul.f32.gmra.mxu0 %v2071
      %v2110 = vpop.f32.mrf.mxu0
      %v2111 = vadd.f32 %v2068, %v2110
      %2112 = vdwg.mxu0
      %2113 = vmatpush.msra.mxu0 0.0
      %2114 = vmatpush.msra.mxu0 0.0
      %2115 = vmatpush.msra.mxu0 %v2066
      %2116 = vmatpush.msra.mxu0 %v2063
      %2117 = vmatpush.msra.mxu0 %v2060
      %2118 = vmatpush.msra.mxu0 %v2057
      %2119 = vmatpush.msra.mxu0 %v2054
      %2120 = vmatpush.msra.mxu0 %v2051
      %2121 = vmatpush.msra.mxu0 %v2048
      %2122 = vmatpush.msra.mxu0 %v2045
      %2123 = vmatpush.msra.mxu0 %v2042
      %2124 = vmatpush.msra.mxu0 %v2039
      %2125 = vmatpush.msra.mxu0 %v2036
      %2126 = vmatpush.msra.mxu0 %v2033
      %2127 = vmatpush.msra.mxu0 %v2030
      %2128 = vmatpush.msra.mxu0 %v2027
      %2129 = vmatmul.f32.gmra.mxu0 %v2071
      %v2130 = vpop.f32.mrf.mxu0
      %v2131 = vadd.f32 %v2069, %v2130
      %2132 = vdwg.mxu0
      %2133 = vst [vmem:[%s231] sm:$0xff] %v2091
      %2134 = vst [vmem:[%s231 + $0x8] sm:$0xff] %v2111
      %2135 = vst.msk [vmem:[%s231 + $0x10] sm:$0xff] %vm1756, %v2131
      %v2136 = vld [vmem:[#allocation4 + $0x18] sm:$0xff]
      %v2137 = vld [vmem:[#allocation4 + $0x20] sm:$0xff]
      %v2138 = vld [vmem:[#allocation4 + $0x28] sm:$0xff]
      %v2139 = vld [vmem:[#allocation4 + $0x30] sm:$0xff]
      %2144 = vrot.lane.b32.xlu0 %v2136, 28
      %v2145 = vpop.permute.xlu0 %2144
      %2146 = vrot.lane.b32.xlu0 %v2137, 28
      %v2147 = vpop.permute.xlu0 %2146
      %2148 = vrot.lane.b32.xlu0 %v2138, 28
      %v2149 = vpop.permute.xlu0 %2148
      %2150 = vrot.lane.b32.xlu0 %v2139, 28
      %v2151 = vpop.permute.xlu0 %2150
      %vm2152 = vcmask 228352
      %v2153 = vsel %vm2152, %v2145, %v2147
      %v2154 = vsel %vm2152, %v2147, %v2149
      %v2155 = vsel %vm2152, %v2149, %v2151
      %2159 = vst [vmem:[#allocation5] sm:$0xff] %v2153
      %2160 = vst [vmem:[#allocation5 + $0x8] sm:$0xff] %v2154
      %2161 = vst.msk [vmem:[#allocation5 + $0x10] sm:$0xff] %vm1756, %v2155
      %v2162 = vld [vmem:[#allocation4 + $0x18] sm:$0xff]
      %v2163 = vld [vmem:[#allocation4 + $0x20] sm:$0xff]
      %v2164 = vld [vmem:[#allocation4 + $0x28] sm:$0xff]
      %v2165 = vld [vmem:[#allocation4 + $0x30] sm:$0xff]
      %2170 = vrot.lane.b32.xlu0 %v2162, 27
      %v2171 = vpop.permute.xlu0 %2170
      %2172 = vrot.lane.b32.xlu0 %v2163, 27
      %v2173 = vpop.permute.xlu0 %2172
      %2174 = vrot.lane.b32.xlu0 %v2164, 27
      %v2175 = vpop.permute.xlu0 %2174
      %2176 = vrot.lane.b32.xlu0 %v2165, 27
      %v2177 = vpop.permute.xlu0 %2176
      %vm2178 = vcmask 220160
      %v2179 = vsel %vm2178, %v2171, %v2173
      %v2180 = vsel %vm2178, %v2173, %v2175
      %v2181 = vsel %vm2178, %v2175, %v2177
      %2185 = vst [vmem:[#allocation5 + $0x18] sm:$0xff] %v2179
      %2186 = vst [vmem:[#allocation5 + $0x20] sm:$0xff] %v2180
      %2187 = vst.msk [vmem:[#allocation5 + $0x28] sm:$0xff] %vm1756, %v2181
      %v2188 = vld [vmem:[#allocation4 + $0x18] sm:$0xff]
      %v2189 = vld [vmem:[#allocation4 + $0x20] sm:$0xff]
      %v2190 = vld [vmem:[#allocation4 + $0x28] sm:$0xff]
      %v2191 = vld [vmem:[#allocation4 + $0x30] sm:$0xff]
      %2196 = vrot.lane.b32.xlu0 %v2188, 26
      %v2197 = vpop.permute.xlu0 %2196
      %2198 = vrot.lane.b32.xlu0 %v2189, 26
      %v2199 = vpop.permute.xlu0 %2198
      %2200 = vrot.lane.b32.xlu0 %v2190, 26
      %v2201 = vpop.permute.xlu0 %2200
      %2202 = vrot.lane.b32.xlu0 %v2191, 26
      %v2203 = vpop.permute.xlu0 %2202
      %vm2204 = vcmask 211968
      %v2205 = vsel %vm2204, %v2197, %v2199
      %v2206 = vsel %vm2204, %v2199, %v2201
      %v2207 = vsel %vm2204, %v2201, %v2203
      %2211 = vst [vmem:[#allocation5 + $0x30] sm:$0xff] %v2205
      %2212 = vst [vmem:[#allocation5 + $0x38] sm:$0xff] %v2206
      %2213 = vst.msk [vmem:[#allocation5 + $0x40] sm:$0xff] %vm1756, %v2207
      %v2214 = vld [vmem:[#allocation4 + $0x18] sm:$0xff]
      %v2215 = vld [vmem:[#allocation4 + $0x20] sm:$0xff]
      %v2216 = vld [vmem:[#allocation4 + $0x28] sm:$0xff]
      %v2217 = vld [vmem:[#allocation4 + $0x30] sm:$0xff]
      %2222 = vrot.lane.b32.xlu0 %v2214, 25
      %v2223 = vpop.permute.xlu0 %2222
      %2224 = vrot.lane.b32.xlu0 %v2215, 25
      %v2225 = vpop.permute.xlu0 %2224
      %2226 = vrot.lane.b32.xlu0 %v2216, 25
      %v2227 = vpop.permute.xlu0 %2226
      %2228 = vrot.lane.b32.xlu0 %v2217, 25
      %v2229 = vpop.permute.xlu0 %2228
      %vm2230 = vcmask 203776
      %v2231 = vsel %vm2230, %v2223, %v2225
      %v2232 = vsel %vm2230, %v2225, %v2227
      %v2233 = vsel %vm2230, %v2227, %v2229
      %2237 = vst [vmem:[#allocation5 + $0x48] sm:$0xff] %v2231
      %2238 = vst [vmem:[#allocation5 + $0x50] sm:$0xff] %v2232
      %2239 = vst.msk [vmem:[#allocation5 + $0x58] sm:$0xff] %vm1756, %v2233
      %v2240 = vld [vmem:[#allocation4 + $0x18] sm:$0xff]
      %v2241 = vld [vmem:[#allocation4 + $0x20] sm:$0xff]
      %v2242 = vld [vmem:[#allocation4 + $0x28] sm:$0xff]
      %v2243 = vld [vmem:[#allocation4 + $0x30] sm:$0xff]
      %2248 = vrot.lane.b32.xlu0 %v2240, 24
      %v2249 = vpop.permute.xlu0 %2248
      %2250 = vrot.lane.b32.xlu0 %v2241, 24
      %v2251 = vpop.permute.xlu0 %2250
      %2252 = vrot.lane.b32.xlu0 %v2242, 24
      %v2253 = vpop.permute.xlu0 %2252
      %2254 = vrot.lane.b32.xlu0 %v2243, 24
      %v2255 = vpop.permute.xlu0 %2254
      %vm2256 = vcmask 195584
      %v2257 = vsel %vm2256, %v2249, %v2251
      %v2258 = vsel %vm2256, %v2251, %v2253
      %v2259 = vsel %vm2256, %v2253, %v2255
      %2263 = vst [vmem:[#allocation5 + $0x60] sm:$0xff] %v2257
      %2264 = vst [vmem:[#allocation5 + $0x68] sm:$0xff] %v2258
      %2265 = vst.msk [vmem:[#allocation5 + $0x70] sm:$0xff] %vm1756, %v2259
      %v2266 = vld [vmem:[#allocation4 + $0x18] sm:$0xff]
      %v2267 = vld [vmem:[#allocation4 + $0x20] sm:$0xff]
      %v2268 = vld [vmem:[#allocation4 + $0x28] sm:$0xff]
      %v2269 = vld [vmem:[#allocation4 + $0x30] sm:$0xff]
      %2274 = vrot.lane.b32.xlu0 %v2266, 23
      %v2275 = vpop.permute.xlu0 %2274
      %2276 = vrot.lane.b32.xlu0 %v2267, 23
      %v2277 = vpop.permute.xlu0 %2276
      %2278 = vrot.lane.b32.xlu0 %v2268, 23
      %v2279 = vpop.permute.xlu0 %2278
      %2280 = vrot.lane.b32.xlu0 %v2269, 23
      %v2281 = vpop.permute.xlu0 %2280
      %vm2282 = vcmask 187392
      %v2283 = vsel %vm2282, %v2275, %v2277
      %v2284 = vsel %vm2282, %v2277, %v2279
      %v2285 = vsel %vm2282, %v2279, %v2281
      %2289 = vst [vmem:[#allocation5 + $0x78] sm:$0xff] %v2283
      %2290 = vst [vmem:[#allocation5 + $0x80] sm:$0xff] %v2284
      %2291 = vst.msk [vmem:[#allocation5 + $0x88] sm:$0xff] %vm1756, %v2285
      %v2292 = vld [vmem:[#allocation4 + $0x18] sm:$0xff]
      %v2293 = vld [vmem:[#allocation4 + $0x20] sm:$0xff]
      %v2294 = vld [vmem:[#allocation4 + $0x28] sm:$0xff]
      %v2295 = vld [vmem:[#allocation4 + $0x30] sm:$0xff]
      %2300 = vrot.lane.b32.xlu0 %v2292, 22
      %v2301 = vpop.permute.xlu0 %2300
      %2302 = vrot.lane.b32.xlu0 %v2293, 22
      %v2303 = vpop.permute.xlu0 %2302
      %2304 = vrot.lane.b32.xlu0 %v2294, 22
      %v2305 = vpop.permute.xlu0 %2304
      %2306 = vrot.lane.b32.xlu0 %v2295, 22
      %v2307 = vpop.permute.xlu0 %2306
      %vm2308 = vcmask 179200
      %v2309 = vsel %vm2308, %v2301, %v2303
      %v2310 = vsel %vm2308, %v2303, %v2305
      %v2311 = vsel %vm2308, %v2305, %v2307
      %2315 = vst [vmem:[#allocation5 + $0x90] sm:$0xff] %v2309
      %2316 = vst [vmem:[#allocation5 + $0x98] sm:$0xff] %v2310
      %2317 = vst.msk [vmem:[#allocation5 + $0xa0] sm:$0xff] %vm1756, %v2311
      %v2318 = vld [vmem:[#allocation4 + $0x58] sm:$0xff]
      %v2319 = vld [vmem:[#allocation4 + $0x60] sm:$0xff]
      %v2320 = vld [vmem:[#allocation4 + $0x68] sm:$0xff]
      %v2321 = vld [vmem:[#allocation4 + $0x70] sm:$0xff]
      %2326 = vrot.lane.b32.xlu0 %v2318, 28
      %v2327 = vpop.permute.xlu0 %2326
      %2328 = vrot.lane.b32.xlu0 %v2319, 28
      %v2329 = vpop.permute.xlu0 %2328
      %2330 = vrot.lane.b32.xlu0 %v2320, 28
      %v2331 = vpop.permute.xlu0 %2330
      %2332 = vrot.lane.b32.xlu0 %v2321, 28
      %v2333 = vpop.permute.xlu0 %2332
      %v2334 = vsel %vm2152, %v2327, %v2329
      %v2335 = vsel %vm2152, %v2329, %v2331
      %v2336 = vsel %vm2152, %v2331, %v2333
      %2340 = vst [vmem:[#allocation5 + $0xa8] sm:$0xff] %v2334
      %2341 = vst [vmem:[#allocation5 + $0xb0] sm:$0xff] %v2335
      %2342 = vst.msk [vmem:[#allocation5 + $0xb8] sm:$0xff] %vm1756, %v2336
      %v2343 = vld [vmem:[#allocation4 + $0x58] sm:$0xff]
      %v2344 = vld [vmem:[#allocation4 + $0x60] sm:$0xff]
      %v2345 = vld [vmem:[#allocation4 + $0x68] sm:$0xff]
      %v2346 = vld [vmem:[#allocation4 + $0x70] sm:$0xff]
      %2351 = vrot.lane.b32.xlu0 %v2343, 6
      %v2352 = vpop.permute.xlu0 %2351
      %2353 = vrot.lane.b32.xlu0 %v2344, 6
      %v2354 = vpop.permute.xlu0 %2353
      %2355 = vrot.lane.b32.xlu0 %v2345, 6
      %v2356 = vpop.permute.xlu0 %2355
      %2357 = vrot.lane.b32.xlu0 %v2346, 6
      %v2358 = vpop.permute.xlu0 %2357
      %vm2359 = vcmask 48128
      %v2360 = vsel %vm2359, %v2352, %v2354
      %v2361 = vsel %vm2359, %v2354, %v2356
      %v2362 = vsel %vm2359, %v2356, %v2358
      %2366 = vst [vmem:[#allocation5 + $0xc0] sm:$0xff] %v2360
      %2367 = vst [vmem:[#allocation5 + $0xc8] sm:$0xff] %v2361
      %2368 = vst.msk [vmem:[#allocation5 + $0xd0] sm:$0xff] %vm1756, %v2362
      %v2369 = vld [vmem:[#allocation4 + $0x60] sm:$0xff]
      %v2370 = vld [vmem:[#allocation4 + $0x68] sm:$0xff]
      %v2371 = vld [vmem:[#allocation4 + $0x70] sm:$0xff]
      %2375 = vrot.lane.b32.xlu0 %v2369, 112
      %v2376 = vpop.permute.xlu0 %2375
      %2377 = vrot.lane.b32.xlu0 %v2370, 112
      %v2378 = vpop.permute.xlu0 %2377
      %2379 = vrot.lane.b32.xlu0 %v2371, 112
      %v2380 = vpop.permute.xlu0 %2379
      %v2381 = vsel %vm1544, %v2376, %v2378
      %v2382 = vsel %vm1544, %v2378, %v2380
      %2386 = vst [vmem:[#allocation5 + $0xd8] sm:$0xff] %v2381
      %2387 = vst [vmem:[#allocation5 + $0xe0] sm:$0xff] %v2382
      %2388 = vst.msk [vmem:[#allocation5 + $0xe8] sm:$0xff] %vm1756, %v2380
      %v2389 = vld [vmem:[#allocation4 + $0x60] sm:$0xff]
      %v2390 = vld [vmem:[#allocation4 + $0x68] sm:$0xff]
      %v2391 = vld [vmem:[#allocation4 + $0x70] sm:$0xff]
      %v2392 = vld [vmem:[#allocation4 + $0x78] sm:$0xff]
      %2397 = vrot.lane.b32.xlu0 %v2389, 90
      %v2398 = vpop.permute.xlu0 %2397
      %2399 = vrot.lane.b32.xlu0 %v2390, 90
      %v2400 = vpop.permute.xlu0 %2399
      %2401 = vrot.lane.b32.xlu0 %v2391, 90
      %v2402 = vpop.permute.xlu0 %2401
      %2403 = vrot.lane.b32.xlu0 %v2392, 90
      %v2404 = vpop.permute.xlu0 %2403
      %vm2405 = vcmask 736256
      %v2406 = vsel %vm2405, %v2398, %v2400
      %v2407 = vsel %vm2405, %v2400, %v2402
      %v2408 = vsel %vm2405, %v2402, %v2404
      %2412 = vst [vmem:[#allocation5 + $0xf0] sm:$0xff] %v2406
      %2413 = vst [vmem:[#allocation5 + $0xf8] sm:$0xff] %v2407
      %2414 = vst.msk [vmem:[#allocation5 + $0x100] sm:$0xff] %vm1756, %v2408
      %v2415 = vld [vmem:[#allocation4 + $0x60] sm:$0xff]
      %v2416 = vld [vmem:[#allocation4 + $0x68] sm:$0xff]
      %v2417 = vld [vmem:[#allocation4 + $0x70] sm:$0xff]
      %v2418 = vld [vmem:[#allocation4 + $0x78] sm:$0xff]
      %2423 = vrot.lane.b32.xlu0 %v2415, 68
      %v2424 = vpop.permute.xlu0 %2423
      %2425 = vrot.lane.b32.xlu0 %v2416, 68
      %v2426 = vpop.permute.xlu0 %2425
      %2427 = vrot.lane.b32.xlu0 %v2417, 68
      %v2428 = vpop.permute.xlu0 %2427
      %2429 = vrot.lane.b32.xlu0 %v2418, 68
      %v2430 = vpop.permute.xlu0 %2429
      %vm2431 = vcmask 556032
      %v2432 = vsel %vm2431, %v2424, %v2426
      %v2433 = vsel %vm2431, %v2426, %v2428
      %v2434 = vsel %vm2431, %v2428, %v2430
      %2438 = vst [vmem:[#allocation5 + $0x108] sm:$0xff] %v2432
      %2439 = vst [vmem:[#allocation5 + $0x110] sm:$0xff] %v2433
      %2440 = vst.msk [vmem:[#allocation5 + $0x118] sm:$0xff] %vm1756, %v2434
      %v2441 = vld [vmem:[#allocation4 + $0x60] sm:$0xff]
      %v2442 = vld [vmem:[#allocation4 + $0x68] sm:$0xff]
      %v2443 = vld [vmem:[#allocation4 + $0x70] sm:$0xff]
      %v2444 = vld [vmem:[#allocation4 + $0x78] sm:$0xff]
      %2449 = vrot.lane.b32.xlu0 %v2441, 46
      %v2450 = vpop.permute.xlu0 %2449
      %2451 = vrot.lane.b32.xlu0 %v2442, 46
      %v2452 = vpop.permute.xlu0 %2451
      %2453 = vrot.lane.b32.xlu0 %v2443, 46
      %v2454 = vpop.permute.xlu0 %2453
      %2455 = vrot.lane.b32.xlu0 %v2444, 46
      %v2456 = vpop.permute.xlu0 %2455
      %vm2457 = vcmask 375808
      %v2458 = vsel %vm2457, %v2450, %v2452
      %v2459 = vsel %vm2457, %v2452, %v2454
      %v2460 = vsel %vm2457, %v2454, %v2456
      %2464 = vst [vmem:[#allocation5 + $0x120] sm:$0xff] %v2458
      %2465 = vst [vmem:[#allocation5 + $0x128] sm:$0xff] %v2459
      %2466 = vst.msk [vmem:[#allocation5 + $0x130] sm:$0xff] %vm1756, %v2460
      %v2467 = vld [vmem:[#allocation4 + $0x60] sm:$0xff]
      %v2468 = vld [vmem:[#allocation4 + $0x68] sm:$0xff]
      %v2469 = vld [vmem:[#allocation4 + $0x70] sm:$0xff]
      %v2470 = vld [vmem:[#allocation4 + $0x78] sm:$0xff]
      %2475 = vrot.lane.b32.xlu0 %v2467, 24
      %v2476 = vpop.permute.xlu0 %2475
      %2477 = vrot.lane.b32.xlu0 %v2468, 24
      %v2478 = vpop.permute.xlu0 %2477
      %2479 = vrot.lane.b32.xlu0 %v2469, 24
      %v2480 = vpop.permute.xlu0 %2479
      %2481 = vrot.lane.b32.xlu0 %v2470, 24
      %v2482 = vpop.permute.xlu0 %2481
      %v2483 = vsel %vm2256, %v2476, %v2478
      %v2484 = vsel %vm2256, %v2478, %v2480
      %v2485 = vsel %vm2256, %v2480, %v2482
      %2489 = vst [vmem:[#allocation5 + $0x138] sm:$0xff] %v2483
      %2490 = vst [vmem:[#allocation5 + $0x140] sm:$0xff] %v2484
      %2491 = vst.msk [vmem:[#allocation5 + $0x148] sm:$0xff] %vm1756, %v2485
      %v2492 = vld [vmem:[%s3] sm:$0xff]
      %v2493 = vld [vmem:[#allocation5] sm:$0xff]
      %v2494 = vld [vmem:[#allocation5 + $0x8] sm:$0xff]
      %v2495 = vld [vmem:[#allocation5 + $0x10] sm:$0xff]
      %v2496 = vld [vmem:[#allocation5 + $0x18] sm:$0xff]
      %v2497 = vld [vmem:[#allocation5 + $0x20] sm:$0xff]
      %v2498 = vld [vmem:[#allocation5 + $0x28] sm:$0xff]
      %v2499 = vld [vmem:[#allocation5 + $0x30] sm:$0xff]
      %v2500 = vld [vmem:[#allocation5 + $0x38] sm:$0xff]
      %v2501 = vld [vmem:[#allocation5 + $0x40] sm:$0xff]
      %v2502 = vld [vmem:[#allocation5 + $0x48] sm:$0xff]
      %v2503 = vld [vmem:[#allocation5 + $0x50] sm:$0xff]
      %v2504 = vld [vmem:[#allocation5 + $0x58] sm:$0xff]
      %v2505 = vld [vmem:[#allocation5 + $0x60] sm:$0xff]
      %v2506 = vld [vmem:[#allocation5 + $0x68] sm:$0xff]
      %v2507 = vld [vmem:[#allocation5 + $0x70] sm:$0xff]
      %v2508 = vld [vmem:[#allocation5 + $0x78] sm:$0xff]
      %v2509 = vld [vmem:[#allocation5 + $0x80] sm:$0xff]
      %v2510 = vld [vmem:[#allocation5 + $0x88] sm:$0xff]
      %v2511 = vld [vmem:[#allocation5 + $0x90] sm:$0xff]
      %v2512 = vld [vmem:[#allocation5 + $0x98] sm:$0xff]
      %v2513 = vld [vmem:[#allocation5 + $0xa0] sm:$0xff]
      %v2514 = vld [vmem:[#allocation5 + $0xa8] sm:$0xff]
      %v2515 = vld [vmem:[#allocation5 + $0xb0] sm:$0xff]
      %v2516 = vld [vmem:[#allocation5 + $0xb8] sm:$0xff]
      %v2517 = vld [vmem:[#allocation5 + $0xc0] sm:$0xff]
      %v2518 = vld [vmem:[#allocation5 + $0xc8] sm:$0xff]
      %v2519 = vld [vmem:[#allocation5 + $0xd0] sm:$0xff]
      %v2520 = vld [vmem:[#allocation5 + $0xd8] sm:$0xff]
      %v2521 = vld [vmem:[#allocation5 + $0xe0] sm:$0xff]
      %v2522 = vld [vmem:[#allocation5 + $0xe8] sm:$0xff]
      %v2523 = vld [vmem:[#allocation5 + $0xf0] sm:$0xff]
      %v2524 = vld [vmem:[#allocation5 + $0xf8] sm:$0xff]
      %v2525 = vld [vmem:[#allocation5 + $0x100] sm:$0xff]
      %v2526 = vld [vmem:[#allocation5 + $0x108] sm:$0xff]
      %v2527 = vld [vmem:[#allocation5 + $0x110] sm:$0xff]
      %v2528 = vld [vmem:[#allocation5 + $0x118] sm:$0xff]
      %v2529 = vld [vmem:[#allocation5 + $0x120] sm:$0xff]
      %v2530 = vld [vmem:[#allocation5 + $0x128] sm:$0xff]
      %v2531 = vld [vmem:[#allocation5 + $0x130] sm:$0xff]
      %v2532 = vld [vmem:[#allocation5 + $0x138] sm:$0xff]
      %v2533 = vld [vmem:[#allocation5 + $0x140] sm:$0xff]
      %v2534 = vld [vmem:[#allocation5 + $0x148] sm:$0xff]
      %v2535 = vld [vmem:[%s4] sm:$0xff]
      %v2536 = vld [vmem:[%s4 + $0x8] sm:$0xff]
      %v2537 = vld [vmem:[%s4 + $0x10] sm:$0xff]
      %v2539 = vsel %vm1544, %v2492, 0
      %2541 = vmatpush.msra.mxu0 0.0
      %2542 = vmatpush.msra.mxu0 0.0
      %2543 = vmatpush.msra.mxu0 %v2532
      %2544 = vmatpush.msra.mxu0 %v2529
      %2545 = vmatpush.msra.mxu0 %v2526
      %2546 = vmatpush.msra.mxu0 %v2523
      %2547 = vmatpush.msra.mxu0 %v2520
      %2548 = vmatpush.msra.mxu0 %v2517
      %2549 = vmatpush.msra.mxu0 %v2514
      %2550 = vmatpush.msra.mxu0 %v2511
      %2551 = vmatpush.msra.mxu0 %v2508
      %2552 = vmatpush.msra.mxu0 %v2505
      %2553 = vmatpush.msra.mxu0 %v2502
      %2554 = vmatpush.msra.mxu0 %v2499
      %2555 = vmatpush.msra.mxu0 %v2496
      %2556 = vmatpush.msra.mxu0 %v2493
      %2557 = vmatmul.f32.gmra.mxu0 %v2539
      %v2558 = vpop.f32.mrf.mxu0
      %v2559 = vadd.f32 %v2535, %v2558
      %2560 = vdwg.mxu0
      %2561 = vmatpush.msra.mxu0 0.0
      %2562 = vmatpush.msra.mxu0 0.0
      %2563 = vmatpush.msra.mxu0 %v2533
      %2564 = vmatpush.msra.mxu0 %v2530
      %2565 = vmatpush.msra.mxu0 %v2527
      %2566 = vmatpush.msra.mxu0 %v2524
      %2567 = vmatpush.msra.mxu0 %v2521
      %2568 = vmatpush.msra.mxu0 %v2518
      %2569 = vmatpush.msra.mxu0 %v2515
      %2570 = vmatpush.msra.mxu0 %v2512
      %2571 = vmatpush.msra.mxu0 %v2509
      %2572 = vmatpush.msra.mxu0 %v2506
      %2573 = vmatpush.msra.mxu0 %v2503
      %2574 = vmatpush.msra.mxu0 %v2500
      %2575 = vmatpush.msra.mxu0 %v2497
      %2576 = vmatpush.msra.mxu0 %v2494
      %2577 = vmatmul.f32.gmra.mxu0 %v2539
      %v2578 = vpop.f32.mrf.mxu0
      %v2579 = vadd.f32 %v2536, %v2578
      %2580 = vdwg.mxu0
      %2581 = vmatpush.msra.mxu0 0.0
      %2582 = vmatpush.msra.mxu0 0.0
      %2583 = vmatpush.msra.mxu0 %v2534
      %2584 = vmatpush.msra.mxu0 %v2531
      %2585 = vmatpush.msra.mxu0 %v2528
      %2586 = vmatpush.msra.mxu0 %v2525
      %2587 = vmatpush.msra.mxu0 %v2522
      %2588 = vmatpush.msra.mxu0 %v2519
      %2589 = vmatpush.msra.mxu0 %v2516
      %2590 = vmatpush.msra.mxu0 %v2513
      %2591 = vmatpush.msra.mxu0 %v2510
      %2592 = vmatpush.msra.mxu0 %v2507
      %2593 = vmatpush.msra.mxu0 %v2504
      %2594 = vmatpush.msra.mxu0 %v2501
      %2595 = vmatpush.msra.mxu0 %v2498
      %2596 = vmatpush.msra.mxu0 %v2495
      %2597 = vmatmul.f32.gmra.mxu0 %v2539
      %v2598 = vpop.f32.mrf.mxu0
      %v2599 = vadd.f32 %v2537, %v2598
      %2600 = vdwg.mxu0
      %s2601 = scalar_lea.vmem %s231, 24
      %2602 = vst [vmem:[%s2601] sm:$0xff] %v2559
      %2603 = vst [vmem:[%s2601 + $0x8] sm:$0xff] %v2579
      %2604 = vst.msk [vmem:[%s2601 + $0x10] sm:$0xff] %vm1756, %v2599
      %s2605 = smul.u32 2, %s16
      %p2606 = scmp.lt.s32.totalorder %s2605, 3
      %s2607 = scalar_select %p2606, %s2605, 3
      %s2608 = smul.addr %s2607, 3
      %s2609 = smul.addr %s2608, 8
      %s2610 = scalar_lea.vmem %s5, %s2609
      // Predicated region
      $region41: #{global_conv_module.1} parent=39 // pred_check
        %p2611 = pneg %p144
      $region42: #{global_conv_module.1} parent=39 // pred_check_branch
        %2613 = sbr.rel (%p2611) target = $region44
      $region43: #{global_conv_module.1} parent=39 // pred_region
        %s2614 = smul.u32 2, %s16
      $region44: #{global_conv_module.1} parent=39 // pred_fallthru
        _
    $region40: #{global_conv_module.1} parent=5 // pred_fallthru
      _
    %p2615 = scmp.le.s32.totalorder 2, %s11
    // Predicated region
    $region45: #{global_conv_module.1} parent=5 // pred_check
      %p2616 = pneg %p2615
    $region46: #{global_conv_module.1} parent=5 // pred_check_branch
      %2618 = sbr.rel (%p2616) target = $region48
    $region47: #{global_conv_module.1} parent=5 // pred_region
      %s2619 = ssub.s32 %s11, 2
      // Predicated region
      $region49: #{global_conv_module.1} parent=47 // pred_check
        %p2620 = pneg %p150
      $region50: #{global_conv_module.1} parent=47 // pred_check_branch
        %2622 = sbr.rel (%p2620) target = $region52
      $region51: #{global_conv_module.1} parent=47 // pred_region
        %s2623 = smul.u32 2, %s17
        %p2624 = scmp.lt.s32.totalorder %s2623, 3
        %s2625 = scalar_select %p2624, %s2623, 3
        %s2626 = smul.addr %s2625, 3
        %s2627 = smul.addr %s2626, 8
        %s2628 = scalar_lea.vmem %s5, %s2627
      $region52: #{global_conv_module.1} parent=47 // pred_fallthru
        _
    $region48: #{global_conv_module.1} parent=5 // pred_fallthru
      _
  $region6: #{global_conv_module.1} parent=0 // loop_footer
    %s15 = sadd.s32 1, %s11
  $region7: #{global_conv_module.1} parent=0 // loop_footer_branch
    %10 = sbr.rel target = $region3
  $region8: #{global_conv_module.1} parent=0 // loop_exit
    _

</llo_original>
